<compile_context>
chip_gen: v7x
topology: tpu7x:2x2x1
jax: 0.10.0
libtpu: 0.0.40
codegen_flags: <defaults>
</compile_context>

<pallas_src>
import functools

import jax
import jax.numpy as jnp
from jax.experimental import pallas as pl
from jax.experimental.pallas import tpu as pltpu


def _fused_conv_bn_kernel(x_ref, w_ref, g_ref, b_ref, ml_ref, mr_ref, o_ref,
                          xp_sc, y_sc, sum_sc, sq_sc, scale_sc, shift_sc,
                          *, H, W, N, eps):
    HW = H * W
    PAD = W + 1                      # flat halo: one image row + one pixel per side
    phase = pl.program_id(1)         # 0: conv + stats, 1: normalize
    n = pl.program_id(2)             # batch index

    @pl.when((phase == 0) & (n == 0))
    def _init():
        # Zero the halo scratch once per channel block (borders stay zero, the
        # interior is overwritten every phase-0 step) and reset the stats.
        xp_sc[...] = jnp.zeros_like(xp_sc)
        sum_sc[...] = jnp.zeros_like(sum_sc)
        sq_sc[...] = jnp.zeros_like(sq_sc)

    @pl.when(phase == 0)
    def _conv_and_stats():
        # Depthwise 3x3 conv on the flattened-spatial block (HW, c_tile).
        # Vertical boundary handled by the zero halo; horizontal boundary by
        # the left/right column masks.
        xp_sc[PAD:PAD + HW, :] = x_ref[0]

        def tap(kh, kw):
            off = kh * W + kw        # start offset inside the padded scratch
            return w_ref[3 * kh + kw:3 * kh + kw + 1, :] * xp_sc[off:off + HW, :]

        center = tap(0, 1) + tap(1, 1) + tap(2, 1)
        left = tap(0, 0) + tap(1, 0) + tap(2, 0)
        right = tap(0, 2) + tap(1, 2) + tap(2, 2)
        y = center + ml_ref[...] * left + mr_ref[...] * right

        y_sc[n] = y                                         # cache conv result in VMEM
        sum_sc[...] += jnp.sum(y, axis=0, keepdims=True)    # per-channel sum
        sq_sc[...] += jnp.sum(y * y, axis=0, keepdims=True)  # per-channel sum of squares

    @pl.when((phase == 1) & (n == 0))
    def _fold_stats():
        inv_cnt = 1.0 / float(N * HW)
        mean = sum_sc[...] * inv_cnt
        var = jnp.maximum(sq_sc[...] * inv_cnt - mean * mean, 0.0)  # biased variance
        scale = g_ref[...] * jax.lax.rsqrt(var + eps)
        scale_sc[...] = scale
        shift_sc[...] = b_ref[...] - mean * scale

    @pl.when(phase == 1)
    def _normalize():
        o_ref[0] = (y_sc[n] * scale_sc[...] + shift_sc[...]).astype(o_ref.dtype)


def conv_dw_bn(x_nchw, weight, gamma, beta, *, eps=1e-3):
    """Forward of M: depthwise 3x3 conv (stride 1, pad 1, no bias) + BatchNorm2d.

    x_nchw : (N, C, H, W) f32
    weight : (C, 1, 3, 3) f32   (PyTorch depthwise Conv2d weight layout)
    gamma, beta : (C,) f32      (BatchNorm affine parameters)
    returns  (N, C, H, W) f32   (training-mode BN forward: batch statistics)
    """
    N, C, H, W = x_nchw.shape
    HW = H * W

    # Layout plumbing in HBM: NCHW -> flattened channels-last (N, H*W, C).
    # TODO(synk): an NHWC-native model would remove these two transpose passes.
    x = jnp.transpose(x_nchw, (0, 2, 3, 1)).reshape(N, HW, C)
    w9 = jnp.transpose(weight[:, 0], (1, 2, 0)).reshape(9, C)

    # Horizontal-boundary masks for the left / right kernel columns.
    col = jnp.arange(HW, dtype=jnp.int32) % W
    mask_l = (col > 0).astype(jnp.float32).reshape(HW, 1)
    mask_r = (col < W - 1).astype(jnp.float32).reshape(HW, 1)

    # Channel tile: largest lane-dense (multiple of 128) divisor of C, else C.
    c_tile = C
    for cand in (512, 384, 256, 128):
        if C % cand == 0:
            c_tile = cand
            break
    # TODO(synk): for C=1056 (not a multiple of 128) pad channels to 1152 to
    # re-enable channel tiling / megacore sharding.

    grid = (C // c_tile, 2, N)
    kernel = functools.partial(_fused_conv_bn_kernel, H=H, W=W, N=N, eps=eps)

    out_flat = pl.pallas_call(
        kernel,
        out_shape=jax.ShapeDtypeStruct((N, HW, C), jnp.float32),
        grid_spec=pltpu.PrefetchScalarGridSpec(
            num_scalar_prefetch=0,
            grid=grid,
            in_specs=[
                # x: fetched only during phase 0 (the phase-1 index is pinned to
                # the last phase-0 block so the pipeline skips the re-copy).
                pl.BlockSpec((1, HW, c_tile),
                             lambda c, p, n: ((1 - p) * n + p * (N - 1), 0, c)),
                pl.BlockSpec((9, c_tile), lambda c, p, n: (0, c)),   # weights (resident)
                pl.BlockSpec((1, c_tile), lambda c, p, n: (0, c)),   # gamma
                pl.BlockSpec((1, c_tile), lambda c, p, n: (0, c)),   # beta
                pl.BlockSpec((HW, 1), lambda c, p, n: (0, 0)),       # left mask
                pl.BlockSpec((HW, 1), lambda c, p, n: (0, 0)),       # right mask
            ],
            # Phase 0 parks the output index on block (0, c); blocks are only
            # written (and written back) during phase 1.
            out_specs=pl.BlockSpec((1, HW, c_tile), lambda c, p, n: (p * n, 0, c)),
            scratch_shapes=[
                pltpu.VMEM((HW + 2 * (W + 1), c_tile), jnp.float32),  # zero-halo input
                pltpu.VMEM((N, HW, c_tile), jnp.float32),             # cached conv out
                pltpu.VMEM((1, c_tile), jnp.float32),                 # sum
                pltpu.VMEM((1, c_tile), jnp.float32),                 # sum of squares
                pltpu.VMEM((1, c_tile), jnp.float32),                 # BN scale
                pltpu.VMEM((1, c_tile), jnp.float32),                 # BN shift
            ],
        ),
        compiler_params=pltpu.CompilerParams(
            dimension_semantics=("parallel", "arbitrary", "arbitrary"),
            vmem_limit_bytes=32 * 1024 * 1024,
        ),
    )(x, w9, gamma.reshape(1, C), beta.reshape(1, C), mask_l, mask_r)

    return jnp.transpose(out_flat.reshape(N, H, W, C), (0, 3, 1, 2))


def _reference(x, weight, gamma, beta, eps=1e-3):
    """Pure-JAX reference (depthwise conv + training-mode BatchNorm forward)."""
    N, C, H, W = x.shape
    xp = jnp.pad(x, ((0, 0), (0, 0), (1, 1), (1, 1)))
    y = jnp.zeros_like(x)
    for kh in range(3):
        for kw in range(3):
            y = y + xp[:, :, kh:kh + H, kw:kw + W] * weight[:, 0, kh, kw][None, :, None, None]
    mean = jnp.mean(y, axis=(0, 2, 3), keepdims=True)
    var = jnp.mean((y - mean) ** 2, axis=(0, 2, 3), keepdims=True)   # biased
    return (y - mean) / jnp.sqrt(var + eps) * gamma[None, :, None, None] \
        + beta[None, :, None, None]


if __name__ == "__main__":
    # Small shapes consistent with the module (original: N=1, C=1056, H=W=14).
    N, C, H, W = 2, 256, 14, 14
    eps = 1e-3

    key = jax.random.PRNGKey(0)
    kx, kw, kg, kb = jax.random.split(key, 4)
    x = jax.random.normal(kx, (N, C, H, W), dtype=jnp.float32)
    weight = 0.1 * jax.random.normal(kw, (C, 1, 3, 3), dtype=jnp.float32)
    gamma = 1.0 + 0.1 * jax.random.normal(kg, (C,), dtype=jnp.float32)
    beta = 0.1 * jax.random.normal(kb, (C,), dtype=jnp.float32)

    out = conv_dw_bn(x, weight, gamma, beta, eps=eps)
    out = jax.block_until_ready(out)

    ref = _reference(x, weight, gamma, beta, eps=eps)
    assert out.shape == (N, C, H, W)
    max_err = float(jnp.max(jnp.abs(out - ref)))
    assert jnp.allclose(out, ref, atol=1e-3, rtol=1e-3), max_err

    print("KERNEL_OK")
</pallas_src>

<mosaic_0001>
module attributes {stable_mosaic.version = 11 : i64} {
  func.func @_fused_conv_bn_kernel(%arg0: i32, %arg1: i32, %arg2: i32, %arg3: memref<1x196x256xf32, #tpu.memory_space<vmem>>, %arg4: memref<9x256xf32, #tpu.memory_space<vmem>>, %arg5: memref<1x256xf32, #tpu.memory_space<vmem>>, %arg6: memref<1x256xf32, #tpu.memory_space<vmem>>, %arg7: memref<196x1xf32, #tpu.memory_space<vmem>>, %arg8: memref<196x1xf32, #tpu.memory_space<vmem>>, %arg9: memref<1x196x256xf32, #tpu.memory_space<vmem>>, %arg10: memref<226x256xf32, #tpu.memory_space<vmem>>, %arg11: memref<2x196x256xf32, #tpu.memory_space<vmem>>, %arg12: memref<1x256xf32, #tpu.memory_space<vmem>>, %arg13: memref<1x256xf32, #tpu.memory_space<vmem>>, %arg14: memref<1x256xf32, #tpu.memory_space<vmem>>, %arg15: memref<1x256xf32, #tpu.memory_space<vmem>>) attributes {dimension_semantics = [#tpu.dimension_semantics<parallel>, #tpu.dimension_semantics<arbitrary>, #tpu.dimension_semantics<arbitrary>], iteration_bounds = array<i64: 1, 2, 2>, scalar_prefetch = 0 : i64, scratch_operands = 6 : i64, tpu.core_type = #tpu.core_type<tc>, window_params = [{transform_indices = @transform_0, window_bounds = array<i64: 1, 196, 256>}, {transform_indices = @transform_1, window_bounds = array<i64: 9, 256>}, {transform_indices = @transform_2, window_bounds = array<i64: 1, 256>}, {transform_indices = @transform_3, window_bounds = array<i64: 1, 256>}, {pipeline_mode = #tpu.pipeline_mode<synchronous>, transform_indices = @transform_4, window_bounds = array<i64: 196, 1>}, {pipeline_mode = #tpu.pipeline_mode<synchronous>, transform_indices = @transform_5, window_bounds = array<i64: 196, 1>}, {transform_indices = @transform_6, window_bounds = array<i64: 1, 196, 256>}]} {
    %c0_i32 = arith.constant 0 : i32
    %0 = arith.cmpi eq, %arg1, %c0_i32 : i32
    %c0_i32_0 = arith.constant 0 : i32
    %1 = arith.cmpi eq, %arg2, %c0_i32_0 : i32
    %2 = arith.andi %0, %1 : i1
    %3 = arith.extui %2 : i1 to i32
    %c0_i32_1 = arith.constant 0 : i32
    %4 = arith.cmpi ne, %3, %c0_i32_1 : i32
    scf.if %4 {
      %cst = arith.constant 0.000000e+00 : f32
      %16 = vector.broadcast %cst : f32 to vector<226x256xf32>
      %c0 = arith.constant 0 : index
      %c0_8 = arith.constant 0 : index
      %17 = vector.load %arg10[%c0, %c0_8] : memref<226x256xf32, #tpu.memory_space<vmem>>, vector<226x256xf32>
      tpu.vector_store %arg10[%c0, %c0_8], %16 {strides = array<i32>} : memref<226x256xf32, #tpu.memory_space<vmem>>, vector<226x256xf32>,
      %cst_9 = arith.constant 0.000000e+00 : f32
      %18 = vector.broadcast %cst_9 : f32 to vector<1x256xf32>
      %c0_10 = arith.constant 0 : index
      %c0_11 = arith.constant 0 : index
      %19 = vector.load %arg12[%c0_10, %c0_11] : memref<1x256xf32, #tpu.memory_space<vmem>>, vector<1x256xf32>
      tpu.vector_store %arg12[%c0_10, %c0_11], %18 {strides = array<i32>} : memref<1x256xf32, #tpu.memory_space<vmem>>, vector<1x256xf32>,
      %cst_12 = arith.constant 0.000000e+00 : f32
      %20 = vector.broadcast %cst_12 : f32 to vector<1x256xf32>
      %c0_13 = arith.constant 0 : index
      %c0_14 = arith.constant 0 : index
      %21 = vector.load %arg13[%c0_13, %c0_14] : memref<1x256xf32, #tpu.memory_space<vmem>>, vector<1x256xf32>
      tpu.vector_store %arg13[%c0_13, %c0_14], %20 {strides = array<i32>} : memref<1x256xf32, #tpu.memory_space<vmem>>, vector<1x256xf32>,
    } else {
    }
    %c0_i32_2 = arith.constant 0 : i32
    %5 = arith.cmpi eq, %arg1, %c0_i32_2 : i32
    %6 = arith.extui %5 : i1 to i32
    %c0_i32_3 = arith.constant 0 : i32
    %7 = arith.cmpi ne, %6, %c0_i32_3 : i32
    scf.if %7 {
      %c0 = arith.constant 0 : index
      %c0_8 = arith.constant 0 : index
      %c0_9 = arith.constant 0 : index
      %16 = vector.load %arg3[%c0, %c0_8, %c0_9] : memref<1x196x256xf32, #tpu.memory_space<vmem>>, vector<1x196x256xf32>
      %17 = vector.shape_cast %16 : vector<1x196x256xf32> to vector<196x256xf32>
      %c15 = arith.constant 15 : index
      %c0_10 = arith.constant 0 : index
      %18 = vector.load %arg10[%c15, %c0_10] : memref<226x256xf32, #tpu.memory_space<vmem>>, vector<196x256xf32>
      tpu.vector_store %arg10[%c15, %c0_10], %17 {strides = array<i32>} : memref<226x256xf32, #tpu.memory_space<vmem>>, vector<196x256xf32>,
      %c1 = arith.constant 1 : index
      %c0_11 = arith.constant 0 : index
      %19 = vector.load %arg4[%c1, %c0_11] : memref<9x256xf32, #tpu.memory_space<vmem>>, vector<1x256xf32>
      %c1_12 = arith.constant 1 : index
      %c0_13 = arith.constant 0 : index
      %20 = vector.load %arg10[%c1_12, %c0_13] : memref<226x256xf32, #tpu.memory_space<vmem>>, vector<196x256xf32>
      %21 = vector.broadcast %19 : vector<1x256xf32> to vector<196x256xf32>
      %22 = arith.mulf %21, %20 : vector<196x256xf32>
      %c4 = arith.constant 4 : index
      %c0_14 = arith.constant 0 : index
      %23 = vector.load %arg4[%c4, %c0_14] : memref<9x256xf32, #tpu.memory_space<vmem>>, vector<1x256xf32>
      %c15_15 = arith.constant 15 : index
      %c0_16 = arith.constant 0 : index
      %24 = vector.load %arg10[%c15_15, %c0_16] : memref<226x256xf32, #tpu.memory_space<vmem>>, vector<196x256xf32>
      %25 = vector.broadcast %23 : vector<1x256xf32> to vector<196x256xf32>
      %26 = arith.mulf %25, %24 : vector<196x256xf32>
      %27 = arith.addf %22, %26 : vector<196x256xf32>
      %c7 = arith.constant 7 : index
      %c0_17 = arith.constant 0 : index
      %28 = vector.load %arg4[%c7, %c0_17] : memref<9x256xf32, #tpu.memory_space<vmem>>, vector<1x256xf32>
      %c29 = arith.constant 29 : index
      %c0_18 = arith.constant 0 : index
      %29 = vector.load %arg10[%c29, %c0_18] : memref<226x256xf32, #tpu.memory_space<vmem>>, vector<196x256xf32>
      %30 = vector.broadcast %28 : vector<1x256xf32> to vector<196x256xf32>
      %31 = arith.mulf %30, %29 : vector<196x256xf32>
      %32 = arith.addf %27, %31 : vector<196x256xf32>
      %c0_19 = arith.constant 0 : index
      %c0_20 = arith.constant 0 : index
      %33 = vector.load %arg4[%c0_19, %c0_20] : memref<9x256xf32, #tpu.memory_space<vmem>>, vector<1x256xf32>
      %c0_21 = arith.constant 0 : index
      %c0_22 = arith.constant 0 : index
      %34 = vector.load %arg10[%c0_21, %c0_22] : memref<226x256xf32, #tpu.memory_space<vmem>>, vector<196x256xf32>
      %35 = vector.broadcast %33 : vector<1x256xf32> to vector<196x256xf32>
      %36 = arith.mulf %35, %34 : vector<196x256xf32>
      %c3 = arith.constant 3 : index
      %c0_23 = arith.constant 0 : index
      %37 = vector.load %arg4[%c3, %c0_23] : memref<9x256xf32, #tpu.memory_space<vmem>>, vector<1x256xf32>
      %c14 = arith.constant 14 : index
      %c0_24 = arith.constant 0 : index
      %38 = vector.load %arg10[%c14, %c0_24] : memref<226x256xf32, #tpu.memory_space<vmem>>, vector<196x256xf32>
      %39 = vector.broadcast %37 : vector<1x256xf32> to vector<196x256xf32>
      %40 = arith.mulf %39, %38 : vector<196x256xf32>
      %41 = arith.addf %36, %40 : vector<196x256xf32>
      %c6 = arith.constant 6 : index
      %c0_25 = arith.constant 0 : index
      %42 = vector.load %arg4[%c6, %c0_25] : memref<9x256xf32, #tpu.memory_space<vmem>>, vector<1x256xf32>
      %c28 = arith.constant 28 : index
      %c0_26 = arith.constant 0 : index
      %43 = vector.load %arg10[%c28, %c0_26] : memref<226x256xf32, #tpu.memory_space<vmem>>, vector<196x256xf32>
      %44 = vector.broadcast %42 : vector<1x256xf32> to vector<196x256xf32>
      %45 = arith.mulf %44, %43 : vector<196x256xf32>
      %46 = arith.addf %41, %45 : vector<196x256xf32>
      %c2 = arith.constant 2 : index
      %c0_27 = arith.constant 0 : index
      %47 = vector.load %arg4[%c2, %c0_27] : memref<9x256xf32, #tpu.memory_space<vmem>>, vector<1x256xf32>
      %c2_28 = arith.constant 2 : index
      %c0_29 = arith.constant 0 : index
      %48 = vector.load %arg10[%c2_28, %c0_29] : memref<226x256xf32, #tpu.memory_space<vmem>>, vector<196x256xf32>
      %49 = vector.broadcast %47 : vector<1x256xf32> to vector<196x256xf32>
      %50 = arith.mulf %49, %48 : vector<196x256xf32>
      %c5 = arith.constant 5 : index
      %c0_30 = arith.constant 0 : index
      %51 = vector.load %arg4[%c5, %c0_30] : memref<9x256xf32, #tpu.memory_space<vmem>>, vector<1x256xf32>
      %c16 = arith.constant 16 : index
      %c0_31 = arith.constant 0 : index
      %52 = vector.load %arg10[%c16, %c0_31] : memref<226x256xf32, #tpu.memory_space<vmem>>, vector<196x256xf32>
      %53 = vector.broadcast %51 : vector<1x256xf32> to vector<196x256xf32>
      %54 = arith.mulf %53, %52 : vector<196x256xf32>
      %55 = arith.addf %50, %54 : vector<196x256xf32>
      %c8 = arith.constant 8 : index
      %c0_32 = arith.constant 0 : index
      %56 = vector.load %arg4[%c8, %c0_32] : memref<9x256xf32, #tpu.memory_space<vmem>>, vector<1x256xf32>
      %c30 = arith.constant 30 : index
      %c0_33 = arith.constant 0 : index
      %57 = vector.load %arg10[%c30, %c0_33] : memref<226x256xf32, #tpu.memory_space<vmem>>, vector<196x256xf32>
      %58 = vector.broadcast %56 : vector<1x256xf32> to vector<196x256xf32>
      %59 = arith.mulf %58, %57 : vector<196x256xf32>
      %60 = arith.addf %55, %59 : vector<196x256xf32>
      %c0_34 = arith.constant 0 : index
      %c0_35 = arith.constant 0 : index
      %61 = vector.load %arg7[%c0_34, %c0_35] : memref<196x1xf32, #tpu.memory_space<vmem>>, vector<196x1xf32>
      %62 = vector.broadcast %61 : vector<196x1xf32> to vector<196x256xf32>
      %63 = arith.mulf %62, %46 : vector<196x256xf32>
      %64 = arith.addf %32, %63 : vector<196x256xf32>
      %c0_36 = arith.constant 0 : index
      %c0_37 = arith.constant 0 : index
      %65 = vector.load %arg8[%c0_36, %c0_37] : memref<196x1xf32, #tpu.memory_space<vmem>>, vector<196x1xf32>
      %66 = vector.broadcast %65 : vector<196x1xf32> to vector<196x256xf32>
      %67 = arith.mulf %66, %60 : vector<196x256xf32>
      %68 = arith.addf %64, %67 : vector<196x256xf32>
      %69 = arith.index_cast %arg2 : i32 to index
      %c0_38 = arith.constant 0 : index
      %c0_39 = arith.constant 0 : index
      %70 = vector.load %arg11[%69, %c0_38, %c0_39] : memref<2x196x256xf32, #tpu.memory_space<vmem>>, vector<1x196x256xf32>
      %71 = vector.shape_cast %70 : vector<1x196x256xf32> to vector<196x256xf32>
      %72 = vector.shape_cast %68 : vector<196x256xf32> to vector<1x196x256xf32>
      tpu.vector_store %arg11[%69, %c0_38, %c0_39], %72 {strides = array<i32>} : memref<2x196x256xf32, #tpu.memory_space<vmem>>, vector<1x196x256xf32>,
      %c0_40 = arith.constant 0 : index
      %c0_41 = arith.constant 0 : index
      %73 = vector.load %arg12[%c0_40, %c0_41] : memref<1x256xf32, #tpu.memory_space<vmem>>, vector<1x256xf32>
      %cst = arith.constant dense<0.000000e+00> : vector<256xf32>
      %74 = vector.multi_reduction <add>, %68, %cst [0] : vector<196x256xf32> to vector<256xf32>
      %75 = vector.shape_cast %74 : vector<256xf32> to vector<1x256xf32>
      %76 = arith.addf %73, %75 : vector<1x256xf32>
      %c0_42 = arith.constant 0 : index
      %c0_43 = arith.constant 0 : index
      %77 = vector.load %arg12[%c0_42, %c0_43] : memref<1x256xf32, #tpu.memory_space<vmem>>, vector<1x256xf32>
      tpu.vector_store %arg12[%c0_42, %c0_43], %76 {strides = array<i32>} : memref<1x256xf32, #tpu.memory_space<vmem>>, vector<1x256xf32>,
      %c0_44 = arith.constant 0 : index
      %c0_45 = arith.constant 0 : index
      %78 = vector.load %arg13[%c0_44, %c0_45] : memref<1x256xf32, #tpu.memory_space<vmem>>, vector<1x256xf32>
      %79 = arith.mulf %68, %68 : vector<196x256xf32>
      %cst_46 = arith.constant dense<0.000000e+00> : vector<256xf32>
      %80 = vector.multi_reduction <add>, %79, %cst_46 [0] : vector<196x256xf32> to vector<256xf32>
      %81 = vector.shape_cast %80 : vector<256xf32> to vector<1x256xf32>
      %82 = arith.addf %78, %81 : vector<1x256xf32>
      %c0_47 = arith.constant 0 : index
      %c0_48 = arith.constant 0 : index
      %83 = vector.load %arg13[%c0_47, %c0_48] : memref<1x256xf32, #tpu.memory_space<vmem>>, vector<1x256xf32>
      tpu.vector_store %arg13[%c0_47, %c0_48], %82 {strides = array<i32>} : memref<1x256xf32, #tpu.memory_space<vmem>>, vector<1x256xf32>,
    } else {
    }
    %c1_i32 = arith.constant 1 : i32
    %8 = arith.cmpi eq, %arg1, %c1_i32 : i32
    %c0_i32_4 = arith.constant 0 : i32
    %9 = arith.cmpi eq, %arg2, %c0_i32_4 : i32
    %10 = arith.andi %8, %9 : i1
    %11 = arith.extui %10 : i1 to i32
    %c0_i32_5 = arith.constant 0 : i32
    %12 = arith.cmpi ne, %11, %c0_i32_5 : i32
    scf.if %12 {
      %c0 = arith.constant 0 : index
      %c0_8 = arith.constant 0 : index
      %16 = vector.load %arg12[%c0, %c0_8] : memref<1x256xf32, #tpu.memory_space<vmem>>, vector<1x256xf32>
      %cst = arith.constant 0.00255102036 : f32
      %17 = vector.broadcast %cst : f32 to vector<1x256xf32>
      %18 = arith.mulf %16, %17 : vector<1x256xf32>
      %c0_9 = arith.constant 0 : index
      %c0_10 = arith.constant 0 : index
      %19 = vector.load %arg13[%c0_9, %c0_10] : memref<1x256xf32, #tpu.memory_space<vmem>>, vector<1x256xf32>
      %cst_11 = arith.constant 0.00255102036 : f32
      %20 = vector.broadcast %cst_11 : f32 to vector<1x256xf32>
      %21 = arith.mulf %19, %20 : vector<1x256xf32>
      %22 = arith.mulf %18, %18 : vector<1x256xf32>
      %23 = arith.subf %21, %22 : vector<1x256xf32>
      %cst_12 = arith.constant 0.000000e+00 : f32
      %24 = vector.broadcast %cst_12 : f32 to vector<1x256xf32>
      %25 = arith.maximumf %23, %24 : vector<1x256xf32>
      %c0_13 = arith.constant 0 : index
      %c0_14 = arith.constant 0 : index
      %26 = vector.load %arg5[%c0_13, %c0_14] : memref<1x256xf32, #tpu.memory_space<vmem>>, vector<1x256xf32>
      %cst_15 = arith.constant 1.000000e-03 : f32
      %27 = vector.broadcast %cst_15 : f32 to vector<1x256xf32>
      %28 = arith.addf %25, %27 : vector<1x256xf32>
      %29 = math.rsqrt %28 : vector<1x256xf32>
      %30 = arith.mulf %26, %29 : vector<1x256xf32>
      %c0_16 = arith.constant 0 : index
      %c0_17 = arith.constant 0 : index
      %31 = vector.load %arg14[%c0_16, %c0_17] : memref<1x256xf32, #tpu.memory_space<vmem>>, vector<1x256xf32>
      tpu.vector_store %arg14[%c0_16, %c0_17], %30 {strides = array<i32>} : memref<1x256xf32, #tpu.memory_space<vmem>>, vector<1x256xf32>,
      %c0_18 = arith.constant 0 : index
      %c0_19 = arith.constant 0 : index
      %32 = vector.load %arg6[%c0_18, %c0_19] : memref<1x256xf32, #tpu.memory_space<vmem>>, vector<1x256xf32>
      %33 = arith.mulf %18, %30 : vector<1x256xf32>
      %34 = arith.subf %32, %33 : vector<1x256xf32>
      %c0_20 = arith.constant 0 : index
      %c0_21 = arith.constant 0 : index
      %35 = vector.load %arg15[%c0_20, %c0_21] : memref<1x256xf32, #tpu.memory_space<vmem>>, vector<1x256xf32>
      tpu.vector_store %arg15[%c0_20, %c0_21], %34 {strides = array<i32>} : memref<1x256xf32, #tpu.memory_space<vmem>>, vector<1x256xf32>,
    } else {
    }
    %c1_i32_6 = arith.constant 1 : i32
    %13 = arith.cmpi eq, %arg1, %c1_i32_6 : i32
    %14 = arith.extui %13 : i1 to i32
    %c0_i32_7 = arith.constant 0 : i32
    %15 = arith.cmpi ne, %14, %c0_i32_7 : i32
    scf.if %15 {
      %16 = arith.index_cast %arg2 : i32 to index
      %c0 = arith.constant 0 : index
      %c0_8 = arith.constant 0 : index
      %17 = vector.load %arg11[%16, %c0, %c0_8] : memref<2x196x256xf32, #tpu.memory_space<vmem>>, vector<1x196x256xf32>
      %18 = vector.shape_cast %17 : vector<1x196x256xf32> to vector<196x256xf32>
      %c0_9 = arith.constant 0 : index
      %c0_10 = arith.constant 0 : index
      %19 = vector.load %arg14[%c0_9, %c0_10] : memref<1x256xf32, #tpu.memory_space<vmem>>, vector<1x256xf32>
      %20 = vector.broadcast %19 : vector<1x256xf32> to vector<196x256xf32>
      %21 = arith.mulf %18, %20 : vector<196x256xf32>
      %c0_11 = arith.constant 0 : index
      %c0_12 = arith.constant 0 : index
      %22 = vector.load %arg15[%c0_11, %c0_12] : memref<1x256xf32, #tpu.memory_space<vmem>>, vector<1x256xf32>
      %23 = vector.broadcast %22 : vector<1x256xf32> to vector<196x256xf32>
      %24 = arith.addf %21, %23 : vector<196x256xf32>
      %c0_13 = arith.constant 0 : index
      %c0_14 = arith.constant 0 : index
      %c0_15 = arith.constant 0 : index
      %25 = vector.load %arg9[%c0_13, %c0_14, %c0_15] : memref<1x196x256xf32, #tpu.memory_space<vmem>>, vector<1x196x256xf32>
      %26 = vector.shape_cast %25 : vector<1x196x256xf32> to vector<196x256xf32>
      %27 = vector.shape_cast %24 : vector<196x256xf32> to vector<1x196x256xf32>
      tpu.vector_store %arg9[%c0_13, %c0_14, %c0_15], %27 {strides = array<i32>} : memref<1x196x256xf32, #tpu.memory_space<vmem>>, vector<1x196x256xf32>,
    } else {
    }
    return
  }
  func.func @transform_0(%arg0: i32, %arg1: i32, %arg2: i32) -> (i32, i32, i32) {
    %c1_i32 = arith.constant 1 : i32
    %0 = arith.subi %c1_i32, %arg1 : i32
    %1 = arith.muli %0, %arg2 : i32
    %c1_i32_0 = arith.constant 1 : i32
    %2 = arith.muli %arg1, %c1_i32_0 : i32
    %3 = arith.addi %1, %2 : i32
    %c0_i32 = arith.constant 0 : i32
    %c0_i32_1 = arith.constant 0 : i32
    return %3, %c0_i32, %arg0 : i32, i32, i32
  }
  func.func @transform_1(%arg0: i32, %arg1: i32, %arg2: i32) -> (i32, i32) {
    %c0_i32 = arith.constant 0 : i32
    %c0_i32_0 = arith.constant 0 : i32
    return %c0_i32, %arg0 : i32, i32
  }
  func.func @transform_2(%arg0: i32, %arg1: i32, %arg2: i32) -> (i32, i32) {
    %c0_i32 = arith.constant 0 : i32
    %c0_i32_0 = arith.constant 0 : i32
    return %c0_i32, %arg0 : i32, i32
  }
  func.func @transform_3(%arg0: i32, %arg1: i32, %arg2: i32) -> (i32, i32) {
    %c0_i32 = arith.constant 0 : i32
    %c0_i32_0 = arith.constant 0 : i32
    return %c0_i32, %arg0 : i32, i32
  }
  func.func @transform_4(%arg0: i32, %arg1: i32, %arg2: i32) -> (i32, i32) {
    %c0_i32 = arith.constant 0 : i32
    %c0_i32_0 = arith.constant 0 : i32
    %c0_i32_1 = arith.constant 0 : i32
    return %c0_i32, %c0_i32_0 : i32, i32
  }
  func.func @transform_5(%arg0: i32, %arg1: i32, %arg2: i32) -> (i32, i32) {
    %c0_i32 = arith.constant 0 : i32
    %c0_i32_0 = arith.constant 0 : i32
    %c0_i32_1 = arith.constant 0 : i32
    return %c0_i32, %c0_i32_0 : i32, i32
  }
  func.func @transform_6(%arg0: i32, %arg1: i32, %arg2: i32) -> (i32, i32, i32) {
    %0 = arith.muli %arg1, %arg2 : i32
    %c0_i32 = arith.constant 0 : i32
    %c0_i32_0 = arith.constant 0 : i32
    return %0, %c0_i32, %arg0 : i32, i32, i32
  }
}

</mosaic_0001>

<llo_original>
// kernel: tpu_custom_call.1
$region0: #{tpu_custom_call.1}
  #allocation0 [shape = 'u32[]', space=smem, size = 0x4, offset = 0x4, fixed_abs, tag = 'smem constant byte address 0x4 - core index']
  #allocation1 [shape = 'u32[144,128]{1,0:T(1,128)}', space=vmem, size = 0x12000, scoped, tag = 'internal scratch']
  #allocation2 [shape = 'f32[226,256]{1,0:T(8,128)}', space=vmem, size = 0x3a000, scoped, tag = 'scratch operand']
  #allocation3 [shape = 'f32[2,196,256]{2,1,0:T(8,128)}', space=vmem, size = 0x64000, scoped, tag = 'scratch operand']
  #allocation4 [shape = 'f32[1,256]{1,0:T(1,128)}', space=vmem, size = 0x400, scoped, tag = 'scratch operand']
  #allocation5 [shape = 'f32[1,256]{1,0:T(1,128)}', space=vmem, size = 0x400, scoped, tag = 'scratch operand']
  #allocation6 [shape = 'f32[1,256]{1,0:T(1,128)}', space=vmem, size = 0x400, scoped, tag = 'scratch operand']
  #allocation7 [shape = 'f32[1,256]{1,0:T(1,128)}', space=vmem, size = 0x400, scoped, tag = 'scratch operand']
  %s0 = inlined_call_operand.vmem [shape: f32[2,196,256], index: 0, kind: input, shape index: {}]
  %s1 = inlined_call_operand.vmem [shape: f32[9,256], index: 1, kind: input, shape index: {}]
  %s2 = inlined_call_operand.vmem [shape: f32[1,256], index: 2, kind: input, shape index: {}]
  %s3 = inlined_call_operand.vmem [shape: f32[1,256], index: 3, kind: input, shape index: {}]
  %s4 = inlined_call_operand.vmem [shape: f32[196,1], index: 4, kind: input, shape index: {}]
  %s5 = inlined_call_operand.vmem [shape: f32[196,1], index: 5, kind: input, shape index: {}]
  %s6 = inlined_call_operand.vmem [shape: f32[2,196,256], index: 6, kind: output, shape index: {}]
  %s7 = sld [smem:[#allocation0]]
  $region73: #{tpu_custom_call.1} parent=0
    _
  %s9 = ssub.s32 1, %s7
  %s10 = scalar_select 0, %s9, %s7
  loop: start=0, step=1, limit=6
  $region2: #{tpu_custom_call.1} parent=0 // loop_pre_header
    _
  $region3: #{tpu_custom_call.1} parent=0 // loop_header
    %s12 = sphi 0, %s16
    %p13 = scmp.ge.s32.totalorder %s12, 6
    %s19 = sphi 0, %s38
    %s20 = sphi 0, %s34
    %s21 = sphi 0, %s30
    %s22 = sphi 0, %s19
    %s23 = sphi 0, %s20
    %s24 = sphi 0, %s21
    %s25 = sphi 0, %s22
    %s26 = sphi 0, %s23
    %s27 = sphi 0, %s24
    %s49 = sphi 0, %s51
    %s52 = sphi 0, %s49
    %s53 = sphi 0, %s52
    %s69 = sphi 0, %s53
    %s75 = sphi 0, %s77
    %s78 = sphi 0, %s75
    %s79 = sphi 0, %s78
    %s95 = sphi 0, %s79
    %s101 = sphi 0, %s103
    %s104 = sphi 0, %s101
    %s105 = sphi 0, %s104
    %s121 = sphi 0, %s105
    %s127 = sphi 0, %s129
    %s130 = sphi 0, %s127
    %s131 = sphi 0, %s130
    %s147 = sphi 0, %s131
    %s151 = sphi 0, %s151
    %s153 = sphi 0, %s151
    %s154 = sphi 0, %s153
    %s168 = sphi 0, %s154
    %s172 = sphi 0, %s172
    %s174 = sphi 0, %s172
    %s175 = sphi 0, %s174
    %s189 = sphi 0, %s175
    %s199 = sphi 0, %s201
    %s202 = sphi 0, %s199
    %s203 = sphi 0, %s202
    %s219 = sphi 0, %s203
  $region4: #{tpu_custom_call.1} parent=0 // loop_header_branch
    %15 = sbr.rel (%p13) target = $region8
  $region5: #{tpu_custom_call.1} parent=0 // loop_body
    %s17 = ssub.s32 %s12, 1
    %s18 = ssub.s32 %s12, 2
    %s28 = sadd.s32 1, %s21
    %p29 = scmp.ge.s32.totalorder %s28, 2
    %s30 = scalar_select %p29, 0, %s28
    %s31 = sadd.s32 1, %s20
    %s32 = scalar_select %p29, %s31, %s20
    %p33 = scmp.ge.s32.totalorder %s32, 2
    %s34 = scalar_select %p33, 0, %s32
    %s35 = sadd.s32 1, %s19
    %s36 = scalar_select %p33, %s35, %s19
    %p37 = scmp.ge.s32.totalorder %s36, 1
    %s38 = scalar_select %p37, 0, %s36
    %s39 = ssub.s32 1, %s20
    %s40 = smul.u32 %s39, %s21
    %s41 = sadd.s32 %s40, %s20
    %s42 = ssub.s32 1, %s34
    %s43 = smul.u32 %s42, %s30
    %s44 = sadd.s32 %s43, %s34
    %s45 = ssub.s32 %s41, %s44
    %s46 = ssub.s32 %s19, %s38
    %s47 = sor.u32 %s45, %s46
    %p48 = scmp.eq.s32.totalorder %s47, 0
    %s50 = sadd.s32 %s49, 1
    %s51 = scalar_select %p48, %s49, %s50
    %p54 = pneg %p48
    %p55 = scmp.eq.s32.totalorder %s12, 3
    %p56 = por %p54, %p55
    %p57 = scmp.ne.s32.totalorder %s49, %s52
    %p58 = scmp.eq.s32.totalorder %s12, 0
    %p59 = por %p57, %p58
    %p60 = scmp.ne.s32.totalorder %s49, %s52
    %p61 = scmp.eq.s32.totalorder %s17, 3
    %p62 = por %p60, %p61
    %p63 = scmp.ne.s32.totalorder %s52, %s53
    %p64 = scmp.eq.s32.totalorder %s17, 0
    %p65 = por %p63, %p64
    %p66 = scmp.ne.s32.totalorder %s52, %s53
    %p67 = scmp.eq.s32.totalorder %s18, 3
    %p68 = por %p66, %p67
    %p70 = scmp.ne.s32.totalorder %s53, %s69
    %p71 = scmp.eq.s32.totalorder %s18, 0
    %p72 = por %p70, %p71
    %s73 = ssub.s32 %s19, %s38
    %p74 = scmp.eq.s32.totalorder %s73, 0
    %s76 = sadd.s32 %s75, 1
    %s77 = scalar_select %p74, %s75, %s76
    %p80 = pneg %p74
    %p81 = scmp.eq.s32.totalorder %s12, 3
    %p82 = por %p80, %p81
    %p83 = scmp.ne.s32.totalorder %s75, %s78
    %p84 = scmp.eq.s32.totalorder %s12, 0
    %p85 = por %p83, %p84
    %p86 = scmp.ne.s32.totalorder %s75, %s78
    %p87 = scmp.eq.s32.totalorder %s17, 3
    %p88 = por %p86, %p87
    %p89 = scmp.ne.s32.totalorder %s78, %s79
    %p90 = scmp.eq.s32.totalorder %s17, 0
    %p91 = por %p89, %p90
    %p92 = scmp.ne.s32.totalorder %s78, %s79
    %p93 = scmp.eq.s32.totalorder %s18, 3
    %p94 = por %p92, %p93
    %p96 = scmp.ne.s32.totalorder %s79, %s95
    %p97 = scmp.eq.s32.totalorder %s18, 0
    %p98 = por %p96, %p97
    %s99 = ssub.s32 %s19, %s38
    %p100 = scmp.eq.s32.totalorder %s99, 0
    %s102 = sadd.s32 %s101, 1
    %s103 = scalar_select %p100, %s101, %s102
    %p106 = pneg %p100
    %p107 = scmp.eq.s32.totalorder %s12, 3
    %p108 = por %p106, %p107
    %p109 = scmp.ne.s32.totalorder %s101, %s104
    %p110 = scmp.eq.s32.totalorder %s12, 0
    %p111 = por %p109, %p110
    %p112 = scmp.ne.s32.totalorder %s101, %s104
    %p113 = scmp.eq.s32.totalorder %s17, 3
    %p114 = por %p112, %p113
    %p115 = scmp.ne.s32.totalorder %s104, %s105
    %p116 = scmp.eq.s32.totalorder %s17, 0
    %p117 = por %p115, %p116
    %p118 = scmp.ne.s32.totalorder %s104, %s105
    %p119 = scmp.eq.s32.totalorder %s18, 3
    %p120 = por %p118, %p119
    %p122 = scmp.ne.s32.totalorder %s105, %s121
    %p123 = scmp.eq.s32.totalorder %s18, 0
    %p124 = por %p122, %p123
    %s125 = ssub.s32 %s19, %s38
    %p126 = scmp.eq.s32.totalorder %s125, 0
    %s128 = sadd.s32 %s127, 1
    %s129 = scalar_select %p126, %s127, %s128
    %p132 = pneg %p126
    %p133 = scmp.eq.s32.totalorder %s12, 3
    %p134 = por %p132, %p133
    %p135 = scmp.ne.s32.totalorder %s127, %s130
    %p136 = scmp.eq.s32.totalorder %s12, 0
    %p137 = por %p135, %p136
    %p138 = scmp.ne.s32.totalorder %s127, %s130
    %p139 = scmp.eq.s32.totalorder %s17, 3
    %p140 = por %p138, %p139
    %p141 = scmp.ne.s32.totalorder %s130, %s131
    %p142 = scmp.eq.s32.totalorder %s17, 0
    %p143 = por %p141, %p142
    %p144 = scmp.ne.s32.totalorder %s130, %s131
    %p145 = scmp.eq.s32.totalorder %s18, 3
    %p146 = por %p144, %p145
    %p148 = scmp.ne.s32.totalorder %s131, %s147
    %p149 = scmp.eq.s32.totalorder %s18, 0
    %p150 = por %p148, %p149
    %s152 = sadd.s32 %s151, 1
    %p155 = scmp.eq.s32.totalorder %s12, 3
    %p156 = scmp.ne.s32.totalorder %s151, %s153
    %p157 = scmp.eq.s32.totalorder %s12, 0
    %p158 = por %p156, %p157
    %p159 = scmp.ne.s32.totalorder %s151, %s153
    %p160 = scmp.eq.s32.totalorder %s17, 3
    %p161 = por %p159, %p160
    %p162 = scmp.ne.s32.totalorder %s153, %s154
    %p163 = scmp.eq.s32.totalorder %s17, 0
    %p164 = por %p162, %p163
    %p165 = scmp.ne.s32.totalorder %s153, %s154
    %p166 = scmp.eq.s32.totalorder %s18, 3
    %p167 = por %p165, %p166
    %p169 = scmp.ne.s32.totalorder %s154, %s168
    %p170 = scmp.eq.s32.totalorder %s18, 0
    %p171 = por %p169, %p170
    %s173 = sadd.s32 %s172, 1
    %p176 = scmp.eq.s32.totalorder %s12, 3
    %p177 = scmp.ne.s32.totalorder %s172, %s174
    %p178 = scmp.eq.s32.totalorder %s12, 0
    %p179 = por %p177, %p178
    %p180 = scmp.ne.s32.totalorder %s172, %s174
    %p181 = scmp.eq.s32.totalorder %s17, 3
    %p182 = por %p180, %p181
    %p183 = scmp.ne.s32.totalorder %s174, %s175
    %p184 = scmp.eq.s32.totalorder %s17, 0
    %p185 = por %p183, %p184
    %p186 = scmp.ne.s32.totalorder %s174, %s175
    %p187 = scmp.eq.s32.totalorder %s18, 3
    %p188 = por %p186, %p187
    %p190 = scmp.ne.s32.totalorder %s175, %s189
    %p191 = scmp.eq.s32.totalorder %s18, 0
    %p192 = por %p190, %p191
    %s193 = smul.u32 %s20, %s21
    %s194 = smul.u32 %s34, %s30
    %s195 = ssub.s32 %s193, %s194
    %s196 = ssub.s32 %s19, %s38
    %s197 = sor.u32 %s195, %s196
    %p198 = scmp.eq.s32.totalorder %s197, 0
    %s200 = sadd.s32 %s199, 1
    %s201 = scalar_select %p198, %s199, %s200
    %p204 = pneg %p198
    %p205 = scmp.eq.s32.totalorder %s12, 3
    %p206 = por %p204, %p205
    %p207 = scmp.ne.s32.totalorder %s199, %s202
    %p208 = scmp.eq.s32.totalorder %s12, 0
    %p209 = por %p207, %p208
    %p210 = scmp.ne.s32.totalorder %s199, %s202
    %p211 = scmp.eq.s32.totalorder %s17, 3
    %p212 = por %p210, %p211
    %p213 = scmp.ne.s32.totalorder %s202, %s203
    %p214 = scmp.eq.s32.totalorder %s17, 0
    %p215 = por %p213, %p214
    %p216 = scmp.ne.s32.totalorder %s202, %s203
    %p217 = scmp.eq.s32.totalorder %s18, 3
    %p218 = por %p216, %p217
    %p220 = scmp.ne.s32.totalorder %s203, %s219
    %p221 = scmp.eq.s32.totalorder %s18, 0
    %p222 = por %p220, %p221
    %p223 = scmp.le.s32.totalorder 1, %s12
    %p224 = scmp.lt.s32.totalorder %s12, 5
    %p225 = pnand %p223, %p224
    %p226 = pneg %p225
    // Predicated region
    $region9: #{tpu_custom_call.1} parent=5 // pred_check
      _
    $region10: #{tpu_custom_call.1} parent=5 // pred_check_branch
      %228 = sbr.rel (%p225) target = $region12
    $region11: #{tpu_custom_call.1} parent=5 // pred_region
      %s229 = ssub.s32 %s12, 1
      // Predicated region
      $region13: #{tpu_custom_call.1} parent=11 // pred_check
        %p230 = pneg %p91
      $region14: #{tpu_custom_call.1} parent=11 // pred_check_branch
        %232 = sbr.rel (%p230) target = $region16
      $region15: #{tpu_custom_call.1} parent=11 // pred_region
        %s233 = smul.u32 2, %s22
        %p234 = scmp.lt.s32.totalorder %s233, 1
        %s235 = scalar_select %p234, %s233, 1
        %s236 = smul.addr %s235, 8
        %s237 = scalar_lea.vmem %s1, %s236
        %s238 = smul.u32 2, %s22
      $region16: #{tpu_custom_call.1} parent=11 // pred_fallthru
        _
      // Predicated region
      $region17: #{tpu_custom_call.1} parent=11 // pred_check
        %p239 = pneg %p117
      $region18: #{tpu_custom_call.1} parent=11 // pred_check_branch
        %241 = sbr.rel (%p239) target = $region20
      $region19: #{tpu_custom_call.1} parent=11 // pred_region
        %s242 = smul.u32 2, %s22
        %p243 = scmp.lt.s32.totalorder %s242, 1
        %s244 = scalar_select %p243, %s242, 1
        %s245 = scalar_lea.vmem %s2, %s244
        %s246 = smul.u32 2, %s22
      $region20: #{tpu_custom_call.1} parent=11 // pred_fallthru
        _
      // Predicated region
      $region21: #{tpu_custom_call.1} parent=11 // pred_check
        %p247 = pneg %p143
      $region22: #{tpu_custom_call.1} parent=11 // pred_check_branch
        %249 = sbr.rel (%p247) target = $region24
      $region23: #{tpu_custom_call.1} parent=11 // pred_region
        %s250 = smul.u32 2, %s22
        %p251 = scmp.lt.s32.totalorder %s250, 1
        %s252 = scalar_select %p251, %s250, 1
        %s253 = scalar_lea.vmem %s3, %s252
        %s254 = smul.u32 2, %s22
      $region24: #{tpu_custom_call.1} parent=11 // pred_fallthru
        _
      // Predicated region
      $region25: #{tpu_custom_call.1} parent=11 // pred_check
        %p255 = pneg %p164
      $region26: #{tpu_custom_call.1} parent=11 // pred_check_branch
        %257 = sbr.rel (%p255) target = $region28
      $region27: #{tpu_custom_call.1} parent=11 // pred_region
        _
      $region28: #{tpu_custom_call.1} parent=11 // pred_fallthru
        _
      // Predicated region
      $region29: #{tpu_custom_call.1} parent=11 // pred_check
        %p258 = pneg %p185
      $region30: #{tpu_custom_call.1} parent=11 // pred_check_branch
        %260 = sbr.rel (%p258) target = $region32
      $region31: #{tpu_custom_call.1} parent=11 // pred_region
        _
      $region32: #{tpu_custom_call.1} parent=11 // pred_fallthru
        _
    $region12: #{tpu_custom_call.1} parent=5 // pred_fallthru
      _
    %p261 = scmp.lt.s32.totalorder %s12, 4
    // Predicated region
    $region33: #{tpu_custom_call.1} parent=5 // pred_check
      %p262 = pneg %p261
    $region34: #{tpu_custom_call.1} parent=5 // pred_check_branch
      %264 = sbr.rel (%p262) target = $region36
    $region35: #{tpu_custom_call.1} parent=5 // pred_region
      // Predicated region
      $region37: #{tpu_custom_call.1} parent=35 // pred_check
        %p265 = pneg %p59
      $region38: #{tpu_custom_call.1} parent=35 // pred_check_branch
        %267 = sbr.rel (%p265) target = $region40
      $region39: #{tpu_custom_call.1} parent=35 // pred_region
        %s268 = ssub.s32 1, %s20
        %s269 = smul.u32 %s268, %s21
        %s270 = sadd.s32 %s269, %s20
        %s271 = smul.u32 2, %s19
        %p272 = scmp.lt.s32.totalorder %s270, 1
        %s273 = scalar_select %p272, %s270, 1
        %p274 = scmp.lt.s32.totalorder %s271, 1
        %s275 = scalar_select %p274, %s271, 1
        %s276 = smul.addr %s273, 50
        %s277 = sadd.s32 %s275, %s276
        %s278 = smul.addr %s277, 8
        %s279 = scalar_lea.vmem %s0, %s278
        %s280 = ssub.s32 1, %s20
        %s281 = smul.u32 %s280, %s21
        %s282 = sadd.s32 %s281, %s20
        %s283 = smul.u32 2, %s19
      $region40: #{tpu_custom_call.1} parent=35 // pred_fallthru
        _
    $region36: #{tpu_custom_call.1} parent=5 // pred_fallthru
      _
    %p284 = scmp.le.s32.totalorder 1, %s12
    %p285 = scmp.lt.s32.totalorder %s12, 5
    %p286 = pnand %p284, %p285
    %p287 = pneg %p286
    // Predicated region
    $region41: #{tpu_custom_call.1} parent=5 // pred_check
      _
    $region42: #{tpu_custom_call.1} parent=5 // pred_check_branch
      %289 = sbr.rel (%p286) target = $region44
    $region43: #{tpu_custom_call.1} parent=5 // pred_region
      %s290 = ssub.s32 %s12, 1
      %s291 = ssub.s32 1, %s23
      %s292 = smul.u32 %s291, %s24
      %s293 = sadd.s32 %s292, %s23
      %s294 = smul.u32 2, %s22
      %p295 = scmp.lt.s32.totalorder %s293, 1
      %s296 = scalar_select %p295, %s293, 1
      %p297 = scmp.lt.s32.totalorder %s294, 1
      %s298 = scalar_select %p297, %s294, 1
      %s299 = smul.addr %s296, 50
      %s300 = sadd.s32 %s298, %s299
      %s301 = smul.addr %s300, 8
      %s302 = scalar_lea.vmem %s0, %s301
      %p303 = pneg %p65
      %p304 = pneg %p62
      %s305 = smul.u32 2, %s22
      %p306 = scmp.lt.s32.totalorder %s305, 1
      %s307 = scalar_select %p306, %s305, 1
      %s308 = smul.addr %s307, 8
      %s309 = scalar_lea.vmem %s1, %s308
      %p310 = pneg %p91
      %p311 = pneg %p88
      %s312 = smul.u32 2, %s22
      %p313 = scmp.lt.s32.totalorder %s312, 1
      %s314 = scalar_select %p313, %s312, 1
      %s315 = scalar_lea.vmem %s2, %s314
      %p316 = pneg %p117
      %p317 = pneg %p114
      %s318 = smul.u32 2, %s22
      %p319 = scmp.lt.s32.totalorder %s318, 1
      %s320 = scalar_select %p319, %s318, 1
      %s321 = scalar_lea.vmem %s3, %s320
      %p322 = pneg %p143
      %p323 = pneg %p140
      %p324 = pneg %p164
      %p325 = pneg %p161
      %p326 = pneg %p185
      %p327 = pneg %p182
      %p328 = pneg %p215
      %p329 = pneg %p212
      %s330 = smul.u32 %s23, %s24
      %s331 = smul.u32 2, %s22
      %p332 = scmp.lt.s32.totalorder %s330, 1
      %s333 = scalar_select %p332, %s330, 1
      %p334 = scmp.lt.s32.totalorder %s331, 1
      %s335 = scalar_select %p334, %s331, 1
      %s336 = smul.addr %s333, 50
      %s337 = sadd.s32 %s335, %s336
      %s338 = smul.addr %s337, 8
      %s339 = scalar_lea.vmem %s6, %s338
      %s340 = ssub.s32 1, %s23
      %s341 = smul.u32 %s340, %s24
      %s342 = sadd.s32 %s341, %s23
      %s343 = smul.u32 2, %s22
      %p344 = scmp.lt.s32.totalorder %s342, 1
      %s345 = scalar_select %p344, %s342, 1
      %p346 = scmp.lt.s32.totalorder %s343, 1
      %s347 = scalar_select %p346, %s343, 1
      %s348 = smul.addr %s345, 50
      %s349 = sadd.s32 %s347, %s348
      %s350 = smul.addr %s349, 8
      %s351 = scalar_lea.vmem %s0, %s350
      %s352 = ssub.s32 1, %s23
      %s353 = smul.u32 %s352, %s24
      %s354 = sadd.s32 %s353, %s23
      %s355 = smul.u32 2, %s22
      %s356 = smul.u32 2, %s22
      %p357 = scmp.lt.s32.totalorder %s356, 1
      %s358 = scalar_select %p357, %s356, 1
      %s359 = smul.addr %s358, 8
      %s360 = scalar_lea.vmem %s1, %s359
      %s361 = smul.u32 2, %s22
      %s362 = smul.u32 2, %s22
      %p363 = scmp.lt.s32.totalorder %s362, 1
      %s364 = scalar_select %p363, %s362, 1
      %s365 = scalar_lea.vmem %s2, %s364
      %s366 = smul.u32 2, %s22
      %s367 = smul.u32 2, %s22
      %p368 = scmp.lt.s32.totalorder %s367, 1
      %s369 = scalar_select %p368, %s367, 1
      %s370 = scalar_lea.vmem %s3, %s369
      %s371 = smul.u32 2, %s22
      %s372 = smul.u32 %s23, %s24
      %s373 = smul.u32 2, %s22
      %p374 = scmp.lt.s32.totalorder %s372, 1
      %s375 = scalar_select %p374, %s372, 1
      %p376 = scmp.lt.s32.totalorder %s373, 1
      %s377 = scalar_select %p376, %s373, 1
      %s378 = smul.addr %s375, 50
      %s379 = sadd.s32 %s377, %s378
      %s380 = smul.addr %s379, 8
      %s381 = scalar_lea.vmem %s6, %s380
      %s382 = smul.u32 %s23, %s24
      %s383 = smul.u32 2, %s22
      %p384 = scmp.eq.s32.totalorder %s23, 0
      %p385 = scmp.eq.s32.totalorder %s24, 0
      %p386 = pnand %p384, %p385
      %p387 = pneg %p386
      // Predicated region
      $region45: #{tpu_custom_call.1} parent=43 // pred_check
        _
      $region46: #{tpu_custom_call.1} parent=43 // pred_check_branch
        %389 = sbr.rel (%p386) target = $region48
      $region47: #{tpu_custom_call.1} parent=43 // pred_region
        %390 = vst [vmem:[#allocation2] sm:$0xff] 0.0
        %391 = vst [vmem:[#allocation2 + $0x8] sm:$0xff] 0.0
        %392 = vst [vmem:[#allocation2 + $0x10] sm:$0xff] 0.0
        %393 = vst [vmem:[#allocation2 + $0x18] sm:$0xff] 0.0
        %394 = vst [vmem:[#allocation2 + $0x20] sm:$0xff] 0.0
        %395 = vst [vmem:[#allocation2 + $0x28] sm:$0xff] 0.0
        %396 = vst [vmem:[#allocation2 + $0x30] sm:$0xff] 0.0
        %397 = vst [vmem:[#allocation2 + $0x38] sm:$0xff] 0.0
        %398 = vst [vmem:[#allocation2 + $0x40] sm:$0xff] 0.0
        %399 = vst [vmem:[#allocation2 + $0x48] sm:$0xff] 0.0
        %400 = vst [vmem:[#allocation2 + $0x50] sm:$0xff] 0.0
        %401 = vst [vmem:[#allocation2 + $0x58] sm:$0xff] 0.0
        %402 = vst [vmem:[#allocation2 + $0x60] sm:$0xff] 0.0
        %403 = vst [vmem:[#allocation2 + $0x68] sm:$0xff] 0.0
        %404 = vst [vmem:[#allocation2 + $0x70] sm:$0xff] 0.0
        %405 = vst [vmem:[#allocation2 + $0x78] sm:$0xff] 0.0
        %406 = vst [vmem:[#allocation2 + $0x80] sm:$0xff] 0.0
        %407 = vst [vmem:[#allocation2 + $0x88] sm:$0xff] 0.0
        %408 = vst [vmem:[#allocation2 + $0x90] sm:$0xff] 0.0
        %409 = vst [vmem:[#allocation2 + $0x98] sm:$0xff] 0.0
        %410 = vst [vmem:[#allocation2 + $0xa0] sm:$0xff] 0.0
        %411 = vst [vmem:[#allocation2 + $0xa8] sm:$0xff] 0.0
        %412 = vst [vmem:[#allocation2 + $0xb0] sm:$0xff] 0.0
        %413 = vst [vmem:[#allocation2 + $0xb8] sm:$0xff] 0.0
        %414 = vst [vmem:[#allocation2 + $0xc0] sm:$0xff] 0.0
        %415 = vst [vmem:[#allocation2 + $0xc8] sm:$0xff] 0.0
        %416 = vst [vmem:[#allocation2 + $0xd0] sm:$0xff] 0.0
        %417 = vst [vmem:[#allocation2 + $0xd8] sm:$0xff] 0.0
        %418 = vst [vmem:[#allocation2 + $0xe0] sm:$0xff] 0.0
        %419 = vst [vmem:[#allocation2 + $0xe8] sm:$0xff] 0.0
        %420 = vst [vmem:[#allocation2 + $0xf0] sm:$0xff] 0.0
        %421 = vst [vmem:[#allocation2 + $0xf8] sm:$0xff] 0.0
        %422 = vst [vmem:[#allocation2 + $0x100] sm:$0xff] 0.0
        %423 = vst [vmem:[#allocation2 + $0x108] sm:$0xff] 0.0
        %424 = vst [vmem:[#allocation2 + $0x110] sm:$0xff] 0.0
        %425 = vst [vmem:[#allocation2 + $0x118] sm:$0xff] 0.0
        %426 = vst [vmem:[#allocation2 + $0x120] sm:$0xff] 0.0
        %427 = vst [vmem:[#allocation2 + $0x128] sm:$0xff] 0.0
        %428 = vst [vmem:[#allocation2 + $0x130] sm:$0xff] 0.0
        %429 = vst [vmem:[#allocation2 + $0x138] sm:$0xff] 0.0
        %430 = vst [vmem:[#allocation2 + $0x140] sm:$0xff] 0.0
        %431 = vst [vmem:[#allocation2 + $0x148] sm:$0xff] 0.0
        %432 = vst [vmem:[#allocation2 + $0x150] sm:$0xff] 0.0
        %433 = vst [vmem:[#allocation2 + $0x158] sm:$0xff] 0.0
        %434 = vst [vmem:[#allocation2 + $0x160] sm:$0xff] 0.0
        %435 = vst [vmem:[#allocation2 + $0x168] sm:$0xff] 0.0
        %436 = vst [vmem:[#allocation2 + $0x170] sm:$0xff] 0.0
        %437 = vst [vmem:[#allocation2 + $0x178] sm:$0xff] 0.0
        %438 = vst [vmem:[#allocation2 + $0x180] sm:$0xff] 0.0
        %439 = vst [vmem:[#allocation2 + $0x188] sm:$0xff] 0.0
        %440 = vst [vmem:[#allocation2 + $0x190] sm:$0xff] 0.0
        %441 = vst [vmem:[#allocation2 + $0x198] sm:$0xff] 0.0
        %442 = vst [vmem:[#allocation2 + $0x1a0] sm:$0xff] 0.0
        %443 = vst [vmem:[#allocation2 + $0x1a8] sm:$0xff] 0.0
        %444 = vst [vmem:[#allocation2 + $0x1b0] sm:$0xff] 0.0
        %445 = vst [vmem:[#allocation2 + $0x1b8] sm:$0xff] 0.0
        %446 = vst [vmem:[#allocation2 + $0x1c0] sm:$0x3] 0.0
        %447 = vst [vmem:[#allocation2 + $0x1c8] sm:$0x3] 0.0
        %v448 = vlaneseq
        %vm449 = vcmp.ge.s32.totalorder %v448, 0
        %vm450 = vcmp.lt.s32.totalorder %v448, 256
        %vm451 = vmand %vm449, %vm450
        %452 = vst.msk [vmem:[#allocation4] sm:$0x3] %vm451, 0.0
        %453 = vst.msk [vmem:[#allocation5] sm:$0x3] %vm451, 0.0
      $region48: #{tpu_custom_call.1} parent=43 // pred_fallthru
        _
      // Predicated region
      $region49: #{tpu_custom_call.1} parent=43 // pred_check
        %p454 = pneg %p384
      $region50: #{tpu_custom_call.1} parent=43 // pred_check_branch
        %456 = sbr.rel (%p454) target = $region52
      $region51: #{tpu_custom_call.1} parent=43 // pred_region
        %v457 = vld [vmem:[%s351] sm:$0xff]
        %v458 = vld [vmem:[%s351 + $0x8] sm:$0xff]
        %v459 = vld [vmem:[%s351 + $0x10] sm:$0xff]
        %v460 = vld [vmem:[%s351 + $0x18] sm:$0xff]
        %v461 = vld [vmem:[%s351 + $0x20] sm:$0xff]
        %v462 = vld [vmem:[%s351 + $0x28] sm:$0xff]
        %v463 = vld [vmem:[%s351 + $0x30] sm:$0xff]
        %v464 = vld [vmem:[%s351 + $0x38] sm:$0xff]
        %v465 = vld [vmem:[%s351 + $0x40] sm:$0xff]
        %v466 = vld [vmem:[%s351 + $0x48] sm:$0xff]
        %v467 = vld [vmem:[%s351 + $0x50] sm:$0xff]
        %v468 = vld [vmem:[%s351 + $0x58] sm:$0xff]
        %v469 = vld [vmem:[%s351 + $0x60] sm:$0xff]
        %v470 = vld [vmem:[%s351 + $0x68] sm:$0xff]
        %v471 = vld [vmem:[%s351 + $0x70] sm:$0xff]
        %v472 = vld [vmem:[%s351 + $0x78] sm:$0xff]
        %v473 = vld [vmem:[%s351 + $0x80] sm:$0xff]
        %v474 = vld [vmem:[%s351 + $0x88] sm:$0xff]
        %v475 = vld [vmem:[%s351 + $0x90] sm:$0xff]
        %v476 = vld [vmem:[%s351 + $0x98] sm:$0xff]
        %v477 = vld [vmem:[%s351 + $0xa0] sm:$0xff]
        %v478 = vld [vmem:[%s351 + $0xa8] sm:$0xff]
        %v479 = vld [vmem:[%s351 + $0xb0] sm:$0xff]
        %v480 = vld [vmem:[%s351 + $0xb8] sm:$0xff]
        %v481 = vld [vmem:[%s351 + $0xc0] sm:$0xff]
        %v482 = vld [vmem:[%s351 + $0xc8] sm:$0xff]
        %v483 = vld [vmem:[%s351 + $0xd0] sm:$0xff]
        %v484 = vld [vmem:[%s351 + $0xd8] sm:$0xff]
        %v485 = vld [vmem:[%s351 + $0xe0] sm:$0xff]
        %v486 = vld [vmem:[%s351 + $0xe8] sm:$0xff]
        %v487 = vld [vmem:[%s351 + $0xf0] sm:$0xff]
        %v488 = vld [vmem:[%s351 + $0xf8] sm:$0xff]
        %v489 = vld [vmem:[%s351 + $0x100] sm:$0xff]
        %v490 = vld [vmem:[%s351 + $0x108] sm:$0xff]
        %v491 = vld [vmem:[%s351 + $0x110] sm:$0xff]
        %v492 = vld [vmem:[%s351 + $0x118] sm:$0xff]
        %v493 = vld [vmem:[%s351 + $0x120] sm:$0xff]
        %v494 = vld [vmem:[%s351 + $0x128] sm:$0xff]
        %v495 = vld [vmem:[%s351 + $0x130] sm:$0xff]
        %v496 = vld [vmem:[%s351 + $0x138] sm:$0xff]
        %v497 = vld [vmem:[%s351 + $0x140] sm:$0xff]
        %v498 = vld [vmem:[%s351 + $0x148] sm:$0xff]
        %v499 = vld [vmem:[%s351 + $0x150] sm:$0xff]
        %v500 = vld [vmem:[%s351 + $0x158] sm:$0xff]
        %v501 = vld [vmem:[%s351 + $0x160] sm:$0xff]
        %v502 = vld [vmem:[%s351 + $0x168] sm:$0xff]
        %v503 = vld [vmem:[%s351 + $0x170] sm:$0xff]
        %v504 = vld [vmem:[%s351 + $0x178] sm:$0xff]
        %v505 = vld [vmem:[%s351 + $0x180] sm:$0xf]
        %v506 = vld [vmem:[%s351 + $0x188] sm:$0xf]
        %vm557 = vcmask 1046528
        %v558 = vrot.slane %v457, 1
        %v559 = vrot.slane %v458, 1
        %v560 = vrot.slane %v459, 1
        %v561 = vsel %vm557, %v558, %v560
        %v562 = vrot.slane %v460, 1
        %v563 = vsel %vm557, %v559, %v562
        %v564 = vrot.slane %v461, 1
        %v565 = vsel %vm557, %v560, %v564
        %v566 = vrot.slane %v462, 1
        %v567 = vsel %vm557, %v562, %v566
        %v568 = vrot.slane %v463, 1
        %v569 = vsel %vm557, %v564, %v568
        %v570 = vrot.slane %v464, 1
        %v571 = vsel %vm557, %v566, %v570
        %v572 = vrot.slane %v465, 1
        %v573 = vsel %vm557, %v568, %v572
        %v574 = vrot.slane %v466, 1
        %v575 = vsel %vm557, %v570, %v574
        %v576 = vrot.slane %v467, 1
        %v577 = vsel %vm557, %v572, %v576
        %v578 = vrot.slane %v468, 1
        %v579 = vsel %vm557, %v574, %v578
        %v580 = vrot.slane %v469, 1
        %v581 = vsel %vm557, %v576, %v580
        %v582 = vrot.slane %v470, 1
        %v583 = vsel %vm557, %v578, %v582
        %v584 = vrot.slane %v471, 1
        %v585 = vsel %vm557, %v580, %v584
        %v586 = vrot.slane %v472, 1
        %v587 = vsel %vm557, %v582, %v586
        %v588 = vrot.slane %v473, 1
        %v589 = vsel %vm557, %v584, %v588
        %v590 = vrot.slane %v474, 1
        %v591 = vsel %vm557, %v586, %v590
        %v592 = vrot.slane %v475, 1
        %v593 = vsel %vm557, %v588, %v592
        %v594 = vrot.slane %v476, 1
        %v595 = vsel %vm557, %v590, %v594
        %v596 = vrot.slane %v477, 1
        %v597 = vsel %vm557, %v592, %v596
        %v598 = vrot.slane %v478, 1
        %v599 = vsel %vm557, %v594, %v598
        %v600 = vrot.slane %v479, 1
        %v601 = vsel %vm557, %v596, %v600
        %v602 = vrot.slane %v480, 1
        %v603 = vsel %vm557, %v598, %v602
        %v604 = vrot.slane %v481, 1
        %v605 = vsel %vm557, %v600, %v604
        %v606 = vrot.slane %v482, 1
        %v607 = vsel %vm557, %v602, %v606
        %v608 = vrot.slane %v483, 1
        %v609 = vsel %vm557, %v604, %v608
        %v610 = vrot.slane %v484, 1
        %v611 = vsel %vm557, %v606, %v610
        %v612 = vrot.slane %v485, 1
        %v613 = vsel %vm557, %v608, %v612
        %v614 = vrot.slane %v486, 1
        %v615 = vsel %vm557, %v610, %v614
        %v616 = vrot.slane %v487, 1
        %v617 = vsel %vm557, %v612, %v616
        %v618 = vrot.slane %v488, 1
        %v619 = vsel %vm557, %v614, %v618
        %v620 = vrot.slane %v489, 1
        %v621 = vsel %vm557, %v616, %v620
        %v622 = vrot.slane %v490, 1
        %v623 = vsel %vm557, %v618, %v622
        %v624 = vrot.slane %v491, 1
        %v625 = vsel %vm557, %v620, %v624
        %v626 = vrot.slane %v492, 1
        %v627 = vsel %vm557, %v622, %v626
        %v628 = vrot.slane %v493, 1
        %v629 = vsel %vm557, %v624, %v628
        %v630 = vrot.slane %v494, 1
        %v631 = vsel %vm557, %v626, %v630
        %v632 = vrot.slane %v495, 1
        %v633 = vsel %vm557, %v628, %v632
        %v634 = vrot.slane %v496, 1
        %v635 = vsel %vm557, %v630, %v634
        %v636 = vrot.slane %v497, 1
        %v637 = vsel %vm557, %v632, %v636
        %v638 = vrot.slane %v498, 1
        %v639 = vsel %vm557, %v634, %v638
        %v640 = vrot.slane %v499, 1
        %v641 = vsel %vm557, %v636, %v640
        %v642 = vrot.slane %v500, 1
        %v643 = vsel %vm557, %v638, %v642
        %v644 = vrot.slane %v501, 1
        %v645 = vsel %vm557, %v640, %v644
        %v646 = vrot.slane %v502, 1
        %v647 = vsel %vm557, %v642, %v646
        %v648 = vrot.slane %v503, 1
        %v649 = vsel %vm557, %v644, %v648
        %v650 = vrot.slane %v504, 1
        %v651 = vsel %vm557, %v646, %v650
        %v652 = vrot.slane %v505, 1
        %v653 = vsel %vm557, %v648, %v652
        %v654 = vrot.slane %v506, 1
        %v655 = vsel %vm557, %v650, %v654
        %708 = vst [vmem:[#allocation2 + $0x10] sm:$0x80] %v558
        %709 = vst [vmem:[#allocation2 + $0x18] sm:$0x80] %v559
        %710 = vst [vmem:[#allocation2 + $0x20] sm:$0xff] %v561
        %711 = vst [vmem:[#allocation2 + $0x28] sm:$0xff] %v563
        %712 = vst [vmem:[#allocation2 + $0x30] sm:$0xff] %v565
        %713 = vst [vmem:[#allocation2 + $0x38] sm:$0xff] %v567
        %714 = vst [vmem:[#allocation2 + $0x40] sm:$0xff] %v569
        %715 = vst [vmem:[#allocation2 + $0x48] sm:$0xff] %v571
        %716 = vst [vmem:[#allocation2 + $0x50] sm:$0xff] %v573
        %717 = vst [vmem:[#allocation2 + $0x58] sm:$0xff] %v575
        %718 = vst [vmem:[#allocation2 + $0x60] sm:$0xff] %v577
        %719 = vst [vmem:[#allocation2 + $0x68] sm:$0xff] %v579
        %720 = vst [vmem:[#allocation2 + $0x70] sm:$0xff] %v581
        %721 = vst [vmem:[#allocation2 + $0x78] sm:$0xff] %v583
        %722 = vst [vmem:[#allocation2 + $0x80] sm:$0xff] %v585
        %723 = vst [vmem:[#allocation2 + $0x88] sm:$0xff] %v587
        %724 = vst [vmem:[#allocation2 + $0x90] sm:$0xff] %v589
        %725 = vst [vmem:[#allocation2 + $0x98] sm:$0xff] %v591
        %726 = vst [vmem:[#allocation2 + $0xa0] sm:$0xff] %v593
        %727 = vst [vmem:[#allocation2 + $0xa8] sm:$0xff] %v595
        %728 = vst [vmem:[#allocation2 + $0xb0] sm:$0xff] %v597
        %729 = vst [vmem:[#allocation2 + $0xb8] sm:$0xff] %v599
        %730 = vst [vmem:[#allocation2 + $0xc0] sm:$0xff] %v601
        %731 = vst [vmem:[#allocation2 + $0xc8] sm:$0xff] %v603
        %732 = vst [vmem:[#allocation2 + $0xd0] sm:$0xff] %v605
        %733 = vst [vmem:[#allocation2 + $0xd8] sm:$0xff] %v607
        %734 = vst [vmem:[#allocation2 + $0xe0] sm:$0xff] %v609
        %735 = vst [vmem:[#allocation2 + $0xe8] sm:$0xff] %v611
        %736 = vst [vmem:[#allocation2 + $0xf0] sm:$0xff] %v613
        %737 = vst [vmem:[#allocation2 + $0xf8] sm:$0xff] %v615
        %738 = vst [vmem:[#allocation2 + $0x100] sm:$0xff] %v617
        %739 = vst [vmem:[#allocation2 + $0x108] sm:$0xff] %v619
        %740 = vst [vmem:[#allocation2 + $0x110] sm:$0xff] %v621
        %741 = vst [vmem:[#allocation2 + $0x118] sm:$0xff] %v623
        %742 = vst [vmem:[#allocation2 + $0x120] sm:$0xff] %v625
        %743 = vst [vmem:[#allocation2 + $0x128] sm:$0xff] %v627
        %744 = vst [vmem:[#allocation2 + $0x130] sm:$0xff] %v629
        %745 = vst [vmem:[#allocation2 + $0x138] sm:$0xff] %v631
        %746 = vst [vmem:[#allocation2 + $0x140] sm:$0xff] %v633
        %747 = vst [vmem:[#allocation2 + $0x148] sm:$0xff] %v635
        %748 = vst [vmem:[#allocation2 + $0x150] sm:$0xff] %v637
        %749 = vst [vmem:[#allocation2 + $0x158] sm:$0xff] %v639
        %750 = vst [vmem:[#allocation2 + $0x160] sm:$0xff] %v641
        %751 = vst [vmem:[#allocation2 + $0x168] sm:$0xff] %v643
        %752 = vst [vmem:[#allocation2 + $0x170] sm:$0xff] %v645
        %753 = vst [vmem:[#allocation2 + $0x178] sm:$0xff] %v647
        %754 = vst [vmem:[#allocation2 + $0x180] sm:$0xff] %v649
        %755 = vst [vmem:[#allocation2 + $0x188] sm:$0xff] %v651
        %756 = vst [vmem:[#allocation2 + $0x190] sm:$0xff] %v653
        %757 = vst [vmem:[#allocation2 + $0x198] sm:$0xff] %v655
        %758 = vst [vmem:[#allocation2 + $0x1a0] sm:$0x7] %v652
        %759 = vst [vmem:[#allocation2 + $0x1a8] sm:$0x7] %v654
        %s760 = scalar_lea.vmem %s360, 1
        %v761 = vld [vmem:[%s760] ss:$8 sm:$0x3]
        %v762 = vld [vmem:[#allocation2] sm:$0xfe]
        %v763 = vld [vmem:[#allocation2 + $0x8] sm:$0xfe]
        %v764 = vld [vmem:[#allocation2 + $0x10] sm:$0xff]
        %v765 = vld [vmem:[#allocation2 + $0x18] sm:$0xff]
        %v766 = vld [vmem:[#allocation2 + $0x20] sm:$0xff]
        %v767 = vld [vmem:[#allocation2 + $0x28] sm:$0xff]
        %v768 = vld [vmem:[#allocation2 + $0x30] sm:$0xff]
        %v769 = vld [vmem:[#allocation2 + $0x38] sm:$0xff]
        %v770 = vld [vmem:[#allocation2 + $0x40] sm:$0xff]
        %v771 = vld [vmem:[#allocation2 + $0x48] sm:$0xff]
        %v772 = vld [vmem:[#allocation2 + $0x50] sm:$0xff]
        %v773 = vld [vmem:[#allocation2 + $0x58] sm:$0xff]
        %v774 = vld [vmem:[#allocation2 + $0x60] sm:$0xff]
        %v775 = vld [vmem:[#allocation2 + $0x68] sm:$0xff]
        %v776 = vld [vmem:[#allocation2 + $0x70] sm:$0xff]
        %v777 = vld [vmem:[#allocation2 + $0x78] sm:$0xff]
        %v778 = vld [vmem:[#allocation2 + $0x80] sm:$0xff]
        %v779 = vld [vmem:[#allocation2 + $0x88] sm:$0xff]
        %v780 = vld [vmem:[#allocation2 + $0x90] sm:$0xff]
        %v781 = vld [vmem:[#allocation2 + $0x98] sm:$0xff]
        %v782 = vld [vmem:[#allocation2 + $0xa0] sm:$0xff]
        %v783 = vld [vmem:[#allocation2 + $0xa8] sm:$0xff]
        %v784 = vld [vmem:[#allocation2 + $0xb0] sm:$0xff]
        %v785 = vld [vmem:[#allocation2 + $0xb8] sm:$0xff]
        %v786 = vld [vmem:[#allocation2 + $0xc0] sm:$0xff]
        %v787 = vld [vmem:[#allocation2 + $0xc8] sm:$0xff]
        %v788 = vld [vmem:[#allocation2 + $0xd0] sm:$0xff]
        %v789 = vld [vmem:[#allocation2 + $0xd8] sm:$0xff]
        %v790 = vld [vmem:[#allocation2 + $0xe0] sm:$0xff]
        %v791 = vld [vmem:[#allocation2 + $0xe8] sm:$0xff]
        %v792 = vld [vmem:[#allocation2 + $0xf0] sm:$0xff]
        %v793 = vld [vmem:[#allocation2 + $0xf8] sm:$0xff]
        %v794 = vld [vmem:[#allocation2 + $0x100] sm:$0xff]
        %v795 = vld [vmem:[#allocation2 + $0x108] sm:$0xff]
        %v796 = vld [vmem:[#allocation2 + $0x110] sm:$0xff]
        %v797 = vld [vmem:[#allocation2 + $0x118] sm:$0xff]
        %v798 = vld [vmem:[#allocation2 + $0x120] sm:$0xff]
        %v799 = vld [vmem:[#allocation2 + $0x128] sm:$0xff]
        %v800 = vld [vmem:[#allocation2 + $0x130] sm:$0xff]
        %v801 = vld [vmem:[#allocation2 + $0x138] sm:$0xff]
        %v802 = vld [vmem:[#allocation2 + $0x140] sm:$0xff]
        %v803 = vld [vmem:[#allocation2 + $0x148] sm:$0xff]
        %v804 = vld [vmem:[#allocation2 + $0x150] sm:$0xff]
        %v805 = vld [vmem:[#allocation2 + $0x158] sm:$0xff]
        %v806 = vld [vmem:[#allocation2 + $0x160] sm:$0xff]
        %v807 = vld [vmem:[#allocation2 + $0x168] sm:$0xff]
        %v808 = vld [vmem:[#allocation2 + $0x170] sm:$0xff]
        %v809 = vld [vmem:[#allocation2 + $0x178] sm:$0xff]
        %v810 = vld [vmem:[#allocation2 + $0x180] sm:$0x1f]
        %v811 = vld [vmem:[#allocation2 + $0x188] sm:$0x1f]
        %v813 = vlaneseq
        %v814 = vshrl.u32 %v813, 7
        %v815 = vsub.s32 0, %v814
        %v816 = vrot.slane %v761, %v815
        %v817 = vlaneseq
        %v818 = vshrl.u32 %v817, 7
        %v819 = vsub.s32 1, %v818
        %v820 = vrot.slane %v761, %v819
        %v823 = vmul.f32 %v816, %v762
        %v824 = vmul.f32 %v820, %v763
        %v825 = vmul.f32 %v816, %v764
        %v826 = vmul.f32 %v820, %v765
        %v827 = vmul.f32 %v816, %v766
        %v828 = vmul.f32 %v820, %v767
        %v829 = vmul.f32 %v816, %v768
        %v830 = vmul.f32 %v820, %v769
        %v831 = vmul.f32 %v816, %v770
        %v832 = vmul.f32 %v820, %v771
        %v833 = vmul.f32 %v816, %v772
        %v834 = vmul.f32 %v820, %v773
        %v835 = vmul.f32 %v816, %v774
        %v836 = vmul.f32 %v820, %v775
        %v837 = vmul.f32 %v816, %v776
        %v838 = vmul.f32 %v820, %v777
        %v839 = vmul.f32 %v816, %v778
        %v840 = vmul.f32 %v820, %v779
        %v841 = vmul.f32 %v816, %v780
        %v842 = vmul.f32 %v820, %v781
        %v843 = vmul.f32 %v816, %v782
        %v844 = vmul.f32 %v820, %v783
        %v845 = vmul.f32 %v816, %v784
        %v846 = vmul.f32 %v820, %v785
        %v847 = vmul.f32 %v816, %v786
        %v848 = vmul.f32 %v820, %v787
        %v849 = vmul.f32 %v816, %v788
        %v850 = vmul.f32 %v820, %v789
        %v851 = vmul.f32 %v816, %v790
        %v852 = vmul.f32 %v820, %v791
        %v853 = vmul.f32 %v816, %v792
        %v854 = vmul.f32 %v820, %v793
        %v855 = vmul.f32 %v816, %v794
        %v856 = vmul.f32 %v820, %v795
        %v857 = vmul.f32 %v816, %v796
        %v858 = vmul.f32 %v820, %v797
        %v859 = vmul.f32 %v816, %v798
        %v860 = vmul.f32 %v820, %v799
        %v861 = vmul.f32 %v816, %v800
        %v862 = vmul.f32 %v820, %v801
        %v863 = vmul.f32 %v816, %v802
        %v864 = vmul.f32 %v820, %v803
        %v865 = vmul.f32 %v816, %v804
        %v866 = vmul.f32 %v820, %v805
        %v867 = vmul.f32 %v816, %v806
        %v868 = vmul.f32 %v820, %v807
        %v869 = vmul.f32 %v816, %v808
        %v870 = vmul.f32 %v820, %v809
        %v871 = vmul.f32 %v816, %v810
        %v872 = vmul.f32 %v820, %v811
        %s873 = scalar_lea.vmem %s360, 4
        %v874 = vld [vmem:[%s873] ss:$8 sm:$0x3]
        %v875 = vld [vmem:[#allocation2 + $0x10] sm:$0x80]
        %v876 = vld [vmem:[#allocation2 + $0x18] sm:$0x80]
        %v877 = vld [vmem:[#allocation2 + $0x180] sm:$0xff]
        %v878 = vld [vmem:[#allocation2 + $0x188] sm:$0xff]
        %v879 = vld [vmem:[#allocation2 + $0x190] sm:$0xff]
        %v880 = vld [vmem:[#allocation2 + $0x198] sm:$0xff]
        %v881 = vld [vmem:[#allocation2 + $0x1a0] sm:$0x7]
        %v882 = vld [vmem:[#allocation2 + $0x1a8] sm:$0x7]
        %v884 = vlaneseq
        %v885 = vshrl.u32 %v884, 7
        %v886 = vsub.s32 0, %v885
        %v887 = vrot.slane %v874, %v886
        %v888 = vlaneseq
        %v889 = vshrl.u32 %v888, 7
        %v890 = vsub.s32 1, %v889
        %v891 = vrot.slane %v874, %v890
        %v894 = vmul.f32 %v887, %v875
        %v895 = vmul.f32 %v891, %v876
        %v896 = vmul.f32 %v887, %v766
        %v897 = vmul.f32 %v891, %v767
        %v898 = vmul.f32 %v887, %v768
        %v899 = vmul.f32 %v891, %v769
        %v900 = vmul.f32 %v887, %v770
        %v901 = vmul.f32 %v891, %v771
        %v902 = vmul.f32 %v887, %v772
        %v903 = vmul.f32 %v891, %v773
        %v904 = vmul.f32 %v887, %v774
        %v905 = vmul.f32 %v891, %v775
        %v906 = vmul.f32 %v887, %v776
        %v907 = vmul.f32 %v891, %v777
        %v908 = vmul.f32 %v887, %v778
        %v909 = vmul.f32 %v891, %v779
        %v910 = vmul.f32 %v887, %v780
        %v911 = vmul.f32 %v891, %v781
        %v912 = vmul.f32 %v887, %v782
        %v913 = vmul.f32 %v891, %v783
        %v914 = vmul.f32 %v887, %v784
        %v915 = vmul.f32 %v891, %v785
        %v916 = vmul.f32 %v887, %v786
        %v917 = vmul.f32 %v891, %v787
        %v918 = vmul.f32 %v887, %v788
        %v919 = vmul.f32 %v891, %v789
        %v920 = vmul.f32 %v887, %v790
        %v921 = vmul.f32 %v891, %v791
        %v922 = vmul.f32 %v887, %v792
        %v923 = vmul.f32 %v891, %v793
        %v924 = vmul.f32 %v887, %v794
        %v925 = vmul.f32 %v891, %v795
        %v926 = vmul.f32 %v887, %v796
        %v927 = vmul.f32 %v891, %v797
        %v928 = vmul.f32 %v887, %v798
        %v929 = vmul.f32 %v891, %v799
        %v930 = vmul.f32 %v887, %v800
        %v931 = vmul.f32 %v891, %v801
        %v932 = vmul.f32 %v887, %v802
        %v933 = vmul.f32 %v891, %v803
        %v934 = vmul.f32 %v887, %v804
        %v935 = vmul.f32 %v891, %v805
        %v936 = vmul.f32 %v887, %v806
        %v937 = vmul.f32 %v891, %v807
        %v938 = vmul.f32 %v887, %v808
        %v939 = vmul.f32 %v891, %v809
        %v940 = vmul.f32 %v887, %v877
        %v941 = vmul.f32 %v891, %v878
        %v942 = vmul.f32 %v887, %v879
        %v943 = vmul.f32 %v891, %v880
        %v944 = vmul.f32 %v887, %v881
        %v945 = vmul.f32 %v891, %v882
        %vm998 = vcmask 1041408
        %v999 = vrot.slane %v894, 6
        %v1000 = vrot.slane %v896, 6
        %v1001 = vsel %vm998, %v999, %v1000
        %v1002 = vrot.slane %v895, 6
        %v1003 = vrot.slane %v897, 6
        %v1004 = vsel %vm998, %v1002, %v1003
        %v1005 = vrot.slane %v898, 6
        %v1006 = vsel %vm998, %v1000, %v1005
        %v1007 = vrot.slane %v899, 6
        %v1008 = vsel %vm998, %v1003, %v1007
        %v1009 = vrot.slane %v900, 6
        %v1010 = vsel %vm998, %v1005, %v1009
        %v1011 = vrot.slane %v901, 6
        %v1012 = vsel %vm998, %v1007, %v1011
        %v1013 = vrot.slane %v902, 6
        %v1014 = vsel %vm998, %v1009, %v1013
        %v1015 = vrot.slane %v903, 6
        %v1016 = vsel %vm998, %v1011, %v1015
        %v1017 = vrot.slane %v904, 6
        %v1018 = vsel %vm998, %v1013, %v1017
        %v1019 = vrot.slane %v905, 6
        %v1020 = vsel %vm998, %v1015, %v1019
        %v1021 = vrot.slane %v906, 6
        %v1022 = vsel %vm998, %v1017, %v1021
        %v1023 = vrot.slane %v907, 6
        %v1024 = vsel %vm998, %v1019, %v1023
        %v1025 = vrot.slane %v908, 6
        %v1026 = vsel %vm998, %v1021, %v1025
        %v1027 = vrot.slane %v909, 6
        %v1028 = vsel %vm998, %v1023, %v1027
        %v1029 = vrot.slane %v910, 6
        %v1030 = vsel %vm998, %v1025, %v1029
        %v1031 = vrot.slane %v911, 6
        %v1032 = vsel %vm998, %v1027, %v1031
        %v1033 = vrot.slane %v912, 6
        %v1034 = vsel %vm998, %v1029, %v1033
        %v1035 = vrot.slane %v913, 6
        %v1036 = vsel %vm998, %v1031, %v1035
        %v1037 = vrot.slane %v914, 6
        %v1038 = vsel %vm998, %v1033, %v1037
        %v1039 = vrot.slane %v915, 6
        %v1040 = vsel %vm998, %v1035, %v1039
        %v1041 = vrot.slane %v916, 6
        %v1042 = vsel %vm998, %v1037, %v1041
        %v1043 = vrot.slane %v917, 6
        %v1044 = vsel %vm998, %v1039, %v1043
        %v1045 = vrot.slane %v918, 6
        %v1046 = vsel %vm998, %v1041, %v1045
        %v1047 = vrot.slane %v919, 6
        %v1048 = vsel %vm998, %v1043, %v1047
        %v1049 = vrot.slane %v920, 6
        %v1050 = vsel %vm998, %v1045, %v1049
        %v1051 = vrot.slane %v921, 6
        %v1052 = vsel %vm998, %v1047, %v1051
        %v1053 = vrot.slane %v922, 6
        %v1054 = vsel %vm998, %v1049, %v1053
        %v1055 = vrot.slane %v923, 6
        %v1056 = vsel %vm998, %v1051, %v1055
        %v1057 = vrot.slane %v924, 6
        %v1058 = vsel %vm998, %v1053, %v1057
        %v1059 = vrot.slane %v925, 6
        %v1060 = vsel %vm998, %v1055, %v1059
        %v1061 = vrot.slane %v926, 6
        %v1062 = vsel %vm998, %v1057, %v1061
        %v1063 = vrot.slane %v927, 6
        %v1064 = vsel %vm998, %v1059, %v1063
        %v1065 = vrot.slane %v928, 6
        %v1066 = vsel %vm998, %v1061, %v1065
        %v1067 = vrot.slane %v929, 6
        %v1068 = vsel %vm998, %v1063, %v1067
        %v1069 = vrot.slane %v930, 6
        %v1070 = vsel %vm998, %v1065, %v1069
        %v1071 = vrot.slane %v931, 6
        %v1072 = vsel %vm998, %v1067, %v1071
        %v1073 = vrot.slane %v932, 6
        %v1074 = vsel %vm998, %v1069, %v1073
        %v1075 = vrot.slane %v933, 6
        %v1076 = vsel %vm998, %v1071, %v1075
        %v1077 = vrot.slane %v934, 6
        %v1078 = vsel %vm998, %v1073, %v1077
        %v1079 = vrot.slane %v935, 6
        %v1080 = vsel %vm998, %v1075, %v1079
        %v1081 = vrot.slane %v936, 6
        %v1082 = vsel %vm998, %v1077, %v1081
        %v1083 = vrot.slane %v937, 6
        %v1084 = vsel %vm998, %v1079, %v1083
        %v1085 = vrot.slane %v938, 6
        %v1086 = vsel %vm998, %v1081, %v1085
        %v1087 = vrot.slane %v939, 6
        %v1088 = vsel %vm998, %v1083, %v1087
        %v1089 = vrot.slane %v940, 6
        %v1090 = vsel %vm998, %v1085, %v1089
        %v1091 = vrot.slane %v941, 6
        %v1092 = vsel %vm998, %v1087, %v1091
        %v1093 = vrot.slane %v942, 6
        %v1094 = vsel %vm998, %v1089, %v1093
        %v1095 = vrot.slane %v943, 6
        %v1096 = vsel %vm998, %v1091, %v1095
        %v1097 = vrot.slane %v944, 6
        %v1098 = vsel %vm998, %v1093, %v1097
        %v1099 = vrot.slane %v945, 6
        %v1100 = vsel %vm998, %v1095, %v1099
        %v1151 = vadd.f32 %v823, %v1001
        %v1152 = vadd.f32 %v824, %v1004
        %v1153 = vadd.f32 %v825, %v1006
        %v1154 = vadd.f32 %v826, %v1008
        %v1155 = vadd.f32 %v827, %v1010
        %v1156 = vadd.f32 %v828, %v1012
        %v1157 = vadd.f32 %v829, %v1014
        %v1158 = vadd.f32 %v830, %v1016
        %v1159 = vadd.f32 %v831, %v1018
        %v1160 = vadd.f32 %v832, %v1020
        %v1161 = vadd.f32 %v833, %v1022
        %v1162 = vadd.f32 %v834, %v1024
        %v1163 = vadd.f32 %v835, %v1026
        %v1164 = vadd.f32 %v836, %v1028
        %v1165 = vadd.f32 %v837, %v1030
        %v1166 = vadd.f32 %v838, %v1032
        %v1167 = vadd.f32 %v839, %v1034
        %v1168 = vadd.f32 %v840, %v1036
        %v1169 = vadd.f32 %v841, %v1038
        %v1170 = vadd.f32 %v842, %v1040
        %v1171 = vadd.f32 %v843, %v1042
        %v1172 = vadd.f32 %v844, %v1044
        %v1173 = vadd.f32 %v845, %v1046
        %v1174 = vadd.f32 %v846, %v1048
        %v1175 = vadd.f32 %v847, %v1050
        %v1176 = vadd.f32 %v848, %v1052
        %v1177 = vadd.f32 %v849, %v1054
        %v1178 = vadd.f32 %v850, %v1056
        %v1179 = vadd.f32 %v851, %v1058
        %v1180 = vadd.f32 %v852, %v1060
        %v1181 = vadd.f32 %v853, %v1062
        %v1182 = vadd.f32 %v854, %v1064
        %v1183 = vadd.f32 %v855, %v1066
        %v1184 = vadd.f32 %v856, %v1068
        %v1185 = vadd.f32 %v857, %v1070
        %v1186 = vadd.f32 %v858, %v1072
        %v1187 = vadd.f32 %v859, %v1074
        %v1188 = vadd.f32 %v860, %v1076
        %v1189 = vadd.f32 %v861, %v1078
        %v1190 = vadd.f32 %v862, %v1080
        %v1191 = vadd.f32 %v863, %v1082
        %v1192 = vadd.f32 %v864, %v1084
        %v1193 = vadd.f32 %v865, %v1086
        %v1194 = vadd.f32 %v866, %v1088
        %v1195 = vadd.f32 %v867, %v1090
        %v1196 = vadd.f32 %v868, %v1092
        %v1197 = vadd.f32 %v869, %v1094
        %v1198 = vadd.f32 %v870, %v1096
        %v1199 = vadd.f32 %v871, %v1098
        %v1200 = vadd.f32 %v872, %v1100
        %s1201 = scalar_lea.vmem %s360, 7
        %v1202 = vld [vmem:[%s1201] ss:$8 sm:$0x3]
        %v1203 = vld [vmem:[#allocation2 + $0x30] sm:$0xe0]
        %v1204 = vld [vmem:[#allocation2 + $0x38] sm:$0xe0]
        %v1205 = vld [vmem:[#allocation2 + $0x1a0] sm:$0xff]
        %v1206 = vld [vmem:[#allocation2 + $0x1a8] sm:$0xff]
        %v1207 = vld [vmem:[#allocation2 + $0x1b0] sm:$0xff]
        %v1208 = vld [vmem:[#allocation2 + $0x1b8] sm:$0xff]
        %v1209 = vld [vmem:[#allocation2 + $0x1c0] sm:$0x1]
        %v1210 = vld [vmem:[#allocation2 + $0x1c8] sm:$0x1]
        %v1212 = vlaneseq
        %v1213 = vshrl.u32 %v1212, 7
        %v1214 = vsub.s32 0, %v1213
        %v1215 = vrot.slane %v1202, %v1214
        %v1216 = vlaneseq
        %v1217 = vshrl.u32 %v1216, 7
        %v1218 = vsub.s32 1, %v1217
        %v1219 = vrot.slane %v1202, %v1218
        %v1222 = vmul.f32 %v1215, %v1203
        %v1223 = vmul.f32 %v1219, %v1204
        %v1224 = vmul.f32 %v1215, %v770
        %v1225 = vmul.f32 %v1219, %v771
        %v1226 = vmul.f32 %v1215, %v772
        %v1227 = vmul.f32 %v1219, %v773
        %v1228 = vmul.f32 %v1215, %v774
        %v1229 = vmul.f32 %v1219, %v775
        %v1230 = vmul.f32 %v1215, %v776
        %v1231 = vmul.f32 %v1219, %v777
        %v1232 = vmul.f32 %v1215, %v778
        %v1233 = vmul.f32 %v1219, %v779
        %v1234 = vmul.f32 %v1215, %v780
        %v1235 = vmul.f32 %v1219, %v781
        %v1236 = vmul.f32 %v1215, %v782
        %v1237 = vmul.f32 %v1219, %v783
        %v1238 = vmul.f32 %v1215, %v784
        %v1239 = vmul.f32 %v1219, %v785
        %v1240 = vmul.f32 %v1215, %v786
        %v1241 = vmul.f32 %v1219, %v787
        %v1242 = vmul.f32 %v1215, %v788
        %v1243 = vmul.f32 %v1219, %v789
        %v1244 = vmul.f32 %v1215, %v790
        %v1245 = vmul.f32 %v1219, %v791
        %v1246 = vmul.f32 %v1215, %v792
        %v1247 = vmul.f32 %v1219, %v793
        %v1248 = vmul.f32 %v1215, %v794
        %v1249 = vmul.f32 %v1219, %v795
        %v1250 = vmul.f32 %v1215, %v796
        %v1251 = vmul.f32 %v1219, %v797
        %v1252 = vmul.f32 %v1215, %v798
        %v1253 = vmul.f32 %v1219, %v799
        %v1254 = vmul.f32 %v1215, %v800
        %v1255 = vmul.f32 %v1219, %v801
        %v1256 = vmul.f32 %v1215, %v802
        %v1257 = vmul.f32 %v1219, %v803
        %v1258 = vmul.f32 %v1215, %v804
        %v1259 = vmul.f32 %v1219, %v805
        %v1260 = vmul.f32 %v1215, %v806
        %v1261 = vmul.f32 %v1219, %v807
        %v1262 = vmul.f32 %v1215, %v808
        %v1263 = vmul.f32 %v1219, %v809
        %v1264 = vmul.f32 %v1215, %v877
        %v1265 = vmul.f32 %v1219, %v878
        %v1266 = vmul.f32 %v1215, %v879
        %v1267 = vmul.f32 %v1219, %v880
        %v1268 = vmul.f32 %v1215, %v1205
        %v1269 = vmul.f32 %v1219, %v1206
        %v1270 = vmul.f32 %v1215, %v1207
        %v1271 = vmul.f32 %v1219, %v1208
        %v1272 = vmul.f32 %v1215, %v1209
        %v1273 = vmul.f32 %v1219, %v1210
        %vm1326 = vcmask 1043456
        %v1327 = vrot.slane %v1222, 4
        %v1328 = vrot.slane %v1224, 4
        %v1329 = vsel %vm1326, %v1327, %v1328
        %v1330 = vrot.slane %v1223, 4
        %v1331 = vrot.slane %v1225, 4
        %v1332 = vsel %vm1326, %v1330, %v1331
        %v1333 = vrot.slane %v1226, 4
        %v1334 = vsel %vm1326, %v1328, %v1333
        %v1335 = vrot.slane %v1227, 4
        %v1336 = vsel %vm1326, %v1331, %v1335
        %v1337 = vrot.slane %v1228, 4
        %v1338 = vsel %vm1326, %v1333, %v1337
        %v1339 = vrot.slane %v1229, 4
        %v1340 = vsel %vm1326, %v1335, %v1339
        %v1341 = vrot.slane %v1230, 4
        %v1342 = vsel %vm1326, %v1337, %v1341
        %v1343 = vrot.slane %v1231, 4
        %v1344 = vsel %vm1326, %v1339, %v1343
        %v1345 = vrot.slane %v1232, 4
        %v1346 = vsel %vm1326, %v1341, %v1345
        %v1347 = vrot.slane %v1233, 4
        %v1348 = vsel %vm1326, %v1343, %v1347
        %v1349 = vrot.slane %v1234, 4
        %v1350 = vsel %vm1326, %v1345, %v1349
        %v1351 = vrot.slane %v1235, 4
        %v1352 = vsel %vm1326, %v1347, %v1351
        %v1353 = vrot.slane %v1236, 4
        %v1354 = vsel %vm1326, %v1349, %v1353
        %v1355 = vrot.slane %v1237, 4
        %v1356 = vsel %vm1326, %v1351, %v1355
        %v1357 = vrot.slane %v1238, 4
        %v1358 = vsel %vm1326, %v1353, %v1357
        %v1359 = vrot.slane %v1239, 4
        %v1360 = vsel %vm1326, %v1355, %v1359
        %v1361 = vrot.slane %v1240, 4
        %v1362 = vsel %vm1326, %v1357, %v1361
        %v1363 = vrot.slane %v1241, 4
        %v1364 = vsel %vm1326, %v1359, %v1363
        %v1365 = vrot.slane %v1242, 4
        %v1366 = vsel %vm1326, %v1361, %v1365
        %v1367 = vrot.slane %v1243, 4
        %v1368 = vsel %vm1326, %v1363, %v1367
        %v1369 = vrot.slane %v1244, 4
        %v1370 = vsel %vm1326, %v1365, %v1369
        %v1371 = vrot.slane %v1245, 4
        %v1372 = vsel %vm1326, %v1367, %v1371
        %v1373 = vrot.slane %v1246, 4
        %v1374 = vsel %vm1326, %v1369, %v1373
        %v1375 = vrot.slane %v1247, 4
        %v1376 = vsel %vm1326, %v1371, %v1375
        %v1377 = vrot.slane %v1248, 4
        %v1378 = vsel %vm1326, %v1373, %v1377
        %v1379 = vrot.slane %v1249, 4
        %v1380 = vsel %vm1326, %v1375, %v1379
        %v1381 = vrot.slane %v1250, 4
        %v1382 = vsel %vm1326, %v1377, %v1381
        %v1383 = vrot.slane %v1251, 4
        %v1384 = vsel %vm1326, %v1379, %v1383
        %v1385 = vrot.slane %v1252, 4
        %v1386 = vsel %vm1326, %v1381, %v1385
        %v1387 = vrot.slane %v1253, 4
        %v1388 = vsel %vm1326, %v1383, %v1387
        %v1389 = vrot.slane %v1254, 4
        %v1390 = vsel %vm1326, %v1385, %v1389
        %v1391 = vrot.slane %v1255, 4
        %v1392 = vsel %vm1326, %v1387, %v1391
        %v1393 = vrot.slane %v1256, 4
        %v1394 = vsel %vm1326, %v1389, %v1393
        %v1395 = vrot.slane %v1257, 4
        %v1396 = vsel %vm1326, %v1391, %v1395
        %v1397 = vrot.slane %v1258, 4
        %v1398 = vsel %vm1326, %v1393, %v1397
        %v1399 = vrot.slane %v1259, 4
        %v1400 = vsel %vm1326, %v1395, %v1399
        %v1401 = vrot.slane %v1260, 4
        %v1402 = vsel %vm1326, %v1397, %v1401
        %v1403 = vrot.slane %v1261, 4
        %v1404 = vsel %vm1326, %v1399, %v1403
        %v1405 = vrot.slane %v1262, 4
        %v1406 = vsel %vm1326, %v1401, %v1405
        %v1407 = vrot.slane %v1263, 4
        %v1408 = vsel %vm1326, %v1403, %v1407
        %v1409 = vrot.slane %v1264, 4
        %v1410 = vsel %vm1326, %v1405, %v1409
        %v1411 = vrot.slane %v1265, 4
        %v1412 = vsel %vm1326, %v1407, %v1411
        %v1413 = vrot.slane %v1266, 4
        %v1414 = vsel %vm1326, %v1409, %v1413
        %v1415 = vrot.slane %v1267, 4
        %v1416 = vsel %vm1326, %v1411, %v1415
        %v1417 = vrot.slane %v1268, 4
        %v1418 = vsel %vm1326, %v1413, %v1417
        %v1419 = vrot.slane %v1269, 4
        %v1420 = vsel %vm1326, %v1415, %v1419
        %v1421 = vrot.slane %v1270, 4
        %v1422 = vsel %vm1326, %v1417, %v1421
        %v1423 = vrot.slane %v1271, 4
        %v1424 = vsel %vm1326, %v1419, %v1423
        %v1425 = vrot.slane %v1272, 4
        %v1426 = vsel %vm1326, %v1421, %v1425
        %v1427 = vrot.slane %v1273, 4
        %v1428 = vsel %vm1326, %v1423, %v1427
        %v1479 = vadd.f32 %v1151, %v1329
        %v1480 = vadd.f32 %v1152, %v1332
        %v1481 = vadd.f32 %v1153, %v1334
        %v1482 = vadd.f32 %v1154, %v1336
        %v1483 = vadd.f32 %v1155, %v1338
        %v1484 = vadd.f32 %v1156, %v1340
        %v1485 = vadd.f32 %v1157, %v1342
        %v1486 = vadd.f32 %v1158, %v1344
        %v1487 = vadd.f32 %v1159, %v1346
        %v1488 = vadd.f32 %v1160, %v1348
        %v1489 = vadd.f32 %v1161, %v1350
        %v1490 = vadd.f32 %v1162, %v1352
        %v1491 = vadd.f32 %v1163, %v1354
        %v1492 = vadd.f32 %v1164, %v1356
        %v1493 = vadd.f32 %v1165, %v1358
        %v1494 = vadd.f32 %v1166, %v1360
        %v1495 = vadd.f32 %v1167, %v1362
        %v1496 = vadd.f32 %v1168, %v1364
        %v1497 = vadd.f32 %v1169, %v1366
        %v1498 = vadd.f32 %v1170, %v1368
        %v1499 = vadd.f32 %v1171, %v1370
        %v1500 = vadd.f32 %v1172, %v1372
        %v1501 = vadd.f32 %v1173, %v1374
        %v1502 = vadd.f32 %v1174, %v1376
        %v1503 = vadd.f32 %v1175, %v1378
        %v1504 = vadd.f32 %v1176, %v1380
        %v1505 = vadd.f32 %v1177, %v1382
        %v1506 = vadd.f32 %v1178, %v1384
        %v1507 = vadd.f32 %v1179, %v1386
        %v1508 = vadd.f32 %v1180, %v1388
        %v1509 = vadd.f32 %v1181, %v1390
        %v1510 = vadd.f32 %v1182, %v1392
        %v1511 = vadd.f32 %v1183, %v1394
        %v1512 = vadd.f32 %v1184, %v1396
        %v1513 = vadd.f32 %v1185, %v1398
        %v1514 = vadd.f32 %v1186, %v1400
        %v1515 = vadd.f32 %v1187, %v1402
        %v1516 = vadd.f32 %v1188, %v1404
        %v1517 = vadd.f32 %v1189, %v1406
        %v1518 = vadd.f32 %v1190, %v1408
        %v1519 = vadd.f32 %v1191, %v1410
        %v1520 = vadd.f32 %v1192, %v1412
        %v1521 = vadd.f32 %v1193, %v1414
        %v1522 = vadd.f32 %v1194, %v1416
        %v1523 = vadd.f32 %v1195, %v1418
        %v1524 = vadd.f32 %v1196, %v1420
        %v1525 = vadd.f32 %v1197, %v1422
        %v1526 = vadd.f32 %v1198, %v1424
        %v1527 = vadd.f32 %v1199, %v1426
        %v1528 = vadd.f32 %v1200, %v1428
        %v1529 = vld [vmem:[%s360] ss:$8 sm:$0x3]
        %v1530 = vld [vmem:[#allocation2] sm:$0xff]
        %v1531 = vld [vmem:[#allocation2 + $0x8] sm:$0xff]
        %v1532 = vld [vmem:[#allocation2 + $0x180] sm:$0xf]
        %v1533 = vld [vmem:[#allocation2 + $0x188] sm:$0xf]
        %v1535 = vlaneseq
        %v1536 = vshrl.u32 %v1535, 7
        %v1537 = vsub.s32 0, %v1536
        %v1538 = vrot.slane %v1529, %v1537
        %v1539 = vlaneseq
        %v1540 = vshrl.u32 %v1539, 7
        %v1541 = vsub.s32 1, %v1540
        %v1542 = vrot.slane %v1529, %v1541
        %v1545 = vmul.f32 %v1538, %v1530
        %v1546 = vmul.f32 %v1542, %v1531
        %v1547 = vmul.f32 %v1538, %v764
        %v1548 = vmul.f32 %v1542, %v765
        %v1549 = vmul.f32 %v1538, %v766
        %v1550 = vmul.f32 %v1542, %v767
        %v1551 = vmul.f32 %v1538, %v768
        %v1552 = vmul.f32 %v1542, %v769
        %v1553 = vmul.f32 %v1538, %v770
        %v1554 = vmul.f32 %v1542, %v771
        %v1555 = vmul.f32 %v1538, %v772
        %v1556 = vmul.f32 %v1542, %v773
        %v1557 = vmul.f32 %v1538, %v774
        %v1558 = vmul.f32 %v1542, %v775
        %v1559 = vmul.f32 %v1538, %v776
        %v1560 = vmul.f32 %v1542, %v777
        %v1561 = vmul.f32 %v1538, %v778
        %v1562 = vmul.f32 %v1542, %v779
        %v1563 = vmul.f32 %v1538, %v780
        %v1564 = vmul.f32 %v1542, %v781
        %v1565 = vmul.f32 %v1538, %v782
        %v1566 = vmul.f32 %v1542, %v783
        %v1567 = vmul.f32 %v1538, %v784
        %v1568 = vmul.f32 %v1542, %v785
        %v1569 = vmul.f32 %v1538, %v786
        %v1570 = vmul.f32 %v1542, %v787
        %v1571 = vmul.f32 %v1538, %v788
        %v1572 = vmul.f32 %v1542, %v789
        %v1573 = vmul.f32 %v1538, %v790
        %v1574 = vmul.f32 %v1542, %v791
        %v1575 = vmul.f32 %v1538, %v792
        %v1576 = vmul.f32 %v1542, %v793
        %v1577 = vmul.f32 %v1538, %v794
        %v1578 = vmul.f32 %v1542, %v795
        %v1579 = vmul.f32 %v1538, %v796
        %v1580 = vmul.f32 %v1542, %v797
        %v1581 = vmul.f32 %v1538, %v798
        %v1582 = vmul.f32 %v1542, %v799
        %v1583 = vmul.f32 %v1538, %v800
        %v1584 = vmul.f32 %v1542, %v801
        %v1585 = vmul.f32 %v1538, %v802
        %v1586 = vmul.f32 %v1542, %v803
        %v1587 = vmul.f32 %v1538, %v804
        %v1588 = vmul.f32 %v1542, %v805
        %v1589 = vmul.f32 %v1538, %v806
        %v1590 = vmul.f32 %v1542, %v807
        %v1591 = vmul.f32 %v1538, %v808
        %v1592 = vmul.f32 %v1542, %v809
        %v1593 = vmul.f32 %v1538, %v1532
        %v1594 = vmul.f32 %v1542, %v1533
        %s1595 = scalar_lea.vmem %s360, 3
        %v1596 = vld [vmem:[%s1595] ss:$8 sm:$0x3]
        %v1597 = vld [vmem:[#allocation2 + $0x10] sm:$0xc0]
        %v1598 = vld [vmem:[#allocation2 + $0x18] sm:$0xc0]
        %v1599 = vld [vmem:[#allocation2 + $0x1a0] sm:$0x3]
        %v1600 = vld [vmem:[#allocation2 + $0x1a8] sm:$0x3]
        %v1602 = vlaneseq
        %v1603 = vshrl.u32 %v1602, 7
        %v1604 = vsub.s32 0, %v1603
        %v1605 = vrot.slane %v1596, %v1604
        %v1606 = vlaneseq
        %v1607 = vshrl.u32 %v1606, 7
        %v1608 = vsub.s32 1, %v1607
        %v1609 = vrot.slane %v1596, %v1608
        %v1612 = vmul.f32 %v1605, %v1597
        %v1613 = vmul.f32 %v1609, %v1598
        %v1614 = vmul.f32 %v1605, %v766
        %v1615 = vmul.f32 %v1609, %v767
        %v1616 = vmul.f32 %v1605, %v768
        %v1617 = vmul.f32 %v1609, %v769
        %v1618 = vmul.f32 %v1605, %v770
        %v1619 = vmul.f32 %v1609, %v771
        %v1620 = vmul.f32 %v1605, %v772
        %v1621 = vmul.f32 %v1609, %v773
        %v1622 = vmul.f32 %v1605, %v774
        %v1623 = vmul.f32 %v1609, %v775
        %v1624 = vmul.f32 %v1605, %v776
        %v1625 = vmul.f32 %v1609, %v777
        %v1626 = vmul.f32 %v1605, %v778
        %v1627 = vmul.f32 %v1609, %v779
        %v1628 = vmul.f32 %v1605, %v780
        %v1629 = vmul.f32 %v1609, %v781
        %v1630 = vmul.f32 %v1605, %v782
        %v1631 = vmul.f32 %v1609, %v783
        %v1632 = vmul.f32 %v1605, %v784
        %v1633 = vmul.f32 %v1609, %v785
        %v1634 = vmul.f32 %v1605, %v786
        %v1635 = vmul.f32 %v1609, %v787
        %v1636 = vmul.f32 %v1605, %v788
        %v1637 = vmul.f32 %v1609, %v789
        %v1638 = vmul.f32 %v1605, %v790
        %v1639 = vmul.f32 %v1609, %v791
        %v1640 = vmul.f32 %v1605, %v792
        %v1641 = vmul.f32 %v1609, %v793
        %v1642 = vmul.f32 %v1605, %v794
        %v1643 = vmul.f32 %v1609, %v795
        %v1644 = vmul.f32 %v1605, %v796
        %v1645 = vmul.f32 %v1609, %v797
        %v1646 = vmul.f32 %v1605, %v798
        %v1647 = vmul.f32 %v1609, %v799
        %v1648 = vmul.f32 %v1605, %v800
        %v1649 = vmul.f32 %v1609, %v801
        %v1650 = vmul.f32 %v1605, %v802
        %v1651 = vmul.f32 %v1609, %v803
        %v1652 = vmul.f32 %v1605, %v804
        %v1653 = vmul.f32 %v1609, %v805
        %v1654 = vmul.f32 %v1605, %v806
        %v1655 = vmul.f32 %v1609, %v807
        %v1656 = vmul.f32 %v1605, %v808
        %v1657 = vmul.f32 %v1609, %v809
        %v1658 = vmul.f32 %v1605, %v877
        %v1659 = vmul.f32 %v1609, %v878
        %v1660 = vmul.f32 %v1605, %v879
        %v1661 = vmul.f32 %v1609, %v880
        %v1662 = vmul.f32 %v1605, %v1599
        %v1663 = vmul.f32 %v1609, %v1600
        %v1716 = vrot.slane %v1612, 6
        %v1717 = vrot.slane %v1614, 6
        %v1718 = vsel %vm998, %v1716, %v1717
        %v1719 = vrot.slane %v1613, 6
        %v1720 = vrot.slane %v1615, 6
        %v1721 = vsel %vm998, %v1719, %v1720
        %v1722 = vrot.slane %v1616, 6
        %v1723 = vsel %vm998, %v1717, %v1722
        %v1724 = vrot.slane %v1617, 6
        %v1725 = vsel %vm998, %v1720, %v1724
        %v1726 = vrot.slane %v1618, 6
        %v1727 = vsel %vm998, %v1722, %v1726
        %v1728 = vrot.slane %v1619, 6
        %v1729 = vsel %vm998, %v1724, %v1728
        %v1730 = vrot.slane %v1620, 6
        %v1731 = vsel %vm998, %v1726, %v1730
        %v1732 = vrot.slane %v1621, 6
        %v1733 = vsel %vm998, %v1728, %v1732
        %v1734 = vrot.slane %v1622, 6
        %v1735 = vsel %vm998, %v1730, %v1734
        %v1736 = vrot.slane %v1623, 6
        %v1737 = vsel %vm998, %v1732, %v1736
        %v1738 = vrot.slane %v1624, 6
        %v1739 = vsel %vm998, %v1734, %v1738
        %v1740 = vrot.slane %v1625, 6
        %v1741 = vsel %vm998, %v1736, %v1740
        %v1742 = vrot.slane %v1626, 6
        %v1743 = vsel %vm998, %v1738, %v1742
        %v1744 = vrot.slane %v1627, 6
        %v1745 = vsel %vm998, %v1740, %v1744
        %v1746 = vrot.slane %v1628, 6
        %v1747 = vsel %vm998, %v1742, %v1746
        %v1748 = vrot.slane %v1629, 6
        %v1749 = vsel %vm998, %v1744, %v1748
        %v1750 = vrot.slane %v1630, 6
        %v1751 = vsel %vm998, %v1746, %v1750
        %v1752 = vrot.slane %v1631, 6
        %v1753 = vsel %vm998, %v1748, %v1752
        %v1754 = vrot.slane %v1632, 6
        %v1755 = vsel %vm998, %v1750, %v1754
        %v1756 = vrot.slane %v1633, 6
        %v1757 = vsel %vm998, %v1752, %v1756
        %v1758 = vrot.slane %v1634, 6
        %v1759 = vsel %vm998, %v1754, %v1758
        %v1760 = vrot.slane %v1635, 6
        %v1761 = vsel %vm998, %v1756, %v1760
        %v1762 = vrot.slane %v1636, 6
        %v1763 = vsel %vm998, %v1758, %v1762
        %v1764 = vrot.slane %v1637, 6
        %v1765 = vsel %vm998, %v1760, %v1764
        %v1766 = vrot.slane %v1638, 6
        %v1767 = vsel %vm998, %v1762, %v1766
        %v1768 = vrot.slane %v1639, 6
        %v1769 = vsel %vm998, %v1764, %v1768
        %v1770 = vrot.slane %v1640, 6
        %v1771 = vsel %vm998, %v1766, %v1770
        %v1772 = vrot.slane %v1641, 6
        %v1773 = vsel %vm998, %v1768, %v1772
        %v1774 = vrot.slane %v1642, 6
        %v1775 = vsel %vm998, %v1770, %v1774
        %v1776 = vrot.slane %v1643, 6
        %v1777 = vsel %vm998, %v1772, %v1776
        %v1778 = vrot.slane %v1644, 6
        %v1779 = vsel %vm998, %v1774, %v1778
        %v1780 = vrot.slane %v1645, 6
        %v1781 = vsel %vm998, %v1776, %v1780
        %v1782 = vrot.slane %v1646, 6
        %v1783 = vsel %vm998, %v1778, %v1782
        %v1784 = vrot.slane %v1647, 6
        %v1785 = vsel %vm998, %v1780, %v1784
        %v1786 = vrot.slane %v1648, 6
        %v1787 = vsel %vm998, %v1782, %v1786
        %v1788 = vrot.slane %v1649, 6
        %v1789 = vsel %vm998, %v1784, %v1788
        %v1790 = vrot.slane %v1650, 6
        %v1791 = vsel %vm998, %v1786, %v1790
        %v1792 = vrot.slane %v1651, 6
        %v1793 = vsel %vm998, %v1788, %v1792
        %v1794 = vrot.slane %v1652, 6
        %v1795 = vsel %vm998, %v1790, %v1794
        %v1796 = vrot.slane %v1653, 6
        %v1797 = vsel %vm998, %v1792, %v1796
        %v1798 = vrot.slane %v1654, 6
        %v1799 = vsel %vm998, %v1794, %v1798
        %v1800 = vrot.slane %v1655, 6
        %v1801 = vsel %vm998, %v1796, %v1800
        %v1802 = vrot.slane %v1656, 6
        %v1803 = vsel %vm998, %v1798, %v1802
        %v1804 = vrot.slane %v1657, 6
        %v1805 = vsel %vm998, %v1800, %v1804
        %v1806 = vrot.slane %v1658, 6
        %v1807 = vsel %vm998, %v1802, %v1806
        %v1808 = vrot.slane %v1659, 6
        %v1809 = vsel %vm998, %v1804, %v1808
        %v1810 = vrot.slane %v1660, 6
        %v1811 = vsel %vm998, %v1806, %v1810
        %v1812 = vrot.slane %v1661, 6
        %v1813 = vsel %vm998, %v1808, %v1812
        %v1814 = vrot.slane %v1662, 6
        %v1815 = vsel %vm998, %v1810, %v1814
        %v1816 = vrot.slane %v1663, 6
        %v1817 = vsel %vm998, %v1812, %v1816
        %v1868 = vadd.f32 %v1545, %v1718
        %v1869 = vadd.f32 %v1546, %v1721
        %v1870 = vadd.f32 %v1547, %v1723
        %v1871 = vadd.f32 %v1548, %v1725
        %v1872 = vadd.f32 %v1549, %v1727
        %v1873 = vadd.f32 %v1550, %v1729
        %v1874 = vadd.f32 %v1551, %v1731
        %v1875 = vadd.f32 %v1552, %v1733
        %v1876 = vadd.f32 %v1553, %v1735
        %v1877 = vadd.f32 %v1554, %v1737
        %v1878 = vadd.f32 %v1555, %v1739
        %v1879 = vadd.f32 %v1556, %v1741
        %v1880 = vadd.f32 %v1557, %v1743
        %v1881 = vadd.f32 %v1558, %v1745
        %v1882 = vadd.f32 %v1559, %v1747
        %v1883 = vadd.f32 %v1560, %v1749
        %v1884 = vadd.f32 %v1561, %v1751
        %v1885 = vadd.f32 %v1562, %v1753
        %v1886 = vadd.f32 %v1563, %v1755
        %v1887 = vadd.f32 %v1564, %v1757
        %v1888 = vadd.f32 %v1565, %v1759
        %v1889 = vadd.f32 %v1566, %v1761
        %v1890 = vadd.f32 %v1567, %v1763
        %v1891 = vadd.f32 %v1568, %v1765
        %v1892 = vadd.f32 %v1569, %v1767
        %v1893 = vadd.f32 %v1570, %v1769
        %v1894 = vadd.f32 %v1571, %v1771
        %v1895 = vadd.f32 %v1572, %v1773
        %v1896 = vadd.f32 %v1573, %v1775
        %v1897 = vadd.f32 %v1574, %v1777
        %v1898 = vadd.f32 %v1575, %v1779
        %v1899 = vadd.f32 %v1576, %v1781
        %v1900 = vadd.f32 %v1577, %v1783
        %v1901 = vadd.f32 %v1578, %v1785
        %v1902 = vadd.f32 %v1579, %v1787
        %v1903 = vadd.f32 %v1580, %v1789
        %v1904 = vadd.f32 %v1581, %v1791
        %v1905 = vadd.f32 %v1582, %v1793
        %v1906 = vadd.f32 %v1583, %v1795
        %v1907 = vadd.f32 %v1584, %v1797
        %v1908 = vadd.f32 %v1585, %v1799
        %v1909 = vadd.f32 %v1586, %v1801
        %v1910 = vadd.f32 %v1587, %v1803
        %v1911 = vadd.f32 %v1588, %v1805
        %v1912 = vadd.f32 %v1589, %v1807
        %v1913 = vadd.f32 %v1590, %v1809
        %v1914 = vadd.f32 %v1591, %v1811
        %v1915 = vadd.f32 %v1592, %v1813
        %v1916 = vadd.f32 %v1593, %v1815
        %v1917 = vadd.f32 %v1594, %v1817
        %s1918 = scalar_lea.vmem %s360, 6
        %v1919 = vld [vmem:[%s1918] ss:$8 sm:$0x3]
        %v1920 = vld [vmem:[#allocation2 + $0x30] sm:$0xf0]
        %v1921 = vld [vmem:[#allocation2 + $0x38] sm:$0xf0]
        %v1923 = vlaneseq
        %v1924 = vshrl.u32 %v1923, 7
        %v1925 = vsub.s32 0, %v1924
        %v1926 = vrot.slane %v1919, %v1925
        %v1927 = vlaneseq
        %v1928 = vshrl.u32 %v1927, 7
        %v1929 = vsub.s32 1, %v1928
        %v1930 = vrot.slane %v1919, %v1929
        %v1933 = vmul.f32 %v1926, %v1920
        %v1934 = vmul.f32 %v1930, %v1921
        %v1935 = vmul.f32 %v1926, %v770
        %v1936 = vmul.f32 %v1930, %v771
        %v1937 = vmul.f32 %v1926, %v772
        %v1938 = vmul.f32 %v1930, %v773
        %v1939 = vmul.f32 %v1926, %v774
        %v1940 = vmul.f32 %v1930, %v775
        %v1941 = vmul.f32 %v1926, %v776
        %v1942 = vmul.f32 %v1930, %v777
        %v1943 = vmul.f32 %v1926, %v778
        %v1944 = vmul.f32 %v1930, %v779
        %v1945 = vmul.f32 %v1926, %v780
        %v1946 = vmul.f32 %v1930, %v781
        %v1947 = vmul.f32 %v1926, %v782
        %v1948 = vmul.f32 %v1930, %v783
        %v1949 = vmul.f32 %v1926, %v784
        %v1950 = vmul.f32 %v1930, %v785
        %v1951 = vmul.f32 %v1926, %v786
        %v1952 = vmul.f32 %v1930, %v787
        %v1953 = vmul.f32 %v1926, %v788
        %v1954 = vmul.f32 %v1930, %v789
        %v1955 = vmul.f32 %v1926, %v790
        %v1956 = vmul.f32 %v1930, %v791
        %v1957 = vmul.f32 %v1926, %v792
        %v1958 = vmul.f32 %v1930, %v793
        %v1959 = vmul.f32 %v1926, %v794
        %v1960 = vmul.f32 %v1930, %v795
        %v1961 = vmul.f32 %v1926, %v796
        %v1962 = vmul.f32 %v1930, %v797
        %v1963 = vmul.f32 %v1926, %v798
        %v1964 = vmul.f32 %v1930, %v799
        %v1965 = vmul.f32 %v1926, %v800
        %v1966 = vmul.f32 %v1930, %v801
        %v1967 = vmul.f32 %v1926, %v802
        %v1968 = vmul.f32 %v1930, %v803
        %v1969 = vmul.f32 %v1926, %v804
        %v1970 = vmul.f32 %v1930, %v805
        %v1971 = vmul.f32 %v1926, %v806
        %v1972 = vmul.f32 %v1930, %v807
        %v1973 = vmul.f32 %v1926, %v808
        %v1974 = vmul.f32 %v1930, %v809
        %v1975 = vmul.f32 %v1926, %v877
        %v1976 = vmul.f32 %v1930, %v878
        %v1977 = vmul.f32 %v1926, %v879
        %v1978 = vmul.f32 %v1930, %v880
        %v1979 = vmul.f32 %v1926, %v1205
        %v1980 = vmul.f32 %v1930, %v1206
        %v1981 = vmul.f32 %v1926, %v1207
        %v1982 = vmul.f32 %v1930, %v1208
        %v2033 = vrot.slane %v1933, 4
        %v2034 = vrot.slane %v1935, 4
        %v2035 = vsel %vm1326, %v2033, %v2034
        %v2036 = vrot.slane %v1934, 4
        %v2037 = vrot.slane %v1936, 4
        %v2038 = vsel %vm1326, %v2036, %v2037
        %v2039 = vrot.slane %v1937, 4
        %v2040 = vsel %vm1326, %v2034, %v2039
        %v2041 = vrot.slane %v1938, 4
        %v2042 = vsel %vm1326, %v2037, %v2041
        %v2043 = vrot.slane %v1939, 4
        %v2044 = vsel %vm1326, %v2039, %v2043
        %v2045 = vrot.slane %v1940, 4
        %v2046 = vsel %vm1326, %v2041, %v2045
        %v2047 = vrot.slane %v1941, 4
        %v2048 = vsel %vm1326, %v2043, %v2047
        %v2049 = vrot.slane %v1942, 4
        %v2050 = vsel %vm1326, %v2045, %v2049
        %v2051 = vrot.slane %v1943, 4
        %v2052 = vsel %vm1326, %v2047, %v2051
        %v2053 = vrot.slane %v1944, 4
        %v2054 = vsel %vm1326, %v2049, %v2053
        %v2055 = vrot.slane %v1945, 4
        %v2056 = vsel %vm1326, %v2051, %v2055
        %v2057 = vrot.slane %v1946, 4
        %v2058 = vsel %vm1326, %v2053, %v2057
        %v2059 = vrot.slane %v1947, 4
        %v2060 = vsel %vm1326, %v2055, %v2059
        %v2061 = vrot.slane %v1948, 4
        %v2062 = vsel %vm1326, %v2057, %v2061
        %v2063 = vrot.slane %v1949, 4
        %v2064 = vsel %vm1326, %v2059, %v2063
        %v2065 = vrot.slane %v1950, 4
        %v2066 = vsel %vm1326, %v2061, %v2065
        %v2067 = vrot.slane %v1951, 4
        %v2068 = vsel %vm1326, %v2063, %v2067
        %v2069 = vrot.slane %v1952, 4
        %v2070 = vsel %vm1326, %v2065, %v2069
        %v2071 = vrot.slane %v1953, 4
        %v2072 = vsel %vm1326, %v2067, %v2071
        %v2073 = vrot.slane %v1954, 4
        %v2074 = vsel %vm1326, %v2069, %v2073
        %v2075 = vrot.slane %v1955, 4
        %v2076 = vsel %vm1326, %v2071, %v2075
        %v2077 = vrot.slane %v1956, 4
        %v2078 = vsel %vm1326, %v2073, %v2077
        %v2079 = vrot.slane %v1957, 4
        %v2080 = vsel %vm1326, %v2075, %v2079
        %v2081 = vrot.slane %v1958, 4
        %v2082 = vsel %vm1326, %v2077, %v2081
        %v2083 = vrot.slane %v1959, 4
        %v2084 = vsel %vm1326, %v2079, %v2083
        %v2085 = vrot.slane %v1960, 4
        %v2086 = vsel %vm1326, %v2081, %v2085
        %v2087 = vrot.slane %v1961, 4
        %v2088 = vsel %vm1326, %v2083, %v2087
        %v2089 = vrot.slane %v1962, 4
        %v2090 = vsel %vm1326, %v2085, %v2089
        %v2091 = vrot.slane %v1963, 4
        %v2092 = vsel %vm1326, %v2087, %v2091
        %v2093 = vrot.slane %v1964, 4
        %v2094 = vsel %vm1326, %v2089, %v2093
        %v2095 = vrot.slane %v1965, 4
        %v2096 = vsel %vm1326, %v2091, %v2095
        %v2097 = vrot.slane %v1966, 4
        %v2098 = vsel %vm1326, %v2093, %v2097
        %v2099 = vrot.slane %v1967, 4
        %v2100 = vsel %vm1326, %v2095, %v2099
        %v2101 = vrot.slane %v1968, 4
        %v2102 = vsel %vm1326, %v2097, %v2101
        %v2103 = vrot.slane %v1969, 4
        %v2104 = vsel %vm1326, %v2099, %v2103
        %v2105 = vrot.slane %v1970, 4
        %v2106 = vsel %vm1326, %v2101, %v2105
        %v2107 = vrot.slane %v1971, 4
        %v2108 = vsel %vm1326, %v2103, %v2107
        %v2109 = vrot.slane %v1972, 4
        %v2110 = vsel %vm1326, %v2105, %v2109
        %v2111 = vrot.slane %v1973, 4
        %v2112 = vsel %vm1326, %v2107, %v2111
        %v2113 = vrot.slane %v1974, 4
        %v2114 = vsel %vm1326, %v2109, %v2113
        %v2115 = vrot.slane %v1975, 4
        %v2116 = vsel %vm1326, %v2111, %v2115
        %v2117 = vrot.slane %v1976, 4
        %v2118 = vsel %vm1326, %v2113, %v2117
        %v2119 = vrot.slane %v1977, 4
        %v2120 = vsel %vm1326, %v2115, %v2119
        %v2121 = vrot.slane %v1978, 4
        %v2122 = vsel %vm1326, %v2117, %v2121
        %v2123 = vrot.slane %v1979, 4
        %v2124 = vsel %vm1326, %v2119, %v2123
        %v2125 = vrot.slane %v1980, 4
        %v2126 = vsel %vm1326, %v2121, %v2125
        %v2127 = vrot.slane %v1981, 4
        %v2128 = vsel %vm1326, %v2123, %v2127
        %v2129 = vrot.slane %v1982, 4
        %v2130 = vsel %vm1326, %v2125, %v2129
        %v2181 = vadd.f32 %v1868, %v2035
        %v2182 = vadd.f32 %v1869, %v2038
        %v2183 = vadd.f32 %v1870, %v2040
        %v2184 = vadd.f32 %v1871, %v2042
        %v2185 = vadd.f32 %v1872, %v2044
        %v2186 = vadd.f32 %v1873, %v2046
        %v2187 = vadd.f32 %v1874, %v2048
        %v2188 = vadd.f32 %v1875, %v2050
        %v2189 = vadd.f32 %v1876, %v2052
        %v2190 = vadd.f32 %v1877, %v2054
        %v2191 = vadd.f32 %v1878, %v2056
        %v2192 = vadd.f32 %v1879, %v2058
        %v2193 = vadd.f32 %v1880, %v2060
        %v2194 = vadd.f32 %v1881, %v2062
        %v2195 = vadd.f32 %v1882, %v2064
        %v2196 = vadd.f32 %v1883, %v2066
        %v2197 = vadd.f32 %v1884, %v2068
        %v2198 = vadd.f32 %v1885, %v2070
        %v2199 = vadd.f32 %v1886, %v2072
        %v2200 = vadd.f32 %v1887, %v2074
        %v2201 = vadd.f32 %v1888, %v2076
        %v2202 = vadd.f32 %v1889, %v2078
        %v2203 = vadd.f32 %v1890, %v2080
        %v2204 = vadd.f32 %v1891, %v2082
        %v2205 = vadd.f32 %v1892, %v2084
        %v2206 = vadd.f32 %v1893, %v2086
        %v2207 = vadd.f32 %v1894, %v2088
        %v2208 = vadd.f32 %v1895, %v2090
        %v2209 = vadd.f32 %v1896, %v2092
        %v2210 = vadd.f32 %v1897, %v2094
        %v2211 = vadd.f32 %v1898, %v2096
        %v2212 = vadd.f32 %v1899, %v2098
        %v2213 = vadd.f32 %v1900, %v2100
        %v2214 = vadd.f32 %v1901, %v2102
        %v2215 = vadd.f32 %v1902, %v2104
        %v2216 = vadd.f32 %v1903, %v2106
        %v2217 = vadd.f32 %v1904, %v2108
        %v2218 = vadd.f32 %v1905, %v2110
        %v2219 = vadd.f32 %v1906, %v2112
        %v2220 = vadd.f32 %v1907, %v2114
        %v2221 = vadd.f32 %v1908, %v2116
        %v2222 = vadd.f32 %v1909, %v2118
        %v2223 = vadd.f32 %v1910, %v2120
        %v2224 = vadd.f32 %v1911, %v2122
        %v2225 = vadd.f32 %v1912, %v2124
        %v2226 = vadd.f32 %v1913, %v2126
        %v2227 = vadd.f32 %v1914, %v2128
        %v2228 = vadd.f32 %v1915, %v2130
        %v2229 = vadd.f32 %v1916, %v2127
        %v2230 = vadd.f32 %v1917, %v2129
        %s2231 = scalar_lea.vmem %s360, 2
        %v2232 = vld [vmem:[%s2231] ss:$8 sm:$0x3]
        %v2233 = vld [vmem:[#allocation2] sm:$0xfc]
        %v2234 = vld [vmem:[#allocation2 + $0x8] sm:$0xfc]
        %v2235 = vld [vmem:[#allocation2 + $0x180] sm:$0x3f]
        %v2236 = vld [vmem:[#allocation2 + $0x188] sm:$0x3f]
        %v2238 = vlaneseq
        %v2239 = vshrl.u32 %v2238, 7
        %v2240 = vsub.s32 0, %v2239
        %v2241 = vrot.slane %v2232, %v2240
        %v2242 = vlaneseq
        %v2243 = vshrl.u32 %v2242, 7
        %v2244 = vsub.s32 1, %v2243
        %v2245 = vrot.slane %v2232, %v2244
        %v2248 = vmul.f32 %v2241, %v2233
        %v2249 = vmul.f32 %v2245, %v2234
        %v2250 = vmul.f32 %v2241, %v764
        %v2251 = vmul.f32 %v2245, %v765
        %v2252 = vmul.f32 %v2241, %v766
        %v2253 = vmul.f32 %v2245, %v767
        %v2254 = vmul.f32 %v2241, %v768
        %v2255 = vmul.f32 %v2245, %v769
        %v2256 = vmul.f32 %v2241, %v770
        %v2257 = vmul.f32 %v2245, %v771
        %v2258 = vmul.f32 %v2241, %v772
        %v2259 = vmul.f32 %v2245, %v773
        %v2260 = vmul.f32 %v2241, %v774
        %v2261 = vmul.f32 %v2245, %v775
        %v2262 = vmul.f32 %v2241, %v776
        %v2263 = vmul.f32 %v2245, %v777
        %v2264 = vmul.f32 %v2241, %v778
        %v2265 = vmul.f32 %v2245, %v779
        %v2266 = vmul.f32 %v2241, %v780
        %v2267 = vmul.f32 %v2245, %v781
        %v2268 = vmul.f32 %v2241, %v782
        %v2269 = vmul.f32 %v2245, %v783
        %v2270 = vmul.f32 %v2241, %v784
        %v2271 = vmul.f32 %v2245, %v785
        %v2272 = vmul.f32 %v2241, %v786
        %v2273 = vmul.f32 %v2245, %v787
        %v2274 = vmul.f32 %v2241, %v788
        %v2275 = vmul.f32 %v2245, %v789
        %v2276 = vmul.f32 %v2241, %v790
        %v2277 = vmul.f32 %v2245, %v791
        %v2278 = vmul.f32 %v2241, %v792
        %v2279 = vmul.f32 %v2245, %v793
        %v2280 = vmul.f32 %v2241, %v794
        %v2281 = vmul.f32 %v2245, %v795
        %v2282 = vmul.f32 %v2241, %v796
        %v2283 = vmul.f32 %v2245, %v797
        %v2284 = vmul.f32 %v2241, %v798
        %v2285 = vmul.f32 %v2245, %v799
        %v2286 = vmul.f32 %v2241, %v800
        %v2287 = vmul.f32 %v2245, %v801
        %v2288 = vmul.f32 %v2241, %v802
        %v2289 = vmul.f32 %v2245, %v803
        %v2290 = vmul.f32 %v2241, %v804
        %v2291 = vmul.f32 %v2245, %v805
        %v2292 = vmul.f32 %v2241, %v806
        %v2293 = vmul.f32 %v2245, %v807
        %v2294 = vmul.f32 %v2241, %v808
        %v2295 = vmul.f32 %v2245, %v809
        %v2296 = vmul.f32 %v2241, %v2235
        %v2297 = vmul.f32 %v2245, %v2236
        %s2298 = scalar_lea.vmem %s360, 5
        %v2299 = vld [vmem:[%s2298] ss:$8 sm:$0x3]
        %v2300 = vld [vmem:[#allocation2 + $0x1a0] sm:$0xf]
        %v2301 = vld [vmem:[#allocation2 + $0x1a8] sm:$0xf]
        %v2303 = vlaneseq
        %v2304 = vshrl.u32 %v2303, 7
        %v2305 = vsub.s32 0, %v2304
        %v2306 = vrot.slane %v2299, %v2305
        %v2307 = vlaneseq
        %v2308 = vshrl.u32 %v2307, 7
        %v2309 = vsub.s32 1, %v2308
        %v2310 = vrot.slane %v2299, %v2309
        %v2313 = vmul.f32 %v2306, %v766
        %v2314 = vmul.f32 %v2310, %v767
        %v2315 = vmul.f32 %v2306, %v768
        %v2316 = vmul.f32 %v2310, %v769
        %v2317 = vmul.f32 %v2306, %v770
        %v2318 = vmul.f32 %v2310, %v771
        %v2319 = vmul.f32 %v2306, %v772
        %v2320 = vmul.f32 %v2310, %v773
        %v2321 = vmul.f32 %v2306, %v774
        %v2322 = vmul.f32 %v2310, %v775
        %v2323 = vmul.f32 %v2306, %v776
        %v2324 = vmul.f32 %v2310, %v777
        %v2325 = vmul.f32 %v2306, %v778
        %v2326 = vmul.f32 %v2310, %v779
        %v2327 = vmul.f32 %v2306, %v780
        %v2328 = vmul.f32 %v2310, %v781
        %v2329 = vmul.f32 %v2306, %v782
        %v2330 = vmul.f32 %v2310, %v783
        %v2331 = vmul.f32 %v2306, %v784
        %v2332 = vmul.f32 %v2310, %v785
        %v2333 = vmul.f32 %v2306, %v786
        %v2334 = vmul.f32 %v2310, %v787
        %v2335 = vmul.f32 %v2306, %v788
        %v2336 = vmul.f32 %v2310, %v789
        %v2337 = vmul.f32 %v2306, %v790
        %v2338 = vmul.f32 %v2310, %v791
        %v2339 = vmul.f32 %v2306, %v792
        %v2340 = vmul.f32 %v2310, %v793
        %v2341 = vmul.f32 %v2306, %v794
        %v2342 = vmul.f32 %v2310, %v795
        %v2343 = vmul.f32 %v2306, %v796
        %v2344 = vmul.f32 %v2310, %v797
        %v2345 = vmul.f32 %v2306, %v798
        %v2346 = vmul.f32 %v2310, %v799
        %v2347 = vmul.f32 %v2306, %v800
        %v2348 = vmul.f32 %v2310, %v801
        %v2349 = vmul.f32 %v2306, %v802
        %v2350 = vmul.f32 %v2310, %v803
        %v2351 = vmul.f32 %v2306, %v804
        %v2352 = vmul.f32 %v2310, %v805
        %v2353 = vmul.f32 %v2306, %v806
        %v2354 = vmul.f32 %v2310, %v807
        %v2355 = vmul.f32 %v2306, %v808
        %v2356 = vmul.f32 %v2310, %v809
        %v2357 = vmul.f32 %v2306, %v877
        %v2358 = vmul.f32 %v2310, %v878
        %v2359 = vmul.f32 %v2306, %v879
        %v2360 = vmul.f32 %v2310, %v880
        %v2361 = vmul.f32 %v2306, %v2300
        %v2362 = vmul.f32 %v2310, %v2301
        %v2413 = vrot.slane %v2313, 6
        %v2414 = vrot.slane %v2314, 6
        %v2415 = vrot.slane %v2315, 6
        %v2416 = vsel %vm998, %v2413, %v2415
        %v2417 = vrot.slane %v2316, 6
        %v2418 = vsel %vm998, %v2414, %v2417
        %v2419 = vrot.slane %v2317, 6
        %v2420 = vsel %vm998, %v2415, %v2419
        %v2421 = vrot.slane %v2318, 6
        %v2422 = vsel %vm998, %v2417, %v2421
        %v2423 = vrot.slane %v2319, 6
        %v2424 = vsel %vm998, %v2419, %v2423
        %v2425 = vrot.slane %v2320, 6
        %v2426 = vsel %vm998, %v2421, %v2425
        %v2427 = vrot.slane %v2321, 6
        %v2428 = vsel %vm998, %v2423, %v2427
        %v2429 = vrot.slane %v2322, 6
        %v2430 = vsel %vm998, %v2425, %v2429
        %v2431 = vrot.slane %v2323, 6
        %v2432 = vsel %vm998, %v2427, %v2431
        %v2433 = vrot.slane %v2324, 6
        %v2434 = vsel %vm998, %v2429, %v2433
        %v2435 = vrot.slane %v2325, 6
        %v2436 = vsel %vm998, %v2431, %v2435
        %v2437 = vrot.slane %v2326, 6
        %v2438 = vsel %vm998, %v2433, %v2437
        %v2439 = vrot.slane %v2327, 6
        %v2440 = vsel %vm998, %v2435, %v2439
        %v2441 = vrot.slane %v2328, 6
        %v2442 = vsel %vm998, %v2437, %v2441
        %v2443 = vrot.slane %v2329, 6
        %v2444 = vsel %vm998, %v2439, %v2443
        %v2445 = vrot.slane %v2330, 6
        %v2446 = vsel %vm998, %v2441, %v2445
        %v2447 = vrot.slane %v2331, 6
        %v2448 = vsel %vm998, %v2443, %v2447
        %v2449 = vrot.slane %v2332, 6
        %v2450 = vsel %vm998, %v2445, %v2449
        %v2451 = vrot.slane %v2333, 6
        %v2452 = vsel %vm998, %v2447, %v2451
        %v2453 = vrot.slane %v2334, 6
        %v2454 = vsel %vm998, %v2449, %v2453
        %v2455 = vrot.slane %v2335, 6
        %v2456 = vsel %vm998, %v2451, %v2455
        %v2457 = vrot.slane %v2336, 6
        %v2458 = vsel %vm998, %v2453, %v2457
        %v2459 = vrot.slane %v2337, 6
        %v2460 = vsel %vm998, %v2455, %v2459
        %v2461 = vrot.slane %v2338, 6
        %v2462 = vsel %vm998, %v2457, %v2461
        %v2463 = vrot.slane %v2339, 6
        %v2464 = vsel %vm998, %v2459, %v2463
        %v2465 = vrot.slane %v2340, 6
        %v2466 = vsel %vm998, %v2461, %v2465
        %v2467 = vrot.slane %v2341, 6
        %v2468 = vsel %vm998, %v2463, %v2467
        %v2469 = vrot.slane %v2342, 6
        %v2470 = vsel %vm998, %v2465, %v2469
        %v2471 = vrot.slane %v2343, 6
        %v2472 = vsel %vm998, %v2467, %v2471
        %v2473 = vrot.slane %v2344, 6
        %v2474 = vsel %vm998, %v2469, %v2473
        %v2475 = vrot.slane %v2345, 6
        %v2476 = vsel %vm998, %v2471, %v2475
        %v2477 = vrot.slane %v2346, 6
        %v2478 = vsel %vm998, %v2473, %v2477
        %v2479 = vrot.slane %v2347, 6
        %v2480 = vsel %vm998, %v2475, %v2479
        %v2481 = vrot.slane %v2348, 6
        %v2482 = vsel %vm998, %v2477, %v2481
        %v2483 = vrot.slane %v2349, 6
        %v2484 = vsel %vm998, %v2479, %v2483
        %v2485 = vrot.slane %v2350, 6
        %v2486 = vsel %vm998, %v2481, %v2485
        %v2487 = vrot.slane %v2351, 6
        %v2488 = vsel %vm998, %v2483, %v2487
        %v2489 = vrot.slane %v2352, 6
        %v2490 = vsel %vm998, %v2485, %v2489
        %v2491 = vrot.slane %v2353, 6
        %v2492 = vsel %vm998, %v2487, %v2491
        %v2493 = vrot.slane %v2354, 6
        %v2494 = vsel %vm998, %v2489, %v2493
        %v2495 = vrot.slane %v2355, 6
        %v2496 = vsel %vm998, %v2491, %v2495
        %v2497 = vrot.slane %v2356, 6
        %v2498 = vsel %vm998, %v2493, %v2497
        %v2499 = vrot.slane %v2357, 6
        %v2500 = vsel %vm998, %v2495, %v2499
        %v2501 = vrot.slane %v2358, 6
        %v2502 = vsel %vm998, %v2497, %v2501
        %v2503 = vrot.slane %v2359, 6
        %v2504 = vsel %vm998, %v2499, %v2503
        %v2505 = vrot.slane %v2360, 6
        %v2506 = vsel %vm998, %v2501, %v2505
        %v2507 = vrot.slane %v2361, 6
        %v2508 = vsel %vm998, %v2503, %v2507
        %v2509 = vrot.slane %v2362, 6
        %v2510 = vsel %vm998, %v2505, %v2509
        %v2561 = vadd.f32 %v2248, %v2413
        %v2562 = vadd.f32 %v2249, %v2414
        %v2563 = vadd.f32 %v2250, %v2416
        %v2564 = vadd.f32 %v2251, %v2418
        %v2565 = vadd.f32 %v2252, %v2420
        %v2566 = vadd.f32 %v2253, %v2422
        %v2567 = vadd.f32 %v2254, %v2424
        %v2568 = vadd.f32 %v2255, %v2426
        %v2569 = vadd.f32 %v2256, %v2428
        %v2570 = vadd.f32 %v2257, %v2430
        %v2571 = vadd.f32 %v2258, %v2432
        %v2572 = vadd.f32 %v2259, %v2434
        %v2573 = vadd.f32 %v2260, %v2436
        %v2574 = vadd.f32 %v2261, %v2438
        %v2575 = vadd.f32 %v2262, %v2440
        %v2576 = vadd.f32 %v2263, %v2442
        %v2577 = vadd.f32 %v2264, %v2444
        %v2578 = vadd.f32 %v2265, %v2446
        %v2579 = vadd.f32 %v2266, %v2448
        %v2580 = vadd.f32 %v2267, %v2450
        %v2581 = vadd.f32 %v2268, %v2452
        %v2582 = vadd.f32 %v2269, %v2454
        %v2583 = vadd.f32 %v2270, %v2456
        %v2584 = vadd.f32 %v2271, %v2458
        %v2585 = vadd.f32 %v2272, %v2460
        %v2586 = vadd.f32 %v2273, %v2462
        %v2587 = vadd.f32 %v2274, %v2464
        %v2588 = vadd.f32 %v2275, %v2466
        %v2589 = vadd.f32 %v2276, %v2468
        %v2590 = vadd.f32 %v2277, %v2470
        %v2591 = vadd.f32 %v2278, %v2472
        %v2592 = vadd.f32 %v2279, %v2474
        %v2593 = vadd.f32 %v2280, %v2476
        %v2594 = vadd.f32 %v2281, %v2478
        %v2595 = vadd.f32 %v2282, %v2480
        %v2596 = vadd.f32 %v2283, %v2482
        %v2597 = vadd.f32 %v2284, %v2484
        %v2598 = vadd.f32 %v2285, %v2486
        %v2599 = vadd.f32 %v2286, %v2488
        %v2600 = vadd.f32 %v2287, %v2490
        %v2601 = vadd.f32 %v2288, %v2492
        %v2602 = vadd.f32 %v2289, %v2494
        %v2603 = vadd.f32 %v2290, %v2496
        %v2604 = vadd.f32 %v2291, %v2498
        %v2605 = vadd.f32 %v2292, %v2500
        %v2606 = vadd.f32 %v2293, %v2502
        %v2607 = vadd.f32 %v2294, %v2504
        %v2608 = vadd.f32 %v2295, %v2506
        %v2609 = vadd.f32 %v2296, %v2508
        %v2610 = vadd.f32 %v2297, %v2510
        %s2611 = scalar_lea.vmem %s360, 16
        %v2612 = vld [vmem:[%s2611] ss:$8 sm:$0x3]
        %v2613 = vld [vmem:[#allocation2 + $0x30] sm:$0xc0]
        %v2614 = vld [vmem:[#allocation2 + $0x38] sm:$0xc0]
        %v2615 = vld [vmem:[#allocation2 + $0x1c0] sm:$0x3]
        %v2616 = vld [vmem:[#allocation2 + $0x1c8] sm:$0x3]
        %v2618 = vlaneseq
        %v2619 = vshrl.u32 %v2618, 7
        %v2620 = vsub.s32 0, %v2619
        %v2621 = vrot.slane %v2612, %v2620
        %v2622 = vlaneseq
        %v2623 = vshrl.u32 %v2622, 7
        %v2624 = vsub.s32 1, %v2623
        %v2625 = vrot.slane %v2612, %v2624
        %v2628 = vmul.f32 %v2621, %v2613
        %v2629 = vmul.f32 %v2625, %v2614
        %v2630 = vmul.f32 %v2621, %v770
        %v2631 = vmul.f32 %v2625, %v771
        %v2632 = vmul.f32 %v2621, %v772
        %v2633 = vmul.f32 %v2625, %v773
        %v2634 = vmul.f32 %v2621, %v774
        %v2635 = vmul.f32 %v2625, %v775
        %v2636 = vmul.f32 %v2621, %v776
        %v2637 = vmul.f32 %v2625, %v777
        %v2638 = vmul.f32 %v2621, %v778
        %v2639 = vmul.f32 %v2625, %v779
        %v2640 = vmul.f32 %v2621, %v780
        %v2641 = vmul.f32 %v2625, %v781
        %v2642 = vmul.f32 %v2621, %v782
        %v2643 = vmul.f32 %v2625, %v783
        %v2644 = vmul.f32 %v2621, %v784
        %v2645 = vmul.f32 %v2625, %v785
        %v2646 = vmul.f32 %v2621, %v786
        %v2647 = vmul.f32 %v2625, %v787
        %v2648 = vmul.f32 %v2621, %v788
        %v2649 = vmul.f32 %v2625, %v789
        %v2650 = vmul.f32 %v2621, %v790
        %v2651 = vmul.f32 %v2625, %v791
        %v2652 = vmul.f32 %v2621, %v792
        %v2653 = vmul.f32 %v2625, %v793
        %v2654 = vmul.f32 %v2621, %v794
        %v2655 = vmul.f32 %v2625, %v795
        %v2656 = vmul.f32 %v2621, %v796
        %v2657 = vmul.f32 %v2625, %v797
        %v2658 = vmul.f32 %v2621, %v798
        %v2659 = vmul.f32 %v2625, %v799
        %v2660 = vmul.f32 %v2621, %v800
        %v2661 = vmul.f32 %v2625, %v801
        %v2662 = vmul.f32 %v2621, %v802
        %v2663 = vmul.f32 %v2625, %v803
        %v2664 = vmul.f32 %v2621, %v804
        %v2665 = vmul.f32 %v2625, %v805
        %v2666 = vmul.f32 %v2621, %v806
        %v2667 = vmul.f32 %v2625, %v807
        %v2668 = vmul.f32 %v2621, %v808
        %v2669 = vmul.f32 %v2625, %v809
        %v2670 = vmul.f32 %v2621, %v877
        %v2671 = vmul.f32 %v2625, %v878
        %v2672 = vmul.f32 %v2621, %v879
        %v2673 = vmul.f32 %v2625, %v880
        %v2674 = vmul.f32 %v2621, %v1205
        %v2675 = vmul.f32 %v2625, %v1206
        %v2676 = vmul.f32 %v2621, %v1207
        %v2677 = vmul.f32 %v2625, %v1208
        %v2678 = vmul.f32 %v2621, %v2615
        %v2679 = vmul.f32 %v2625, %v2616
        %v2732 = vrot.slane %v2628, 4
        %v2733 = vrot.slane %v2630, 4
        %v2734 = vsel %vm1326, %v2732, %v2733
        %v2735 = vrot.slane %v2629, 4
        %v2736 = vrot.slane %v2631, 4
        %v2737 = vsel %vm1326, %v2735, %v2736
        %v2738 = vrot.slane %v2632, 4
        %v2739 = vsel %vm1326, %v2733, %v2738
        %v2740 = vrot.slane %v2633, 4
        %v2741 = vsel %vm1326, %v2736, %v2740
        %v2742 = vrot.slane %v2634, 4
        %v2743 = vsel %vm1326, %v2738, %v2742
        %v2744 = vrot.slane %v2635, 4
        %v2745 = vsel %vm1326, %v2740, %v2744
        %v2746 = vrot.slane %v2636, 4
        %v2747 = vsel %vm1326, %v2742, %v2746
        %v2748 = vrot.slane %v2637, 4
        %v2749 = vsel %vm1326, %v2744, %v2748
        %v2750 = vrot.slane %v2638, 4
        %v2751 = vsel %vm1326, %v2746, %v2750
        %v2752 = vrot.slane %v2639, 4
        %v2753 = vsel %vm1326, %v2748, %v2752
        %v2754 = vrot.slane %v2640, 4
        %v2755 = vsel %vm1326, %v2750, %v2754
        %v2756 = vrot.slane %v2641, 4
        %v2757 = vsel %vm1326, %v2752, %v2756
        %v2758 = vrot.slane %v2642, 4
        %v2759 = vsel %vm1326, %v2754, %v2758
        %v2760 = vrot.slane %v2643, 4
        %v2761 = vsel %vm1326, %v2756, %v2760
        %v2762 = vrot.slane %v2644, 4
        %v2763 = vsel %vm1326, %v2758, %v2762
        %v2764 = vrot.slane %v2645, 4
        %v2765 = vsel %vm1326, %v2760, %v2764
        %v2766 = vrot.slane %v2646, 4
        %v2767 = vsel %vm1326, %v2762, %v2766
        %v2768 = vrot.slane %v2647, 4
        %v2769 = vsel %vm1326, %v2764, %v2768
        %v2770 = vrot.slane %v2648, 4
        %v2771 = vsel %vm1326, %v2766, %v2770
        %v2772 = vrot.slane %v2649, 4
        %v2773 = vsel %vm1326, %v2768, %v2772
        %v2774 = vrot.slane %v2650, 4
        %v2775 = vsel %vm1326, %v2770, %v2774
        %v2776 = vrot.slane %v2651, 4
        %v2777 = vsel %vm1326, %v2772, %v2776
        %v2778 = vrot.slane %v2652, 4
        %v2779 = vsel %vm1326, %v2774, %v2778
        %v2780 = vrot.slane %v2653, 4
        %v2781 = vsel %vm1326, %v2776, %v2780
        %v2782 = vrot.slane %v2654, 4
        %v2783 = vsel %vm1326, %v2778, %v2782
        %v2784 = vrot.slane %v2655, 4
        %v2785 = vsel %vm1326, %v2780, %v2784
        %v2786 = vrot.slane %v2656, 4
        %v2787 = vsel %vm1326, %v2782, %v2786
        %v2788 = vrot.slane %v2657, 4
        %v2789 = vsel %vm1326, %v2784, %v2788
        %v2790 = vrot.slane %v2658, 4
        %v2791 = vsel %vm1326, %v2786, %v2790
        %v2792 = vrot.slane %v2659, 4
        %v2793 = vsel %vm1326, %v2788, %v2792
        %v2794 = vrot.slane %v2660, 4
        %v2795 = vsel %vm1326, %v2790, %v2794
        %v2796 = vrot.slane %v2661, 4
        %v2797 = vsel %vm1326, %v2792, %v2796
        %v2798 = vrot.slane %v2662, 4
        %v2799 = vsel %vm1326, %v2794, %v2798
        %v2800 = vrot.slane %v2663, 4
        %v2801 = vsel %vm1326, %v2796, %v2800
        %v2802 = vrot.slane %v2664, 4
        %v2803 = vsel %vm1326, %v2798, %v2802
        %v2804 = vrot.slane %v2665, 4
        %v2805 = vsel %vm1326, %v2800, %v2804
        %v2806 = vrot.slane %v2666, 4
        %v2807 = vsel %vm1326, %v2802, %v2806
        %v2808 = vrot.slane %v2667, 4
        %v2809 = vsel %vm1326, %v2804, %v2808
        %v2810 = vrot.slane %v2668, 4
        %v2811 = vsel %vm1326, %v2806, %v2810
        %v2812 = vrot.slane %v2669, 4
        %v2813 = vsel %vm1326, %v2808, %v2812
        %v2814 = vrot.slane %v2670, 4
        %v2815 = vsel %vm1326, %v2810, %v2814
        %v2816 = vrot.slane %v2671, 4
        %v2817 = vsel %vm1326, %v2812, %v2816
        %v2818 = vrot.slane %v2672, 4
        %v2819 = vsel %vm1326, %v2814, %v2818
        %v2820 = vrot.slane %v2673, 4
        %v2821 = vsel %vm1326, %v2816, %v2820
        %v2822 = vrot.slane %v2674, 4
        %v2823 = vsel %vm1326, %v2818, %v2822
        %v2824 = vrot.slane %v2675, 4
        %v2825 = vsel %vm1326, %v2820, %v2824
        %v2826 = vrot.slane %v2676, 4
        %v2827 = vsel %vm1326, %v2822, %v2826
        %v2828 = vrot.slane %v2677, 4
        %v2829 = vsel %vm1326, %v2824, %v2828
        %v2830 = vrot.slane %v2678, 4
        %v2831 = vsel %vm1326, %v2826, %v2830
        %v2832 = vrot.slane %v2679, 4
        %v2833 = vsel %vm1326, %v2828, %v2832
        %v2884 = vadd.f32 %v2561, %v2734
        %v2885 = vadd.f32 %v2562, %v2737
        %v2886 = vadd.f32 %v2563, %v2739
        %v2887 = vadd.f32 %v2564, %v2741
        %v2888 = vadd.f32 %v2565, %v2743
        %v2889 = vadd.f32 %v2566, %v2745
        %v2890 = vadd.f32 %v2567, %v2747
        %v2891 = vadd.f32 %v2568, %v2749
        %v2892 = vadd.f32 %v2569, %v2751
        %v2893 = vadd.f32 %v2570, %v2753
        %v2894 = vadd.f32 %v2571, %v2755
        %v2895 = vadd.f32 %v2572, %v2757
        %v2896 = vadd.f32 %v2573, %v2759
        %v2897 = vadd.f32 %v2574, %v2761
        %v2898 = vadd.f32 %v2575, %v2763
        %v2899 = vadd.f32 %v2576, %v2765
        %v2900 = vadd.f32 %v2577, %v2767
        %v2901 = vadd.f32 %v2578, %v2769
        %v2902 = vadd.f32 %v2579, %v2771
        %v2903 = vadd.f32 %v2580, %v2773
        %v2904 = vadd.f32 %v2581, %v2775
        %v2905 = vadd.f32 %v2582, %v2777
        %v2906 = vadd.f32 %v2583, %v2779
        %v2907 = vadd.f32 %v2584, %v2781
        %v2908 = vadd.f32 %v2585, %v2783
        %v2909 = vadd.f32 %v2586, %v2785
        %v2910 = vadd.f32 %v2587, %v2787
        %v2911 = vadd.f32 %v2588, %v2789
        %v2912 = vadd.f32 %v2589, %v2791
        %v2913 = vadd.f32 %v2590, %v2793
        %v2914 = vadd.f32 %v2591, %v2795
        %v2915 = vadd.f32 %v2592, %v2797
        %v2916 = vadd.f32 %v2593, %v2799
        %v2917 = vadd.f32 %v2594, %v2801
        %v2918 = vadd.f32 %v2595, %v2803
        %v2919 = vadd.f32 %v2596, %v2805
        %v2920 = vadd.f32 %v2597, %v2807
        %v2921 = vadd.f32 %v2598, %v2809
        %v2922 = vadd.f32 %v2599, %v2811
        %v2923 = vadd.f32 %v2600, %v2813
        %v2924 = vadd.f32 %v2601, %v2815
        %v2925 = vadd.f32 %v2602, %v2817
        %v2926 = vadd.f32 %v2603, %v2819
        %v2927 = vadd.f32 %v2604, %v2821
        %v2928 = vadd.f32 %v2605, %v2823
        %v2929 = vadd.f32 %v2606, %v2825
        %v2930 = vadd.f32 %v2607, %v2827
        %v2931 = vadd.f32 %v2608, %v2829
        %v2932 = vadd.f32 %v2609, %v2831
        %v2933 = vadd.f32 %v2610, %v2833
        %v2934 = vld [vmem:[%s4] sm:$0xff]
        %v2935 = vld [vmem:[%s4 + $0x8] sm:$0xff]
        %v2936 = vld [vmem:[%s4 + $0x10] sm:$0xff]
        %v2937 = vld [vmem:[%s4 + $0x18] sm:$0xff]
        %v2938 = vld [vmem:[%s4 + $0x20] sm:$0xff]
        %v2939 = vld [vmem:[%s4 + $0x28] sm:$0xff]
        %v2940 = vld [vmem:[%s4 + $0x30] sm:$0xff]
        %v2941 = vld [vmem:[%s4 + $0x38] sm:$0xff]
        %v2942 = vld [vmem:[%s4 + $0x40] sm:$0xff]
        %v2943 = vld [vmem:[%s4 + $0x48] sm:$0xff]
        %v2944 = vld [vmem:[%s4 + $0x50] sm:$0xff]
        %v2945 = vld [vmem:[%s4 + $0x58] sm:$0xff]
        %v2946 = vld [vmem:[%s4 + $0x60] sm:$0xff]
        %v2947 = vld [vmem:[%s4 + $0x68] sm:$0xff]
        %v2948 = vld [vmem:[%s4 + $0x70] sm:$0xff]
        %v2949 = vld [vmem:[%s4 + $0x78] sm:$0xff]
        %v2950 = vld [vmem:[%s4 + $0x80] sm:$0xff]
        %v2951 = vld [vmem:[%s4 + $0x88] sm:$0xff]
        %v2952 = vld [vmem:[%s4 + $0x90] sm:$0xff]
        %v2953 = vld [vmem:[%s4 + $0x98] sm:$0xff]
        %v2954 = vld [vmem:[%s4 + $0xa0] sm:$0xff]
        %v2955 = vld [vmem:[%s4 + $0xa8] sm:$0xff]
        %v2956 = vld [vmem:[%s4 + $0xb0] sm:$0xff]
        %v2957 = vld [vmem:[%s4 + $0xb8] sm:$0xff]
        %v2958 = vld [vmem:[%s4 + $0xc0] sm:$0xf]
        %2960 = vset.pattern.permute.xlu0 0
        %2961 = vperm.xlu0 %2960, %v2934
        %v2962 = vpop.permute.xlu0 %2961
        %2965 = vset.pattern.permute.xlu0 0
        %2966 = vperm.xlu0 %2965, %v2935
        %v2967 = vpop.permute.xlu0 %2966
        %2970 = vset.pattern.permute.xlu0 0
        %2971 = vperm.xlu0 %2970, %v2936
        %v2972 = vpop.permute.xlu0 %2971
        %2975 = vset.pattern.permute.xlu0 0
        %2976 = vperm.xlu0 %2975, %v2937
        %v2977 = vpop.permute.xlu0 %2976
        %2980 = vset.pattern.permute.xlu0 0
        %2981 = vperm.xlu0 %2980, %v2938
        %v2982 = vpop.permute.xlu0 %2981
        %2985 = vset.pattern.permute.xlu0 0
        %2986 = vperm.xlu0 %2985, %v2939
        %v2987 = vpop.permute.xlu0 %2986
        %2990 = vset.pattern.permute.xlu0 0
        %2991 = vperm.xlu0 %2990, %v2940
        %v2992 = vpop.permute.xlu0 %2991
        %2995 = vset.pattern.permute.xlu0 0
        %2996 = vperm.xlu0 %2995, %v2941
        %v2997 = vpop.permute.xlu0 %2996
        %3000 = vset.pattern.permute.xlu0 0
        %3001 = vperm.xlu0 %3000, %v2942
        %v3002 = vpop.permute.xlu0 %3001
        %3005 = vset.pattern.permute.xlu0 0
        %3006 = vperm.xlu0 %3005, %v2943
        %v3007 = vpop.permute.xlu0 %3006
        %3010 = vset.pattern.permute.xlu0 0
        %3011 = vperm.xlu0 %3010, %v2944
        %v3012 = vpop.permute.xlu0 %3011
        %3015 = vset.pattern.permute.xlu0 0
        %3016 = vperm.xlu0 %3015, %v2945
        %v3017 = vpop.permute.xlu0 %3016
        %3020 = vset.pattern.permute.xlu0 0
        %3021 = vperm.xlu0 %3020, %v2946
        %v3022 = vpop.permute.xlu0 %3021
        %3025 = vset.pattern.permute.xlu0 0
        %3026 = vperm.xlu0 %3025, %v2947
        %v3027 = vpop.permute.xlu0 %3026
        %3030 = vset.pattern.permute.xlu0 0
        %3031 = vperm.xlu0 %3030, %v2948
        %v3032 = vpop.permute.xlu0 %3031
        %3035 = vset.pattern.permute.xlu0 0
        %3036 = vperm.xlu0 %3035, %v2949
        %v3037 = vpop.permute.xlu0 %3036
        %3040 = vset.pattern.permute.xlu0 0
        %3041 = vperm.xlu0 %3040, %v2950
        %v3042 = vpop.permute.xlu0 %3041
        %3045 = vset.pattern.permute.xlu0 0
        %3046 = vperm.xlu0 %3045, %v2951
        %v3047 = vpop.permute.xlu0 %3046
        %3050 = vset.pattern.permute.xlu0 0
        %3051 = vperm.xlu0 %3050, %v2952
        %v3052 = vpop.permute.xlu0 %3051
        %3055 = vset.pattern.permute.xlu0 0
        %3056 = vperm.xlu0 %3055, %v2953
        %v3057 = vpop.permute.xlu0 %3056
        %3060 = vset.pattern.permute.xlu0 0
        %3061 = vperm.xlu0 %3060, %v2954
        %v3062 = vpop.permute.xlu0 %3061
        %3065 = vset.pattern.permute.xlu0 0
        %3066 = vperm.xlu0 %3065, %v2955
        %v3067 = vpop.permute.xlu0 %3066
        %3070 = vset.pattern.permute.xlu0 0
        %3071 = vperm.xlu0 %3070, %v2956
        %v3072 = vpop.permute.xlu0 %3071
        %3075 = vset.pattern.permute.xlu0 0
        %3076 = vperm.xlu0 %3075, %v2957
        %v3077 = vpop.permute.xlu0 %3076
        %3080 = vset.pattern.permute.xlu0 0
        %3081 = vperm.xlu0 %3080, %v2958
        %v3082 = vpop.permute.xlu0 %3081
        %v3084 = vmul.f32 %v2962, %v2181
        %v3085 = vmul.f32 %v2962, %v2182
        %v3086 = vmul.f32 %v2967, %v2183
        %v3087 = vmul.f32 %v2967, %v2184
        %v3088 = vmul.f32 %v2972, %v2185
        %v3089 = vmul.f32 %v2972, %v2186
        %v3090 = vmul.f32 %v2977, %v2187
        %v3091 = vmul.f32 %v2977, %v2188
        %v3092 = vmul.f32 %v2982, %v2189
        %v3093 = vmul.f32 %v2982, %v2190
        %v3094 = vmul.f32 %v2987, %v2191
        %v3095 = vmul.f32 %v2987, %v2192
        %v3096 = vmul.f32 %v2992, %v2193
        %v3097 = vmul.f32 %v2992, %v2194
        %v3098 = vmul.f32 %v2997, %v2195
        %v3099 = vmul.f32 %v2997, %v2196
        %v3100 = vmul.f32 %v3002, %v2197
        %v3101 = vmul.f32 %v3002, %v2198
        %v3102 = vmul.f32 %v3007, %v2199
        %v3103 = vmul.f32 %v3007, %v2200
        %v3104 = vmul.f32 %v3012, %v2201
        %v3105 = vmul.f32 %v3012, %v2202
        %v3106 = vmul.f32 %v3017, %v2203
        %v3107 = vmul.f32 %v3017, %v2204
        %v3108 = vmul.f32 %v3022, %v2205
        %v3109 = vmul.f32 %v3022, %v2206
        %v3110 = vmul.f32 %v3027, %v2207
        %v3111 = vmul.f32 %v3027, %v2208
        %v3112 = vmul.f32 %v3032, %v2209
        %v3113 = vmul.f32 %v3032, %v2210
        %v3114 = vmul.f32 %v3037, %v2211
        %v3115 = vmul.f32 %v3037, %v2212
        %v3116 = vmul.f32 %v3042, %v2213
        %v3117 = vmul.f32 %v3042, %v2214
        %v3118 = vmul.f32 %v3047, %v2215
        %v3119 = vmul.f32 %v3047, %v2216
        %v3120 = vmul.f32 %v3052, %v2217
        %v3121 = vmul.f32 %v3052, %v2218
        %v3122 = vmul.f32 %v3057, %v2219
        %v3123 = vmul.f32 %v3057, %v2220
        %v3124 = vmul.f32 %v3062, %v2221
        %v3125 = vmul.f32 %v3062, %v2222
        %v3126 = vmul.f32 %v3067, %v2223
        %v3127 = vmul.f32 %v3067, %v2224
        %v3128 = vmul.f32 %v3072, %v2225
        %v3129 = vmul.f32 %v3072, %v2226
        %v3130 = vmul.f32 %v3077, %v2227
        %v3131 = vmul.f32 %v3077, %v2228
        %v3132 = vmul.f32 %v3082, %v2229
        %v3133 = vmul.f32 %v3082, %v2230
        %vm3184 = vcmask 1040384
        %v3185 = vrot.slane %v3084, 7
        %v3186 = vrot.slane %v3085, 7
        %v3187 = vrot.slane %v3086, 7
        %v3188 = vsel %vm3184, %v3185, %v3187
        %v3189 = vrot.slane %v3087, 7
        %v3190 = vsel %vm3184, %v3186, %v3189
        %v3191 = vrot.slane %v3088, 7
        %v3192 = vsel %vm3184, %v3187, %v3191
        %v3193 = vrot.slane %v3089, 7
        %v3194 = vsel %vm3184, %v3189, %v3193
        %v3195 = vrot.slane %v3090, 7
        %v3196 = vsel %vm3184, %v3191, %v3195
        %v3197 = vrot.slane %v3091, 7
        %v3198 = vsel %vm3184, %v3193, %v3197
        %v3199 = vrot.slane %v3092, 7
        %v3200 = vsel %vm3184, %v3195, %v3199
        %v3201 = vrot.slane %v3093, 7
        %v3202 = vsel %vm3184, %v3197, %v3201
        %v3203 = vrot.slane %v3094, 7
        %v3204 = vsel %vm3184, %v3199, %v3203
        %v3205 = vrot.slane %v3095, 7
        %v3206 = vsel %vm3184, %v3201, %v3205
        %v3207 = vrot.slane %v3096, 7
        %v3208 = vsel %vm3184, %v3203, %v3207
        %v3209 = vrot.slane %v3097, 7
        %v3210 = vsel %vm3184, %v3205, %v3209
        %v3211 = vrot.slane %v3098, 7
        %v3212 = vsel %vm3184, %v3207, %v3211
        %v3213 = vrot.slane %v3099, 7
        %v3214 = vsel %vm3184, %v3209, %v3213
        %v3215 = vrot.slane %v3100, 7
        %v3216 = vsel %vm3184, %v3211, %v3215
        %v3217 = vrot.slane %v3101, 7
        %v3218 = vsel %vm3184, %v3213, %v3217
        %v3219 = vrot.slane %v3102, 7
        %v3220 = vsel %vm3184, %v3215, %v3219
        %v3221 = vrot.slane %v3103, 7
        %v3222 = vsel %vm3184, %v3217, %v3221
        %v3223 = vrot.slane %v3104, 7
        %v3224 = vsel %vm3184, %v3219, %v3223
        %v3225 = vrot.slane %v3105, 7
        %v3226 = vsel %vm3184, %v3221, %v3225
        %v3227 = vrot.slane %v3106, 7
        %v3228 = vsel %vm3184, %v3223, %v3227
        %v3229 = vrot.slane %v3107, 7
        %v3230 = vsel %vm3184, %v3225, %v3229
        %v3231 = vrot.slane %v3108, 7
        %v3232 = vsel %vm3184, %v3227, %v3231
        %v3233 = vrot.slane %v3109, 7
        %v3234 = vsel %vm3184, %v3229, %v3233
        %v3235 = vrot.slane %v3110, 7
        %v3236 = vsel %vm3184, %v3231, %v3235
        %v3237 = vrot.slane %v3111, 7
        %v3238 = vsel %vm3184, %v3233, %v3237
        %v3239 = vrot.slane %v3112, 7
        %v3240 = vsel %vm3184, %v3235, %v3239
        %v3241 = vrot.slane %v3113, 7
        %v3242 = vsel %vm3184, %v3237, %v3241
        %v3243 = vrot.slane %v3114, 7
        %v3244 = vsel %vm3184, %v3239, %v3243
        %v3245 = vrot.slane %v3115, 7
        %v3246 = vsel %vm3184, %v3241, %v3245
        %v3247 = vrot.slane %v3116, 7
        %v3248 = vsel %vm3184, %v3243, %v3247
        %v3249 = vrot.slane %v3117, 7
        %v3250 = vsel %vm3184, %v3245, %v3249
        %v3251 = vrot.slane %v3118, 7
        %v3252 = vsel %vm3184, %v3247, %v3251
        %v3253 = vrot.slane %v3119, 7
        %v3254 = vsel %vm3184, %v3249, %v3253
        %v3255 = vrot.slane %v3120, 7
        %v3256 = vsel %vm3184, %v3251, %v3255
        %v3257 = vrot.slane %v3121, 7
        %v3258 = vsel %vm3184, %v3253, %v3257
        %v3259 = vrot.slane %v3122, 7
        %v3260 = vsel %vm3184, %v3255, %v3259
        %v3261 = vrot.slane %v3123, 7
        %v3262 = vsel %vm3184, %v3257, %v3261
        %v3263 = vrot.slane %v3124, 7
        %v3264 = vsel %vm3184, %v3259, %v3263
        %v3265 = vrot.slane %v3125, 7
        %v3266 = vsel %vm3184, %v3261, %v3265
        %v3267 = vrot.slane %v3126, 7
        %v3268 = vsel %vm3184, %v3263, %v3267
        %v3269 = vrot.slane %v3127, 7
        %v3270 = vsel %vm3184, %v3265, %v3269
        %v3271 = vrot.slane %v3128, 7
        %v3272 = vsel %vm3184, %v3267, %v3271
        %v3273 = vrot.slane %v3129, 7
        %v3274 = vsel %vm3184, %v3269, %v3273
        %v3275 = vrot.slane %v3130, 7
        %v3276 = vsel %vm3184, %v3271, %v3275
        %v3277 = vrot.slane %v3131, 7
        %v3278 = vsel %vm3184, %v3273, %v3277
        %v3279 = vrot.slane %v3132, 7
        %v3280 = vsel %vm3184, %v3275, %v3279
        %v3281 = vrot.slane %v3133, 7
        %v3282 = vsel %vm3184, %v3277, %v3281
        %v3333 = vadd.f32 %v1479, %v3185
        %v3334 = vadd.f32 %v1480, %v3186
        %v3335 = vadd.f32 %v1481, %v3188
        %v3336 = vadd.f32 %v1482, %v3190
        %v3337 = vadd.f32 %v1483, %v3192
        %v3338 = vadd.f32 %v1484, %v3194
        %v3339 = vadd.f32 %v1485, %v3196
        %v3340 = vadd.f32 %v1486, %v3198
        %v3341 = vadd.f32 %v1487, %v3200
        %v3342 = vadd.f32 %v1488, %v3202
        %v3343 = vadd.f32 %v1489, %v3204
        %v3344 = vadd.f32 %v1490, %v3206
        %v3345 = vadd.f32 %v1491, %v3208
        %v3346 = vadd.f32 %v1492, %v3210
        %v3347 = vadd.f32 %v1493, %v3212
        %v3348 = vadd.f32 %v1494, %v3214
        %v3349 = vadd.f32 %v1495, %v3216
        %v3350 = vadd.f32 %v1496, %v3218
        %v3351 = vadd.f32 %v1497, %v3220
        %v3352 = vadd.f32 %v1498, %v3222
        %v3353 = vadd.f32 %v1499, %v3224
        %v3354 = vadd.f32 %v1500, %v3226
        %v3355 = vadd.f32 %v1501, %v3228
        %v3356 = vadd.f32 %v1502, %v3230
        %v3357 = vadd.f32 %v1503, %v3232
        %v3358 = vadd.f32 %v1504, %v3234
        %v3359 = vadd.f32 %v1505, %v3236
        %v3360 = vadd.f32 %v1506, %v3238
        %v3361 = vadd.f32 %v1507, %v3240
        %v3362 = vadd.f32 %v1508, %v3242
        %v3363 = vadd.f32 %v1509, %v3244
        %v3364 = vadd.f32 %v1510, %v3246
        %v3365 = vadd.f32 %v1511, %v3248
        %v3366 = vadd.f32 %v1512, %v3250
        %v3367 = vadd.f32 %v1513, %v3252
        %v3368 = vadd.f32 %v1514, %v3254
        %v3369 = vadd.f32 %v1515, %v3256
        %v3370 = vadd.f32 %v1516, %v3258
        %v3371 = vadd.f32 %v1517, %v3260
        %v3372 = vadd.f32 %v1518, %v3262
        %v3373 = vadd.f32 %v1519, %v3264
        %v3374 = vadd.f32 %v1520, %v3266
        %v3375 = vadd.f32 %v1521, %v3268
        %v3376 = vadd.f32 %v1522, %v3270
        %v3377 = vadd.f32 %v1523, %v3272
        %v3378 = vadd.f32 %v1524, %v3274
        %v3379 = vadd.f32 %v1525, %v3276
        %v3380 = vadd.f32 %v1526, %v3278
        %v3381 = vadd.f32 %v1527, %v3280
        %v3382 = vadd.f32 %v1528, %v3282
        %v3383 = vld [vmem:[%s5] sm:$0xff]
        %v3384 = vld [vmem:[%s5 + $0x8] sm:$0xff]
        %v3385 = vld [vmem:[%s5 + $0x10] sm:$0xff]
        %v3386 = vld [vmem:[%s5 + $0x18] sm:$0xff]
        %v3387 = vld [vmem:[%s5 + $0x20] sm:$0xff]
        %v3388 = vld [vmem:[%s5 + $0x28] sm:$0xff]
        %v3389 = vld [vmem:[%s5 + $0x30] sm:$0xff]
        %v3390 = vld [vmem:[%s5 + $0x38] sm:$0xff]
        %v3391 = vld [vmem:[%s5 + $0x40] sm:$0xff]
        %v3392 = vld [vmem:[%s5 + $0x48] sm:$0xff]
        %v3393 = vld [vmem:[%s5 + $0x50] sm:$0xff]
        %v3394 = vld [vmem:[%s5 + $0x58] sm:$0xff]
        %v3395 = vld [vmem:[%s5 + $0x60] sm:$0xff]
        %v3396 = vld [vmem:[%s5 + $0x68] sm:$0xff]
        %v3397 = vld [vmem:[%s5 + $0x70] sm:$0xff]
        %v3398 = vld [vmem:[%s5 + $0x78] sm:$0xff]
        %v3399 = vld [vmem:[%s5 + $0x80] sm:$0xff]
        %v3400 = vld [vmem:[%s5 + $0x88] sm:$0xff]
        %v3401 = vld [vmem:[%s5 + $0x90] sm:$0xff]
        %v3402 = vld [vmem:[%s5 + $0x98] sm:$0xff]
        %v3403 = vld [vmem:[%s5 + $0xa0] sm:$0xff]
        %v3404 = vld [vmem:[%s5 + $0xa8] sm:$0xff]
        %v3405 = vld [vmem:[%s5 + $0xb0] sm:$0xff]
        %v3406 = vld [vmem:[%s5 + $0xb8] sm:$0xff]
        %v3407 = vld [vmem:[%s5 + $0xc0] sm:$0xf]
        %3409 = vset.pattern.permute.xlu0 0
        %3410 = vperm.xlu0 %3409, %v3383
        %v3411 = vpop.permute.xlu0 %3410
        %3414 = vset.pattern.permute.xlu0 0
        %3415 = vperm.xlu0 %3414, %v3384
        %v3416 = vpop.permute.xlu0 %3415
        %3419 = vset.pattern.permute.xlu0 0
        %3420 = vperm.xlu0 %3419, %v3385
        %v3421 = vpop.permute.xlu0 %3420
        %3424 = vset.pattern.permute.xlu0 0
        %3425 = vperm.xlu0 %3424, %v3386
        %v3426 = vpop.permute.xlu0 %3425
        %3429 = vset.pattern.permute.xlu0 0
        %3430 = vperm.xlu0 %3429, %v3387
        %v3431 = vpop.permute.xlu0 %3430
        %3434 = vset.pattern.permute.xlu0 0
        %3435 = vperm.xlu0 %3434, %v3388
        %v3436 = vpop.permute.xlu0 %3435
        %3439 = vset.pattern.permute.xlu0 0
        %3440 = vperm.xlu0 %3439, %v3389
        %v3441 = vpop.permute.xlu0 %3440
        %3444 = vset.pattern.permute.xlu0 0
        %3445 = vperm.xlu0 %3444, %v3390
        %v3446 = vpop.permute.xlu0 %3445
        %3449 = vset.pattern.permute.xlu0 0
        %3450 = vperm.xlu0 %3449, %v3391
        %v3451 = vpop.permute.xlu0 %3450
        %3454 = vset.pattern.permute.xlu0 0
        %3455 = vperm.xlu0 %3454, %v3392
        %v3456 = vpop.permute.xlu0 %3455
        %3459 = vset.pattern.permute.xlu0 0
        %3460 = vperm.xlu0 %3459, %v3393
        %v3461 = vpop.permute.xlu0 %3460
        %3464 = vset.pattern.permute.xlu0 0
        %3465 = vperm.xlu0 %3464, %v3394
        %v3466 = vpop.permute.xlu0 %3465
        %3469 = vset.pattern.permute.xlu0 0
        %3470 = vperm.xlu0 %3469, %v3395
        %v3471 = vpop.permute.xlu0 %3470
        %3474 = vset.pattern.permute.xlu0 0
        %3475 = vperm.xlu0 %3474, %v3396
        %v3476 = vpop.permute.xlu0 %3475
        %3479 = vset.pattern.permute.xlu0 0
        %3480 = vperm.xlu0 %3479, %v3397
        %v3481 = vpop.permute.xlu0 %3480
        %3484 = vset.pattern.permute.xlu0 0
        %3485 = vperm.xlu0 %3484, %v3398
        %v3486 = vpop.permute.xlu0 %3485
        %3489 = vset.pattern.permute.xlu0 0
        %3490 = vperm.xlu0 %3489, %v3399
        %v3491 = vpop.permute.xlu0 %3490
        %3494 = vset.pattern.permute.xlu0 0
        %3495 = vperm.xlu0 %3494, %v3400
        %v3496 = vpop.permute.xlu0 %3495
        %3499 = vset.pattern.permute.xlu0 0
        %3500 = vperm.xlu0 %3499, %v3401
        %v3501 = vpop.permute.xlu0 %3500
        %3504 = vset.pattern.permute.xlu0 0
        %3505 = vperm.xlu0 %3504, %v3402
        %v3506 = vpop.permute.xlu0 %3505
        %3509 = vset.pattern.permute.xlu0 0
        %3510 = vperm.xlu0 %3509, %v3403
        %v3511 = vpop.permute.xlu0 %3510
        %3514 = vset.pattern.permute.xlu0 0
        %3515 = vperm.xlu0 %3514, %v3404
        %v3516 = vpop.permute.xlu0 %3515
        %3519 = vset.pattern.permute.xlu0 0
        %3520 = vperm.xlu0 %3519, %v3405
        %v3521 = vpop.permute.xlu0 %3520
        %3524 = vset.pattern.permute.xlu0 0
        %3525 = vperm.xlu0 %3524, %v3406
        %v3526 = vpop.permute.xlu0 %3525
        %3529 = vset.pattern.permute.xlu0 0
        %3530 = vperm.xlu0 %3529, %v3407
        %v3531 = vpop.permute.xlu0 %3530
        %vm3583 = vcmask 1045504
        %v3584 = vrot.slane %v2884, 2
        %v3585 = vrot.slane %v2886, 2
        %v3586 = vsel %vm3583, %v3584, %v3585
        %v3587 = vrot.slane %v2885, 2
        %v3588 = vrot.slane %v2887, 2
        %v3589 = vsel %vm3583, %v3587, %v3588
        %v3590 = vrot.slane %v2888, 2
        %v3591 = vsel %vm3583, %v3585, %v3590
        %v3592 = vrot.slane %v2889, 2
        %v3593 = vsel %vm3583, %v3588, %v3592
        %v3594 = vrot.slane %v2890, 2
        %v3595 = vsel %vm3583, %v3590, %v3594
        %v3596 = vrot.slane %v2891, 2
        %v3597 = vsel %vm3583, %v3592, %v3596
        %v3598 = vrot.slane %v2892, 2
        %v3599 = vsel %vm3583, %v3594, %v3598
        %v3600 = vrot.slane %v2893, 2
        %v3601 = vsel %vm3583, %v3596, %v3600
        %v3602 = vrot.slane %v2894, 2
        %v3603 = vsel %vm3583, %v3598, %v3602
        %v3604 = vrot.slane %v2895, 2
        %v3605 = vsel %vm3583, %v3600, %v3604
        %v3606 = vrot.slane %v2896, 2
        %v3607 = vsel %vm3583, %v3602, %v3606
        %v3608 = vrot.slane %v2897, 2
        %v3609 = vsel %vm3583, %v3604, %v3608
        %v3610 = vrot.slane %v2898, 2
        %v3611 = vsel %vm3583, %v3606, %v3610
        %v3612 = vrot.slane %v2899, 2
        %v3613 = vsel %vm3583, %v3608, %v3612
        %v3614 = vrot.slane %v2900, 2
        %v3615 = vsel %vm3583, %v3610, %v3614
        %v3616 = vrot.slane %v2901, 2
        %v3617 = vsel %vm3583, %v3612, %v3616
        %v3618 = vrot.slane %v2902, 2
        %v3619 = vsel %vm3583, %v3614, %v3618
        %v3620 = vrot.slane %v2903, 2
        %v3621 = vsel %vm3583, %v3616, %v3620
        %v3622 = vrot.slane %v2904, 2
        %v3623 = vsel %vm3583, %v3618, %v3622
        %v3624 = vrot.slane %v2905, 2
        %v3625 = vsel %vm3583, %v3620, %v3624
        %v3626 = vrot.slane %v2906, 2
        %v3627 = vsel %vm3583, %v3622, %v3626
        %v3628 = vrot.slane %v2907, 2
        %v3629 = vsel %vm3583, %v3624, %v3628
        %v3630 = vrot.slane %v2908, 2
        %v3631 = vsel %vm3583, %v3626, %v3630
        %v3632 = vrot.slane %v2909, 2
        %v3633 = vsel %vm3583, %v3628, %v3632
        %v3634 = vrot.slane %v2910, 2
        %v3635 = vsel %vm3583, %v3630, %v3634
        %v3636 = vrot.slane %v2911, 2
        %v3637 = vsel %vm3583, %v3632, %v3636
        %v3638 = vrot.slane %v2912, 2
        %v3639 = vsel %vm3583, %v3634, %v3638
        %v3640 = vrot.slane %v2913, 2
        %v3641 = vsel %vm3583, %v3636, %v3640
        %v3642 = vrot.slane %v2914, 2
        %v3643 = vsel %vm3583, %v3638, %v3642
        %v3644 = vrot.slane %v2915, 2
        %v3645 = vsel %vm3583, %v3640, %v3644
        %v3646 = vrot.slane %v2916, 2
        %v3647 = vsel %vm3583, %v3642, %v3646
        %v3648 = vrot.slane %v2917, 2
        %v3649 = vsel %vm3583, %v3644, %v3648
        %v3650 = vrot.slane %v2918, 2
        %v3651 = vsel %vm3583, %v3646, %v3650
        %v3652 = vrot.slane %v2919, 2
        %v3653 = vsel %vm3583, %v3648, %v3652
        %v3654 = vrot.slane %v2920, 2
        %v3655 = vsel %vm3583, %v3650, %v3654
        %v3656 = vrot.slane %v2921, 2
        %v3657 = vsel %vm3583, %v3652, %v3656
        %v3658 = vrot.slane %v2922, 2
        %v3659 = vsel %vm3583, %v3654, %v3658
        %v3660 = vrot.slane %v2923, 2
        %v3661 = vsel %vm3583, %v3656, %v3660
        %v3662 = vrot.slane %v2924, 2
        %v3663 = vsel %vm3583, %v3658, %v3662
        %v3664 = vrot.slane %v2925, 2
        %v3665 = vsel %vm3583, %v3660, %v3664
        %v3666 = vrot.slane %v2926, 2
        %v3667 = vsel %vm3583, %v3662, %v3666
        %v3668 = vrot.slane %v2927, 2
        %v3669 = vsel %vm3583, %v3664, %v3668
        %v3670 = vrot.slane %v2928, 2
        %v3671 = vsel %vm3583, %v3666, %v3670
        %v3672 = vrot.slane %v2929, 2
        %v3673 = vsel %vm3583, %v3668, %v3672
        %v3674 = vrot.slane %v2930, 2
        %v3675 = vsel %vm3583, %v3670, %v3674
        %v3676 = vrot.slane %v2931, 2
        %v3677 = vsel %vm3583, %v3672, %v3676
        %v3678 = vrot.slane %v2932, 2
        %v3679 = vsel %vm3583, %v3674, %v3678
        %v3680 = vrot.slane %v2933, 2
        %v3681 = vsel %vm3583, %v3676, %v3680
        %v3732 = vmul.f32 %v3411, %v3586
        %v3733 = vmul.f32 %v3411, %v3589
        %v3734 = vmul.f32 %v3416, %v3591
        %v3735 = vmul.f32 %v3416, %v3593
        %v3736 = vmul.f32 %v3421, %v3595
        %v3737 = vmul.f32 %v3421, %v3597
        %v3738 = vmul.f32 %v3426, %v3599
        %v3739 = vmul.f32 %v3426, %v3601
        %v3740 = vmul.f32 %v3431, %v3603
        %v3741 = vmul.f32 %v3431, %v3605
        %v3742 = vmul.f32 %v3436, %v3607
        %v3743 = vmul.f32 %v3436, %v3609
        %v3744 = vmul.f32 %v3441, %v3611
        %v3745 = vmul.f32 %v3441, %v3613
        %v3746 = vmul.f32 %v3446, %v3615
        %v3747 = vmul.f32 %v3446, %v3617
        %v3748 = vmul.f32 %v3451, %v3619
        %v3749 = vmul.f32 %v3451, %v3621
        %v3750 = vmul.f32 %v3456, %v3623
        %v3751 = vmul.f32 %v3456, %v3625
        %v3752 = vmul.f32 %v3461, %v3627
        %v3753 = vmul.f32 %v3461, %v3629
        %v3754 = vmul.f32 %v3466, %v3631
        %v3755 = vmul.f32 %v3466, %v3633
        %v3756 = vmul.f32 %v3471, %v3635
        %v3757 = vmul.f32 %v3471, %v3637
        %v3758 = vmul.f32 %v3476, %v3639
        %v3759 = vmul.f32 %v3476, %v3641
        %v3760 = vmul.f32 %v3481, %v3643
        %v3761 = vmul.f32 %v3481, %v3645
        %v3762 = vmul.f32 %v3486, %v3647
        %v3763 = vmul.f32 %v3486, %v3649
        %v3764 = vmul.f32 %v3491, %v3651
        %v3765 = vmul.f32 %v3491, %v3653
        %v3766 = vmul.f32 %v3496, %v3655
        %v3767 = vmul.f32 %v3496, %v3657
        %v3768 = vmul.f32 %v3501, %v3659
        %v3769 = vmul.f32 %v3501, %v3661
        %v3770 = vmul.f32 %v3506, %v3663
        %v3771 = vmul.f32 %v3506, %v3665
        %v3772 = vmul.f32 %v3511, %v3667
        %v3773 = vmul.f32 %v3511, %v3669
        %v3774 = vmul.f32 %v3516, %v3671
        %v3775 = vmul.f32 %v3516, %v3673
        %v3776 = vmul.f32 %v3521, %v3675
        %v3777 = vmul.f32 %v3521, %v3677
        %v3778 = vmul.f32 %v3526, %v3679
        %v3779 = vmul.f32 %v3526, %v3681
        %v3780 = vmul.f32 %v3531, %v3678
        %v3781 = vmul.f32 %v3531, %v3680
        %v3832 = vrot.slane %v3732, 7
        %v3833 = vrot.slane %v3733, 7
        %v3834 = vrot.slane %v3734, 7
        %v3835 = vsel %vm3184, %v3832, %v3834
        %v3836 = vrot.slane %v3735, 7
        %v3837 = vsel %vm3184, %v3833, %v3836
        %v3838 = vrot.slane %v3736, 7
        %v3839 = vsel %vm3184, %v3834, %v3838
        %v3840 = vrot.slane %v3737, 7
        %v3841 = vsel %vm3184, %v3836, %v3840
        %v3842 = vrot.slane %v3738, 7
        %v3843 = vsel %vm3184, %v3838, %v3842
        %v3844 = vrot.slane %v3739, 7
        %v3845 = vsel %vm3184, %v3840, %v3844
        %v3846 = vrot.slane %v3740, 7
        %v3847 = vsel %vm3184, %v3842, %v3846
        %v3848 = vrot.slane %v3741, 7
        %v3849 = vsel %vm3184, %v3844, %v3848
        %v3850 = vrot.slane %v3742, 7
        %v3851 = vsel %vm3184, %v3846, %v3850
        %v3852 = vrot.slane %v3743, 7
        %v3853 = vsel %vm3184, %v3848, %v3852
        %v3854 = vrot.slane %v3744, 7
        %v3855 = vsel %vm3184, %v3850, %v3854
        %v3856 = vrot.slane %v3745, 7
        %v3857 = vsel %vm3184, %v3852, %v3856
        %v3858 = vrot.slane %v3746, 7
        %v3859 = vsel %vm3184, %v3854, %v3858
        %v3860 = vrot.slane %v3747, 7
        %v3861 = vsel %vm3184, %v3856, %v3860
        %v3862 = vrot.slane %v3748, 7
        %v3863 = vsel %vm3184, %v3858, %v3862
        %v3864 = vrot.slane %v3749, 7
        %v3865 = vsel %vm3184, %v3860, %v3864
        %v3866 = vrot.slane %v3750, 7
        %v3867 = vsel %vm3184, %v3862, %v3866
        %v3868 = vrot.slane %v3751, 7
        %v3869 = vsel %vm3184, %v3864, %v3868
        %v3870 = vrot.slane %v3752, 7
        %v3871 = vsel %vm3184, %v3866, %v3870
        %v3872 = vrot.slane %v3753, 7
        %v3873 = vsel %vm3184, %v3868, %v3872
        %v3874 = vrot.slane %v3754, 7
        %v3875 = vsel %vm3184, %v3870, %v3874
        %v3876 = vrot.slane %v3755, 7
        %v3877 = vsel %vm3184, %v3872, %v3876
        %v3878 = vrot.slane %v3756, 7
        %v3879 = vsel %vm3184, %v3874, %v3878
        %v3880 = vrot.slane %v3757, 7
        %v3881 = vsel %vm3184, %v3876, %v3880
        %v3882 = vrot.slane %v3758, 7
        %v3883 = vsel %vm3184, %v3878, %v3882
        %v3884 = vrot.slane %v3759, 7
        %v3885 = vsel %vm3184, %v3880, %v3884
        %v3886 = vrot.slane %v3760, 7
        %v3887 = vsel %vm3184, %v3882, %v3886
        %v3888 = vrot.slane %v3761, 7
        %v3889 = vsel %vm3184, %v3884, %v3888
        %v3890 = vrot.slane %v3762, 7
        %v3891 = vsel %vm3184, %v3886, %v3890
        %v3892 = vrot.slane %v3763, 7
        %v3893 = vsel %vm3184, %v3888, %v3892
        %v3894 = vrot.slane %v3764, 7
        %v3895 = vsel %vm3184, %v3890, %v3894
        %v3896 = vrot.slane %v3765, 7
        %v3897 = vsel %vm3184, %v3892, %v3896
        %v3898 = vrot.slane %v3766, 7
        %v3899 = vsel %vm3184, %v3894, %v3898
        %v3900 = vrot.slane %v3767, 7
        %v3901 = vsel %vm3184, %v3896, %v3900
        %v3902 = vrot.slane %v3768, 7
        %v3903 = vsel %vm3184, %v3898, %v3902
        %v3904 = vrot.slane %v3769, 7
        %v3905 = vsel %vm3184, %v3900, %v3904
        %v3906 = vrot.slane %v3770, 7
        %v3907 = vsel %vm3184, %v3902, %v3906
        %v3908 = vrot.slane %v3771, 7
        %v3909 = vsel %vm3184, %v3904, %v3908
        %v3910 = vrot.slane %v3772, 7
        %v3911 = vsel %vm3184, %v3906, %v3910
        %v3912 = vrot.slane %v3773, 7
        %v3913 = vsel %vm3184, %v3908, %v3912
        %v3914 = vrot.slane %v3774, 7
        %v3915 = vsel %vm3184, %v3910, %v3914
        %v3916 = vrot.slane %v3775, 7
        %v3917 = vsel %vm3184, %v3912, %v3916
        %v3918 = vrot.slane %v3776, 7
        %v3919 = vsel %vm3184, %v3914, %v3918
        %v3920 = vrot.slane %v3777, 7
        %v3921 = vsel %vm3184, %v3916, %v3920
        %v3922 = vrot.slane %v3778, 7
        %v3923 = vsel %vm3184, %v3918, %v3922
        %v3924 = vrot.slane %v3779, 7
        %v3925 = vsel %vm3184, %v3920, %v3924
        %v3926 = vrot.slane %v3780, 7
        %v3927 = vsel %vm3184, %v3922, %v3926
        %v3928 = vrot.slane %v3781, 7
        %v3929 = vsel %vm3184, %v3924, %v3928
        %v3980 = vadd.f32 %v3333, %v3832
        %v3981 = vadd.f32 %v3334, %v3833
        %v3982 = vadd.f32 %v3335, %v3835
        %v3983 = vadd.f32 %v3336, %v3837
        %v3984 = vadd.f32 %v3337, %v3839
        %v3985 = vadd.f32 %v3338, %v3841
        %v3986 = vadd.f32 %v3339, %v3843
        %v3987 = vadd.f32 %v3340, %v3845
        %v3988 = vadd.f32 %v3341, %v3847
        %v3989 = vadd.f32 %v3342, %v3849
        %v3990 = vadd.f32 %v3343, %v3851
        %v3991 = vadd.f32 %v3344, %v3853
        %v3992 = vadd.f32 %v3345, %v3855
        %v3993 = vadd.f32 %v3346, %v3857
        %v3994 = vadd.f32 %v3347, %v3859
        %v3995 = vadd.f32 %v3348, %v3861
        %v3996 = vadd.f32 %v3349, %v3863
        %v3997 = vadd.f32 %v3350, %v3865
        %v3998 = vadd.f32 %v3351, %v3867
        %v3999 = vadd.f32 %v3352, %v3869
        %v4000 = vadd.f32 %v3353, %v3871
        %v4001 = vadd.f32 %v3354, %v3873
        %v4002 = vadd.f32 %v3355, %v3875
        %v4003 = vadd.f32 %v3356, %v3877
        %v4004 = vadd.f32 %v3357, %v3879
        %v4005 = vadd.f32 %v3358, %v3881
        %v4006 = vadd.f32 %v3359, %v3883
        %v4007 = vadd.f32 %v3360, %v3885
        %v4008 = vadd.f32 %v3361, %v3887
        %v4009 = vadd.f32 %v3362, %v3889
        %v4010 = vadd.f32 %v3363, %v3891
        %v4011 = vadd.f32 %v3364, %v3893
        %v4012 = vadd.f32 %v3365, %v3895
        %v4013 = vadd.f32 %v3366, %v3897
        %v4014 = vadd.f32 %v3367, %v3899
        %v4015 = vadd.f32 %v3368, %v3901
        %v4016 = vadd.f32 %v3369, %v3903
        %v4017 = vadd.f32 %v3370, %v3905
        %v4018 = vadd.f32 %v3371, %v3907
        %v4019 = vadd.f32 %v3372, %v3909
        %v4020 = vadd.f32 %v3373, %v3911
        %v4021 = vadd.f32 %v3374, %v3913
        %v4022 = vadd.f32 %v3375, %v3915
        %v4023 = vadd.f32 %v3376, %v3917
        %v4024 = vadd.f32 %v3377, %v3919
        %v4025 = vadd.f32 %v3378, %v3921
        %v4026 = vadd.f32 %v3379, %v3923
        %v4027 = vadd.f32 %v3380, %v3925
        %v4028 = vadd.f32 %v3381, %v3927
        %v4029 = vadd.f32 %v3382, %v3929
        %v4080 = vrot.slane %v3980, 1
        %v4081 = vrot.slane %v3982, 1
        %v4082 = vsel %vm557, %v4080, %v4081
        %v4083 = vrot.slane %v3981, 1
        %v4084 = vrot.slane %v3983, 1
        %v4085 = vsel %vm557, %v4083, %v4084
        %v4086 = vrot.slane %v3984, 1
        %v4087 = vsel %vm557, %v4081, %v4086
        %v4088 = vrot.slane %v3985, 1
        %v4089 = vsel %vm557, %v4084, %v4088
        %v4090 = vrot.slane %v3986, 1
        %v4091 = vsel %vm557, %v4086, %v4090
        %v4092 = vrot.slane %v3987, 1
        %v4093 = vsel %vm557, %v4088, %v4092
        %v4094 = vrot.slane %v3988, 1
        %v4095 = vsel %vm557, %v4090, %v4094
        %v4096 = vrot.slane %v3989, 1
        %v4097 = vsel %vm557, %v4092, %v4096
        %v4098 = vrot.slane %v3990, 1
        %v4099 = vsel %vm557, %v4094, %v4098
        %v4100 = vrot.slane %v3991, 1
        %v4101 = vsel %vm557, %v4096, %v4100
        %v4102 = vrot.slane %v3992, 1
        %v4103 = vsel %vm557, %v4098, %v4102
        %v4104 = vrot.slane %v3993, 1
        %v4105 = vsel %vm557, %v4100, %v4104
        %v4106 = vrot.slane %v3994, 1
        %v4107 = vsel %vm557, %v4102, %v4106
        %v4108 = vrot.slane %v3995, 1
        %v4109 = vsel %vm557, %v4104, %v4108
        %v4110 = vrot.slane %v3996, 1
        %v4111 = vsel %vm557, %v4106, %v4110
        %v4112 = vrot.slane %v3997, 1
        %v4113 = vsel %vm557, %v4108, %v4112
        %v4114 = vrot.slane %v3998, 1
        %v4115 = vsel %vm557, %v4110, %v4114
        %v4116 = vrot.slane %v3999, 1
        %v4117 = vsel %vm557, %v4112, %v4116
        %v4118 = vrot.slane %v4000, 1
        %v4119 = vsel %vm557, %v4114, %v4118
        %v4120 = vrot.slane %v4001, 1
        %v4121 = vsel %vm557, %v4116, %v4120
        %v4122 = vrot.slane %v4002, 1
        %v4123 = vsel %vm557, %v4118, %v4122
        %v4124 = vrot.slane %v4003, 1
        %v4125 = vsel %vm557, %v4120, %v4124
        %v4126 = vrot.slane %v4004, 1
        %v4127 = vsel %vm557, %v4122, %v4126
        %v4128 = vrot.slane %v4005, 1
        %v4129 = vsel %vm557, %v4124, %v4128
        %v4130 = vrot.slane %v4006, 1
        %v4131 = vsel %vm557, %v4126, %v4130
        %v4132 = vrot.slane %v4007, 1
        %v4133 = vsel %vm557, %v4128, %v4132
        %v4134 = vrot.slane %v4008, 1
        %v4135 = vsel %vm557, %v4130, %v4134
        %v4136 = vrot.slane %v4009, 1
        %v4137 = vsel %vm557, %v4132, %v4136
        %v4138 = vrot.slane %v4010, 1
        %v4139 = vsel %vm557, %v4134, %v4138
        %v4140 = vrot.slane %v4011, 1
        %v4141 = vsel %vm557, %v4136, %v4140
        %v4142 = vrot.slane %v4012, 1
        %v4143 = vsel %vm557, %v4138, %v4142
        %v4144 = vrot.slane %v4013, 1
        %v4145 = vsel %vm557, %v4140, %v4144
        %v4146 = vrot.slane %v4014, 1
        %v4147 = vsel %vm557, %v4142, %v4146
        %v4148 = vrot.slane %v4015, 1
        %v4149 = vsel %vm557, %v4144, %v4148
        %v4150 = vrot.slane %v4016, 1
        %v4151 = vsel %vm557, %v4146, %v4150
        %v4152 = vrot.slane %v4017, 1
        %v4153 = vsel %vm557, %v4148, %v4152
        %v4154 = vrot.slane %v4018, 1
        %v4155 = vsel %vm557, %v4150, %v4154
        %v4156 = vrot.slane %v4019, 1
        %v4157 = vsel %vm557, %v4152, %v4156
        %v4158 = vrot.slane %v4020, 1
        %v4159 = vsel %vm557, %v4154, %v4158
        %v4160 = vrot.slane %v4021, 1
        %v4161 = vsel %vm557, %v4156, %v4160
        %v4162 = vrot.slane %v4022, 1
        %v4163 = vsel %vm557, %v4158, %v4162
        %v4164 = vrot.slane %v4023, 1
        %v4165 = vsel %vm557, %v4160, %v4164
        %v4166 = vrot.slane %v4024, 1
        %v4167 = vsel %vm557, %v4162, %v4166
        %v4168 = vrot.slane %v4025, 1
        %v4169 = vsel %vm557, %v4164, %v4168
        %v4170 = vrot.slane %v4026, 1
        %v4171 = vsel %vm557, %v4166, %v4170
        %v4172 = vrot.slane %v4027, 1
        %v4173 = vsel %vm557, %v4168, %v4172
        %v4174 = vrot.slane %v4028, 1
        %v4175 = vsel %vm557, %v4170, %v4174
        %v4176 = vrot.slane %v4029, 1
        %v4177 = vsel %vm557, %v4172, %v4176
        %s4228 = smul.u32 %s24, 50
        %s4229 = smul.addr %s4228, 8
        %s4230 = scalar_lea.vmem [#allocation3], %s4229
        %4231 = vst [vmem:[%s4230] sm:$0xff] %v4082
        %4232 = vst [vmem:[%s4230 + $0x8] sm:$0xff] %v4085
        %4233 = vst [vmem:[%s4230 + $0x10] sm:$0xff] %v4087
        %4234 = vst [vmem:[%s4230 + $0x18] sm:$0xff] %v4089
        %4235 = vst [vmem:[%s4230 + $0x20] sm:$0xff] %v4091
        %4236 = vst [vmem:[%s4230 + $0x28] sm:$0xff] %v4093
        %4237 = vst [vmem:[%s4230 + $0x30] sm:$0xff] %v4095
        %4238 = vst [vmem:[%s4230 + $0x38] sm:$0xff] %v4097
        %4239 = vst [vmem:[%s4230 + $0x40] sm:$0xff] %v4099
        %4240 = vst [vmem:[%s4230 + $0x48] sm:$0xff] %v4101
        %4241 = vst [vmem:[%s4230 + $0x50] sm:$0xff] %v4103
        %4242 = vst [vmem:[%s4230 + $0x58] sm:$0xff] %v4105
        %4243 = vst [vmem:[%s4230 + $0x60] sm:$0xff] %v4107
        %4244 = vst [vmem:[%s4230 + $0x68] sm:$0xff] %v4109
        %4245 = vst [vmem:[%s4230 + $0x70] sm:$0xff] %v4111
        %4246 = vst [vmem:[%s4230 + $0x78] sm:$0xff] %v4113
        %4247 = vst [vmem:[%s4230 + $0x80] sm:$0xff] %v4115
        %4248 = vst [vmem:[%s4230 + $0x88] sm:$0xff] %v4117
        %4249 = vst [vmem:[%s4230 + $0x90] sm:$0xff] %v4119
        %4250 = vst [vmem:[%s4230 + $0x98] sm:$0xff] %v4121
        %4251 = vst [vmem:[%s4230 + $0xa0] sm:$0xff] %v4123
        %4252 = vst [vmem:[%s4230 + $0xa8] sm:$0xff] %v4125
        %4253 = vst [vmem:[%s4230 + $0xb0] sm:$0xff] %v4127
        %4254 = vst [vmem:[%s4230 + $0xb8] sm:$0xff] %v4129
        %4255 = vst [vmem:[%s4230 + $0xc0] sm:$0xff] %v4131
        %4256 = vst [vmem:[%s4230 + $0xc8] sm:$0xff] %v4133
        %4257 = vst [vmem:[%s4230 + $0xd0] sm:$0xff] %v4135
        %4258 = vst [vmem:[%s4230 + $0xd8] sm:$0xff] %v4137
        %4259 = vst [vmem:[%s4230 + $0xe0] sm:$0xff] %v4139
        %4260 = vst [vmem:[%s4230 + $0xe8] sm:$0xff] %v4141
        %4261 = vst [vmem:[%s4230 + $0xf0] sm:$0xff] %v4143
        %4262 = vst [vmem:[%s4230 + $0xf8] sm:$0xff] %v4145
        %4263 = vst [vmem:[%s4230 + $0x100] sm:$0xff] %v4147
        %4264 = vst [vmem:[%s4230 + $0x108] sm:$0xff] %v4149
        %4265 = vst [vmem:[%s4230 + $0x110] sm:$0xff] %v4151
        %4266 = vst [vmem:[%s4230 + $0x118] sm:$0xff] %v4153
        %4267 = vst [vmem:[%s4230 + $0x120] sm:$0xff] %v4155
        %4268 = vst [vmem:[%s4230 + $0x128] sm:$0xff] %v4157
        %4269 = vst [vmem:[%s4230 + $0x130] sm:$0xff] %v4159
        %4270 = vst [vmem:[%s4230 + $0x138] sm:$0xff] %v4161
        %4271 = vst [vmem:[%s4230 + $0x140] sm:$0xff] %v4163
        %4272 = vst [vmem:[%s4230 + $0x148] sm:$0xff] %v4165
        %4273 = vst [vmem:[%s4230 + $0x150] sm:$0xff] %v4167
        %4274 = vst [vmem:[%s4230 + $0x158] sm:$0xff] %v4169
        %4275 = vst [vmem:[%s4230 + $0x160] sm:$0xff] %v4171
        %4276 = vst [vmem:[%s4230 + $0x168] sm:$0xff] %v4173
        %4277 = vst [vmem:[%s4230 + $0x170] sm:$0xff] %v4175
        %4278 = vst [vmem:[%s4230 + $0x178] sm:$0xff] %v4177
        %4279 = vst [vmem:[%s4230 + $0x180] sm:$0xf] %v4174
        %4280 = vst [vmem:[%s4230 + $0x188] sm:$0xf] %v4176
        %v4281 = vld [vmem:[#allocation4] sm:$0x3]
        %v4282 = vadd.f32 %v4082, %v4087
        %v4283 = vadd.f32 %v4282, %v4091
        %v4284 = vadd.f32 %v4283, %v4095
        %v4285 = vadd.f32 %v4284, %v4099
        %v4286 = vadd.f32 %v4285, %v4103
        %v4287 = vadd.f32 %v4286, %v4107
        %v4288 = vadd.f32 %v4287, %v4111
        %v4289 = vadd.f32 %v4288, %v4115
        %v4290 = vadd.f32 %v4289, %v4119
        %v4291 = vadd.f32 %v4290, %v4123
        %v4292 = vadd.f32 %v4291, %v4127
        %v4293 = vadd.f32 %v4292, %v4131
        %v4294 = vadd.f32 %v4293, %v4135
        %v4295 = vadd.f32 %v4294, %v4139
        %v4296 = vadd.f32 %v4295, %v4143
        %v4297 = vadd.f32 %v4296, %v4147
        %v4298 = vadd.f32 %v4297, %v4151
        %v4299 = vadd.f32 %v4298, %v4155
        %v4300 = vadd.f32 %v4299, %v4159
        %v4301 = vadd.f32 %v4300, %v4163
        %v4302 = vadd.f32 %v4301, %v4167
        %v4303 = vadd.f32 %v4302, %v4171
        %v4304 = vadd.f32 %v4303, %v4175
        %v4305 = vsel %vm1326, %v4174, 0.0
        %v4306 = vadd.f32 %v4304, %v4305
        %v4307 = vrot.slane %v4306, 4
        %v4308 = vadd.f32 %v4306, %v4307
        %v4309 = vrot.slane %v4308, 2
        %v4310 = vadd.f32 %v4308, %v4309
        %v4311 = vrot.slane %v4310, 1
        %v4312 = vadd.f32 %v4310, %v4311
        %v4313 = vadd.f32 %v4085, %v4089
        %v4314 = vadd.f32 %v4313, %v4093
        %v4315 = vadd.f32 %v4314, %v4097
        %v4316 = vadd.f32 %v4315, %v4101
        %v4317 = vadd.f32 %v4316, %v4105
        %v4318 = vadd.f32 %v4317, %v4109
        %v4319 = vadd.f32 %v4318, %v4113
        %v4320 = vadd.f32 %v4319, %v4117
        %v4321 = vadd.f32 %v4320, %v4121
        %v4322 = vadd.f32 %v4321, %v4125
        %v4323 = vadd.f32 %v4322, %v4129
        %v4324 = vadd.f32 %v4323, %v4133
        %v4325 = vadd.f32 %v4324, %v4137
        %v4326 = vadd.f32 %v4325, %v4141
        %v4327 = vadd.f32 %v4326, %v4145
        %v4328 = vadd.f32 %v4327, %v4149
        %v4329 = vadd.f32 %v4328, %v4153
        %v4330 = vadd.f32 %v4329, %v4157
        %v4331 = vadd.f32 %v4330, %v4161
        %v4332 = vadd.f32 %v4331, %v4165
        %v4333 = vadd.f32 %v4332, %v4169
        %v4334 = vadd.f32 %v4333, %v4173
        %v4335 = vadd.f32 %v4334, %v4177
        %v4336 = vsel %vm1326, %v4176, 0.0
        %v4337 = vadd.f32 %v4335, %v4336
        %v4338 = vrot.slane %v4337, 4
        %v4339 = vadd.f32 %v4337, %v4338
        %v4340 = vrot.slane %v4339, 2
        %v4341 = vadd.f32 %v4339, %v4340
        %v4342 = vrot.slane %v4341, 1
        %v4343 = vadd.f32 %v4341, %v4342
        %v4346 = vcombine.low %v4312, %v4343
        %v4348 = vunpack.c.l.s4 1966171168
        %v4349 = vunpack.c.0.s8 %v4348
        %v4350 = vlaneseq
        %v4351 = vshrl.u32 %v4350, 7
        %v4352 = vsub.s32 %v4349, %v4351
        %v4353 = vrot.slane %v4346, %v4352
        %v4355 = vunpack.c.l.s4 1966171168
        %v4356 = vunpack.c.0.s8 %v4355
        %v4357 = vlaneseq
        %v4358 = vshrl.u32 %v4357, 7
        %v4359 = vsub.s32 %v4356, %v4358
        %v4360 = vrot.slane %v4353, %v4359
        %v4362 = vadd.f32 %v4281, %v4360
        %v4363 = vlaneseq
        %vm4364 = vcmp.ge.s32.totalorder %v4363, 0
        %vm4365 = vcmp.lt.s32.totalorder %v4363, 256
        %vm4366 = vmand %vm4364, %vm4365
        %4367 = vst.msk [vmem:[#allocation4] sm:$0x3] %vm4366, %v4362
        %v4368 = vld [vmem:[#allocation5] sm:$0x3]
        %v4369 = vmul.f32 %v3980, %v3980
        %v4370 = vmul.f32 %v3981, %v3981
        %v4371 = vmul.f32 %v3982, %v3982
        %v4372 = vmul.f32 %v3983, %v3983
        %v4373 = vmul.f32 %v3984, %v3984
        %v4374 = vmul.f32 %v3985, %v3985
        %v4375 = vmul.f32 %v3986, %v3986
        %v4376 = vmul.f32 %v3987, %v3987
        %v4377 = vmul.f32 %v3988, %v3988
        %v4378 = vmul.f32 %v3989, %v3989
        %v4379 = vmul.f32 %v3990, %v3990
        %v4380 = vmul.f32 %v3991, %v3991
        %v4381 = vmul.f32 %v3992, %v3992
        %v4382 = vmul.f32 %v3993, %v3993
        %v4383 = vmul.f32 %v3994, %v3994
        %v4384 = vmul.f32 %v3995, %v3995
        %v4385 = vmul.f32 %v3996, %v3996
        %v4386 = vmul.f32 %v3997, %v3997
        %v4387 = vmul.f32 %v3998, %v3998
        %v4388 = vmul.f32 %v3999, %v3999
        %v4389 = vmul.f32 %v4000, %v4000
        %v4390 = vmul.f32 %v4001, %v4001
        %v4391 = vmul.f32 %v4002, %v4002
        %v4392 = vmul.f32 %v4003, %v4003
        %v4393 = vmul.f32 %v4004, %v4004
        %v4394 = vmul.f32 %v4005, %v4005
        %v4395 = vmul.f32 %v4006, %v4006
        %v4396 = vmul.f32 %v4007, %v4007
        %v4397 = vmul.f32 %v4008, %v4008
        %v4398 = vmul.f32 %v4009, %v4009
        %v4399 = vmul.f32 %v4010, %v4010
        %v4400 = vmul.f32 %v4011, %v4011
        %v4401 = vmul.f32 %v4012, %v4012
        %v4402 = vmul.f32 %v4013, %v4013
        %v4403 = vmul.f32 %v4014, %v4014
        %v4404 = vmul.f32 %v4015, %v4015
        %v4405 = vmul.f32 %v4016, %v4016
        %v4406 = vmul.f32 %v4017, %v4017
        %v4407 = vmul.f32 %v4018, %v4018
        %v4408 = vmul.f32 %v4019, %v4019
        %v4409 = vmul.f32 %v4020, %v4020
        %v4410 = vmul.f32 %v4021, %v4021
        %v4411 = vmul.f32 %v4022, %v4022
        %v4412 = vmul.f32 %v4023, %v4023
        %v4413 = vmul.f32 %v4024, %v4024
        %v4414 = vmul.f32 %v4025, %v4025
        %v4415 = vmul.f32 %v4026, %v4026
        %v4416 = vmul.f32 %v4027, %v4027
        %v4417 = vmul.f32 %v4028, %v4028
        %v4418 = vmul.f32 %v4029, %v4029
        %v4469 = vrot.slane %v4369, 1
        %v4470 = vrot.slane %v4371, 1
        %v4471 = vsel %vm557, %v4469, %v4470
        %v4472 = vrot.slane %v4370, 1
        %v4473 = vrot.slane %v4372, 1
        %v4474 = vsel %vm557, %v4472, %v4473
        %v4475 = vrot.slane %v4373, 1
        %v4476 = vsel %vm557, %v4470, %v4475
        %v4477 = vrot.slane %v4374, 1
        %v4478 = vsel %vm557, %v4473, %v4477
        %v4479 = vrot.slane %v4375, 1
        %v4480 = vsel %vm557, %v4475, %v4479
        %v4481 = vrot.slane %v4376, 1
        %v4482 = vsel %vm557, %v4477, %v4481
        %v4483 = vrot.slane %v4377, 1
        %v4484 = vsel %vm557, %v4479, %v4483
        %v4485 = vrot.slane %v4378, 1
        %v4486 = vsel %vm557, %v4481, %v4485
        %v4487 = vrot.slane %v4379, 1
        %v4488 = vsel %vm557, %v4483, %v4487
        %v4489 = vrot.slane %v4380, 1
        %v4490 = vsel %vm557, %v4485, %v4489
        %v4491 = vrot.slane %v4381, 1
        %v4492 = vsel %vm557, %v4487, %v4491
        %v4493 = vrot.slane %v4382, 1
        %v4494 = vsel %vm557, %v4489, %v4493
        %v4495 = vrot.slane %v4383, 1
        %v4496 = vsel %vm557, %v4491, %v4495
        %v4497 = vrot.slane %v4384, 1
        %v4498 = vsel %vm557, %v4493, %v4497
        %v4499 = vrot.slane %v4385, 1
        %v4500 = vsel %vm557, %v4495, %v4499
        %v4501 = vrot.slane %v4386, 1
        %v4502 = vsel %vm557, %v4497, %v4501
        %v4503 = vrot.slane %v4387, 1
        %v4504 = vsel %vm557, %v4499, %v4503
        %v4505 = vrot.slane %v4388, 1
        %v4506 = vsel %vm557, %v4501, %v4505
        %v4507 = vrot.slane %v4389, 1
        %v4508 = vsel %vm557, %v4503, %v4507
        %v4509 = vrot.slane %v4390, 1
        %v4510 = vsel %vm557, %v4505, %v4509
        %v4511 = vrot.slane %v4391, 1
        %v4512 = vsel %vm557, %v4507, %v4511
        %v4513 = vrot.slane %v4392, 1
        %v4514 = vsel %vm557, %v4509, %v4513
        %v4515 = vrot.slane %v4393, 1
        %v4516 = vsel %vm557, %v4511, %v4515
        %v4517 = vrot.slane %v4394, 1
        %v4518 = vsel %vm557, %v4513, %v4517
        %v4519 = vrot.slane %v4395, 1
        %v4520 = vsel %vm557, %v4515, %v4519
        %v4521 = vrot.slane %v4396, 1
        %v4522 = vsel %vm557, %v4517, %v4521
        %v4523 = vrot.slane %v4397, 1
        %v4524 = vsel %vm557, %v4519, %v4523
        %v4525 = vrot.slane %v4398, 1
        %v4526 = vsel %vm557, %v4521, %v4525
        %v4527 = vrot.slane %v4399, 1
        %v4528 = vsel %vm557, %v4523, %v4527
        %v4529 = vrot.slane %v4400, 1
        %v4530 = vsel %vm557, %v4525, %v4529
        %v4531 = vrot.slane %v4401, 1
        %v4532 = vsel %vm557, %v4527, %v4531
        %v4533 = vrot.slane %v4402, 1
        %v4534 = vsel %vm557, %v4529, %v4533
        %v4535 = vrot.slane %v4403, 1
        %v4536 = vsel %vm557, %v4531, %v4535
        %v4537 = vrot.slane %v4404, 1
        %v4538 = vsel %vm557, %v4533, %v4537
        %v4539 = vrot.slane %v4405, 1
        %v4540 = vsel %vm557, %v4535, %v4539
        %v4541 = vrot.slane %v4406, 1
        %v4542 = vsel %vm557, %v4537, %v4541
        %v4543 = vrot.slane %v4407, 1
        %v4544 = vsel %vm557, %v4539, %v4543
        %v4545 = vrot.slane %v4408, 1
        %v4546 = vsel %vm557, %v4541, %v4545
        %v4547 = vrot.slane %v4409, 1
        %v4548 = vsel %vm557, %v4543, %v4547
        %v4549 = vrot.slane %v4410, 1
        %v4550 = vsel %vm557, %v4545, %v4549
        %v4551 = vrot.slane %v4411, 1
        %v4552 = vsel %vm557, %v4547, %v4551
        %v4553 = vrot.slane %v4412, 1
        %v4554 = vsel %vm557, %v4549, %v4553
        %v4555 = vrot.slane %v4413, 1
        %v4556 = vsel %vm557, %v4551, %v4555
        %v4557 = vrot.slane %v4414, 1
        %v4558 = vsel %vm557, %v4553, %v4557
        %v4559 = vrot.slane %v4415, 1
        %v4560 = vsel %vm557, %v4555, %v4559
        %v4561 = vrot.slane %v4416, 1
        %v4562 = vsel %vm557, %v4557, %v4561
        %v4563 = vrot.slane %v4417, 1
        %v4564 = vsel %vm557, %v4559, %v4563
        %v4565 = vrot.slane %v4418, 1
        %v4566 = vsel %vm557, %v4561, %v4565
        %v4617 = vadd.f32 %v4471, %v4476
        %v4618 = vadd.f32 %v4617, %v4480
        %v4619 = vadd.f32 %v4618, %v4484
        %v4620 = vadd.f32 %v4619, %v4488
        %v4621 = vadd.f32 %v4620, %v4492
        %v4622 = vadd.f32 %v4621, %v4496
        %v4623 = vadd.f32 %v4622, %v4500
        %v4624 = vadd.f32 %v4623, %v4504
        %v4625 = vadd.f32 %v4624, %v4508
        %v4626 = vadd.f32 %v4625, %v4512
        %v4627 = vadd.f32 %v4626, %v4516
        %v4628 = vadd.f32 %v4627, %v4520
        %v4629 = vadd.f32 %v4628, %v4524
        %v4630 = vadd.f32 %v4629, %v4528
        %v4631 = vadd.f32 %v4630, %v4532
        %v4632 = vadd.f32 %v4631, %v4536
        %v4633 = vadd.f32 %v4632, %v4540
        %v4634 = vadd.f32 %v4633, %v4544
        %v4635 = vadd.f32 %v4634, %v4548
        %v4636 = vadd.f32 %v4635, %v4552
        %v4637 = vadd.f32 %v4636, %v4556
        %v4638 = vadd.f32 %v4637, %v4560
        %v4639 = vadd.f32 %v4638, %v4564
        %v4640 = vsel %vm1326, %v4563, 0.0
        %v4641 = vadd.f32 %v4639, %v4640
        %v4642 = vrot.slane %v4641, 4
        %v4643 = vadd.f32 %v4641, %v4642
        %v4644 = vrot.slane %v4643, 2
        %v4645 = vadd.f32 %v4643, %v4644
        %v4646 = vrot.slane %v4645, 1
        %v4647 = vadd.f32 %v4645, %v4646
        %v4648 = vadd.f32 %v4474, %v4478
        %v4649 = vadd.f32 %v4648, %v4482
        %v4650 = vadd.f32 %v4649, %v4486
        %v4651 = vadd.f32 %v4650, %v4490
        %v4652 = vadd.f32 %v4651, %v4494
        %v4653 = vadd.f32 %v4652, %v4498
        %v4654 = vadd.f32 %v4653, %v4502
        %v4655 = vadd.f32 %v4654, %v4506
        %v4656 = vadd.f32 %v4655, %v4510
        %v4657 = vadd.f32 %v4656, %v4514
        %v4658 = vadd.f32 %v4657, %v4518
        %v4659 = vadd.f32 %v4658, %v4522
        %v4660 = vadd.f32 %v4659, %v4526
        %v4661 = vadd.f32 %v4660, %v4530
        %v4662 = vadd.f32 %v4661, %v4534
        %v4663 = vadd.f32 %v4662, %v4538
        %v4664 = vadd.f32 %v4663, %v4542
        %v4665 = vadd.f32 %v4664, %v4546
        %v4666 = vadd.f32 %v4665, %v4550
        %v4667 = vadd.f32 %v4666, %v4554
        %v4668 = vadd.f32 %v4667, %v4558
        %v4669 = vadd.f32 %v4668, %v4562
        %v4670 = vadd.f32 %v4669, %v4566
        %v4671 = vsel %vm1326, %v4565, 0.0
        %v4672 = vadd.f32 %v4670, %v4671
        %v4673 = vrot.slane %v4672, 4
        %v4674 = vadd.f32 %v4672, %v4673
        %v4675 = vrot.slane %v4674, 2
        %v4676 = vadd.f32 %v4674, %v4675
        %v4677 = vrot.slane %v4676, 1
        %v4678 = vadd.f32 %v4676, %v4677
        %v4681 = vcombine.low %v4647, %v4678
        %v4683 = vunpack.c.l.s4 1966171168
        %v4684 = vunpack.c.0.s8 %v4683
        %v4685 = vlaneseq
        %v4686 = vshrl.u32 %v4685, 7
        %v4687 = vsub.s32 %v4684, %v4686
        %v4688 = vrot.slane %v4681, %v4687
        %v4690 = vunpack.c.l.s4 1966171168
        %v4691 = vunpack.c.0.s8 %v4690
        %v4692 = vlaneseq
        %v4693 = vshrl.u32 %v4692, 7
        %v4694 = vsub.s32 %v4691, %v4693
        %v4695 = vrot.slane %v4688, %v4694
        %v4697 = vadd.f32 %v4368, %v4695
        %4698 = vst.msk [vmem:[#allocation5] sm:$0x3] %vm4366, %v4697
      $region52: #{tpu_custom_call.1} parent=43 // pred_fallthru
        _
      %p4699 = scmp.eq.s32.totalorder %s23, 1
      %p4700 = pnand %p4699, %p385
      %p4701 = pneg %p4700
      // Predicated region
      $region53: #{tpu_custom_call.1} parent=43 // pred_check
        _
      $region54: #{tpu_custom_call.1} parent=43 // pred_check_branch
        %4703 = sbr.rel (%p4700) target = $region56
      $region55: #{tpu_custom_call.1} parent=43 // pred_region
        %v4704 = vld [vmem:[#allocation4] sm:$0x3]
        %v4705 = vmul.f32 %v4704, 0.0025510204
        %v4706 = vld [vmem:[#allocation5] sm:$0x3]
        %v4707 = vmul.f32 %v4706, 0.0025510204
        %v4708 = vmul.f32 %v4705, %v4705
        %v4709 = vsub.f32 %v4707, %v4708
        %v4710 = vmax.f32 %v4709, 0.0
        %v4711 = vld [vmem:[%s365] sm:$0x3]
        %v4712 = vadd.f32 %v4710, 0.001
        %v4713 = vrsqrt.pop %v4712
        %v4714 = vmul.f32 %v4711, %v4713
        %v4715 = vlaneseq
        %vm4716 = vcmp.ge.s32.totalorder %v4715, 0
        %vm4717 = vcmp.lt.s32.totalorder %v4715, 256
        %vm4718 = vmand %vm4716, %vm4717
        %4719 = vst.msk [vmem:[#allocation6] sm:$0x3] %vm4718, %v4714
        %v4720 = vld [vmem:[%s370] sm:$0x3]
        %v4721 = vmul.f32 %v4705, %v4714
        %v4722 = vsub.f32 %v4720, %v4721
        %4723 = vst.msk [vmem:[#allocation7] sm:$0x3] %vm4718, %v4722
      $region56: #{tpu_custom_call.1} parent=43 // pred_fallthru
        _
      // Predicated region
      $region57: #{tpu_custom_call.1} parent=43 // pred_check
        %p4724 = pneg %p4699
      $region58: #{tpu_custom_call.1} parent=43 // pred_check_branch
        %4726 = sbr.rel (%p4724) target = $region60
      $region59: #{tpu_custom_call.1} parent=43 // pred_region
        %s4727 = smul.u32 %s24, 50
        %s4728 = smul.addr %s4727, 8
        %s4729 = scalar_lea.vmem [#allocation3], %s4728
        %v4730 = vld [vmem:[%s4729] sm:$0xff]
        %v4731 = vld [vmem:[%s4729 + $0x8] sm:$0xff]
        %v4732 = vld [vmem:[%s4729 + $0x10] sm:$0xff]
        %v4733 = vld [vmem:[%s4729 + $0x18] sm:$0xff]
        %v4734 = vld [vmem:[%s4729 + $0x20] sm:$0xff]
        %v4735 = vld [vmem:[%s4729 + $0x28] sm:$0xff]
        %v4736 = vld [vmem:[%s4729 + $0x30] sm:$0xff]
        %v4737 = vld [vmem:[%s4729 + $0x38] sm:$0xff]
        %v4738 = vld [vmem:[%s4729 + $0x40] sm:$0xff]
        %v4739 = vld [vmem:[%s4729 + $0x48] sm:$0xff]
        %v4740 = vld [vmem:[%s4729 + $0x50] sm:$0xff]
        %v4741 = vld [vmem:[%s4729 + $0x58] sm:$0xff]
        %v4742 = vld [vmem:[%s4729 + $0x60] sm:$0xff]
        %v4743 = vld [vmem:[%s4729 + $0x68] sm:$0xff]
        %v4744 = vld [vmem:[%s4729 + $0x70] sm:$0xff]
        %v4745 = vld [vmem:[%s4729 + $0x78] sm:$0xff]
        %v4746 = vld [vmem:[%s4729 + $0x80] sm:$0xff]
        %v4747 = vld [vmem:[%s4729 + $0x88] sm:$0xff]
        %v4748 = vld [vmem:[%s4729 + $0x90] sm:$0xff]
        %v4749 = vld [vmem:[%s4729 + $0x98] sm:$0xff]
        %v4750 = vld [vmem:[%s4729 + $0xa0] sm:$0xff]
        %v4751 = vld [vmem:[%s4729 + $0xa8] sm:$0xff]
        %v4752 = vld [vmem:[%s4729 + $0xb0] sm:$0xff]
        %v4753 = vld [vmem:[%s4729 + $0xb8] sm:$0xff]
        %v4754 = vld [vmem:[%s4729 + $0xc0] sm:$0xff]
        %v4755 = vld [vmem:[%s4729 + $0xc8] sm:$0xff]
        %v4756 = vld [vmem:[%s4729 + $0xd0] sm:$0xff]
        %v4757 = vld [vmem:[%s4729 + $0xd8] sm:$0xff]
        %v4758 = vld [vmem:[%s4729 + $0xe0] sm:$0xff]
        %v4759 = vld [vmem:[%s4729 + $0xe8] sm:$0xff]
        %v4760 = vld [vmem:[%s4729 + $0xf0] sm:$0xff]
        %v4761 = vld [vmem:[%s4729 + $0xf8] sm:$0xff]
        %v4762 = vld [vmem:[%s4729 + $0x100] sm:$0xff]
        %v4763 = vld [vmem:[%s4729 + $0x108] sm:$0xff]
        %v4764 = vld [vmem:[%s4729 + $0x110] sm:$0xff]
        %v4765 = vld [vmem:[%s4729 + $0x118] sm:$0xff]
        %v4766 = vld [vmem:[%s4729 + $0x120] sm:$0xff]
        %v4767 = vld [vmem:[%s4729 + $0x128] sm:$0xff]
        %v4768 = vld [vmem:[%s4729 + $0x130] sm:$0xff]
        %v4769 = vld [vmem:[%s4729 + $0x138] sm:$0xff]
        %v4770 = vld [vmem:[%s4729 + $0x140] sm:$0xff]
        %v4771 = vld [vmem:[%s4729 + $0x148] sm:$0xff]
        %v4772 = vld [vmem:[%s4729 + $0x150] sm:$0xff]
        %v4773 = vld [vmem:[%s4729 + $0x158] sm:$0xff]
        %v4774 = vld [vmem:[%s4729 + $0x160] sm:$0xff]
        %v4775 = vld [vmem:[%s4729 + $0x168] sm:$0xff]
        %v4776 = vld [vmem:[%s4729 + $0x170] sm:$0xff]
        %v4777 = vld [vmem:[%s4729 + $0x178] sm:$0xff]
        %v4778 = vld [vmem:[%s4729 + $0x180] sm:$0xf]
        %v4779 = vld [vmem:[%s4729 + $0x188] sm:$0xf]
        %v4780 = vld [vmem:[#allocation6] sm:$0x3]
        %v4782 = vlaneseq
        %v4783 = vshrl.u32 %v4782, 7
        %v4784 = vsub.s32 0, %v4783
        %v4785 = vrot.slane %v4780, %v4784
        %v4786 = vlaneseq
        %v4787 = vshrl.u32 %v4786, 7
        %v4788 = vsub.s32 1, %v4787
        %v4789 = vrot.slane %v4780, %v4788
        %v4792 = vmul.f32 %v4730, %v4785
        %v4793 = vmul.f32 %v4731, %v4789
        %v4794 = vmul.f32 %v4732, %v4785
        %v4795 = vmul.f32 %v4733, %v4789
        %v4796 = vmul.f32 %v4734, %v4785
        %v4797 = vmul.f32 %v4735, %v4789
        %v4798 = vmul.f32 %v4736, %v4785
        %v4799 = vmul.f32 %v4737, %v4789
        %v4800 = vmul.f32 %v4738, %v4785
        %v4801 = vmul.f32 %v4739, %v4789
        %v4802 = vmul.f32 %v4740, %v4785
        %v4803 = vmul.f32 %v4741, %v4789
        %v4804 = vmul.f32 %v4742, %v4785
        %v4805 = vmul.f32 %v4743, %v4789
        %v4806 = vmul.f32 %v4744, %v4785
        %v4807 = vmul.f32 %v4745, %v4789
        %v4808 = vmul.f32 %v4746, %v4785
        %v4809 = vmul.f32 %v4747, %v4789
        %v4810 = vmul.f32 %v4748, %v4785
        %v4811 = vmul.f32 %v4749, %v4789
        %v4812 = vmul.f32 %v4750, %v4785
        %v4813 = vmul.f32 %v4751, %v4789
        %v4814 = vmul.f32 %v4752, %v4785
        %v4815 = vmul.f32 %v4753, %v4789
        %v4816 = vmul.f32 %v4754, %v4785
        %v4817 = vmul.f32 %v4755, %v4789
        %v4818 = vmul.f32 %v4756, %v4785
        %v4819 = vmul.f32 %v4757, %v4789
        %v4820 = vmul.f32 %v4758, %v4785
        %v4821 = vmul.f32 %v4759, %v4789
        %v4822 = vmul.f32 %v4760, %v4785
        %v4823 = vmul.f32 %v4761, %v4789
        %v4824 = vmul.f32 %v4762, %v4785
        %v4825 = vmul.f32 %v4763, %v4789
        %v4826 = vmul.f32 %v4764, %v4785
        %v4827 = vmul.f32 %v4765, %v4789
        %v4828 = vmul.f32 %v4766, %v4785
        %v4829 = vmul.f32 %v4767, %v4789
        %v4830 = vmul.f32 %v4768, %v4785
        %v4831 = vmul.f32 %v4769, %v4789
        %v4832 = vmul.f32 %v4770, %v4785
        %v4833 = vmul.f32 %v4771, %v4789
        %v4834 = vmul.f32 %v4772, %v4785
        %v4835 = vmul.f32 %v4773, %v4789
        %v4836 = vmul.f32 %v4774, %v4785
        %v4837 = vmul.f32 %v4775, %v4789
        %v4838 = vmul.f32 %v4776, %v4785
        %v4839 = vmul.f32 %v4777, %v4789
        %v4840 = vmul.f32 %v4778, %v4785
        %v4841 = vmul.f32 %v4779, %v4789
        %v4842 = vld [vmem:[#allocation7] sm:$0x3]
        %v4844 = vlaneseq
        %v4845 = vshrl.u32 %v4844, 7
        %v4846 = vsub.s32 0, %v4845
        %v4847 = vrot.slane %v4842, %v4846
        %v4848 = vlaneseq
        %v4849 = vshrl.u32 %v4848, 7
        %v4850 = vsub.s32 1, %v4849
        %v4851 = vrot.slane %v4842, %v4850
        %v4854 = vadd.f32 %v4792, %v4847
        %v4855 = vadd.f32 %v4793, %v4851
        %v4856 = vadd.f32 %v4794, %v4847
        %v4857 = vadd.f32 %v4795, %v4851
        %v4858 = vadd.f32 %v4796, %v4847
        %v4859 = vadd.f32 %v4797, %v4851
        %v4860 = vadd.f32 %v4798, %v4847
        %v4861 = vadd.f32 %v4799, %v4851
        %v4862 = vadd.f32 %v4800, %v4847
        %v4863 = vadd.f32 %v4801, %v4851
        %v4864 = vadd.f32 %v4802, %v4847
        %v4865 = vadd.f32 %v4803, %v4851
        %v4866 = vadd.f32 %v4804, %v4847
        %v4867 = vadd.f32 %v4805, %v4851
        %v4868 = vadd.f32 %v4806, %v4847
        %v4869 = vadd.f32 %v4807, %v4851
        %v4870 = vadd.f32 %v4808, %v4847
        %v4871 = vadd.f32 %v4809, %v4851
        %v4872 = vadd.f32 %v4810, %v4847
        %v4873 = vadd.f32 %v4811, %v4851
        %v4874 = vadd.f32 %v4812, %v4847
        %v4875 = vadd.f32 %v4813, %v4851
        %v4876 = vadd.f32 %v4814, %v4847
        %v4877 = vadd.f32 %v4815, %v4851
        %v4878 = vadd.f32 %v4816, %v4847
        %v4879 = vadd.f32 %v4817, %v4851
        %v4880 = vadd.f32 %v4818, %v4847
        %v4881 = vadd.f32 %v4819, %v4851
        %v4882 = vadd.f32 %v4820, %v4847
        %v4883 = vadd.f32 %v4821, %v4851
        %v4884 = vadd.f32 %v4822, %v4847
        %v4885 = vadd.f32 %v4823, %v4851
        %v4886 = vadd.f32 %v4824, %v4847
        %v4887 = vadd.f32 %v4825, %v4851
        %v4888 = vadd.f32 %v4826, %v4847
        %v4889 = vadd.f32 %v4827, %v4851
        %v4890 = vadd.f32 %v4828, %v4847
        %v4891 = vadd.f32 %v4829, %v4851
        %v4892 = vadd.f32 %v4830, %v4847
        %v4893 = vadd.f32 %v4831, %v4851
        %v4894 = vadd.f32 %v4832, %v4847
        %v4895 = vadd.f32 %v4833, %v4851
        %v4896 = vadd.f32 %v4834, %v4847
        %v4897 = vadd.f32 %v4835, %v4851
        %v4898 = vadd.f32 %v4836, %v4847
        %v4899 = vadd.f32 %v4837, %v4851
        %v4900 = vadd.f32 %v4838, %v4847
        %v4901 = vadd.f32 %v4839, %v4851
        %v4902 = vadd.f32 %v4840, %v4847
        %v4903 = vadd.f32 %v4841, %v4851
        %4904 = vst [vmem:[%s381] sm:$0xff] %v4854
        %4905 = vst [vmem:[%s381 + $0x8] sm:$0xff] %v4855
        %4906 = vst [vmem:[%s381 + $0x10] sm:$0xff] %v4856
        %4907 = vst [vmem:[%s381 + $0x18] sm:$0xff] %v4857
        %4908 = vst [vmem:[%s381 + $0x20] sm:$0xff] %v4858
        %4909 = vst [vmem:[%s381 + $0x28] sm:$0xff] %v4859
        %4910 = vst [vmem:[%s381 + $0x30] sm:$0xff] %v4860
        %4911 = vst [vmem:[%s381 + $0x38] sm:$0xff] %v4861
        %4912 = vst [vmem:[%s381 + $0x40] sm:$0xff] %v4862
        %4913 = vst [vmem:[%s381 + $0x48] sm:$0xff] %v4863
        %4914 = vst [vmem:[%s381 + $0x50] sm:$0xff] %v4864
        %4915 = vst [vmem:[%s381 + $0x58] sm:$0xff] %v4865
        %4916 = vst [vmem:[%s381 + $0x60] sm:$0xff] %v4866
        %4917 = vst [vmem:[%s381 + $0x68] sm:$0xff] %v4867
        %4918 = vst [vmem:[%s381 + $0x70] sm:$0xff] %v4868
        %4919 = vst [vmem:[%s381 + $0x78] sm:$0xff] %v4869
        %4920 = vst [vmem:[%s381 + $0x80] sm:$0xff] %v4870
        %4921 = vst [vmem:[%s381 + $0x88] sm:$0xff] %v4871
        %4922 = vst [vmem:[%s381 + $0x90] sm:$0xff] %v4872
        %4923 = vst [vmem:[%s381 + $0x98] sm:$0xff] %v4873
        %4924 = vst [vmem:[%s381 + $0xa0] sm:$0xff] %v4874
        %4925 = vst [vmem:[%s381 + $0xa8] sm:$0xff] %v4875
        %4926 = vst [vmem:[%s381 + $0xb0] sm:$0xff] %v4876
        %4927 = vst [vmem:[%s381 + $0xb8] sm:$0xff] %v4877
        %4928 = vst [vmem:[%s381 + $0xc0] sm:$0xff] %v4878
        %4929 = vst [vmem:[%s381 + $0xc8] sm:$0xff] %v4879
        %4930 = vst [vmem:[%s381 + $0xd0] sm:$0xff] %v4880
        %4931 = vst [vmem:[%s381 + $0xd8] sm:$0xff] %v4881
        %4932 = vst [vmem:[%s381 + $0xe0] sm:$0xff] %v4882
        %4933 = vst [vmem:[%s381 + $0xe8] sm:$0xff] %v4883
        %4934 = vst [vmem:[%s381 + $0xf0] sm:$0xff] %v4884
        %4935 = vst [vmem:[%s381 + $0xf8] sm:$0xff] %v4885
        %4936 = vst [vmem:[%s381 + $0x100] sm:$0xff] %v4886
        %4937 = vst [vmem:[%s381 + $0x108] sm:$0xff] %v4887
        %4938 = vst [vmem:[%s381 + $0x110] sm:$0xff] %v4888
        %4939 = vst [vmem:[%s381 + $0x118] sm:$0xff] %v4889
        %4940 = vst [vmem:[%s381 + $0x120] sm:$0xff] %v4890
        %4941 = vst [vmem:[%s381 + $0x128] sm:$0xff] %v4891
        %4942 = vst [vmem:[%s381 + $0x130] sm:$0xff] %v4892
        %4943 = vst [vmem:[%s381 + $0x138] sm:$0xff] %v4893
        %4944 = vst [vmem:[%s381 + $0x140] sm:$0xff] %v4894
        %4945 = vst [vmem:[%s381 + $0x148] sm:$0xff] %v4895
        %4946 = vst [vmem:[%s381 + $0x150] sm:$0xff] %v4896
        %4947 = vst [vmem:[%s381 + $0x158] sm:$0xff] %v4897
        %4948 = vst [vmem:[%s381 + $0x160] sm:$0xff] %v4898
        %4949 = vst [vmem:[%s381 + $0x168] sm:$0xff] %v4899
        %4950 = vst [vmem:[%s381 + $0x170] sm:$0xff] %v4900
        %4951 = vst [vmem:[%s381 + $0x178] sm:$0xff] %v4901
        %4952 = vst [vmem:[%s381 + $0x180] sm:$0xf] %v4902
        %4953 = vst [vmem:[%s381 + $0x188] sm:$0xf] %v4903
      $region60: #{tpu_custom_call.1} parent=43 // pred_fallthru
        _
      %s4954 = smul.u32 %s23, %s24
      %s4955 = smul.u32 2, %s22
      %p4956 = scmp.lt.s32.totalorder %s4954, 1
      %s4957 = scalar_select %p4956, %s4954, 1
      %p4958 = scmp.lt.s32.totalorder %s4955, 1
      %s4959 = scalar_select %p4958, %s4955, 1
      %s4960 = smul.addr %s4957, 50
      %s4961 = sadd.s32 %s4959, %s4960
      %s4962 = smul.addr %s4961, 8
      %s4963 = scalar_lea.vmem %s6, %s4962
      // Predicated region
      $region61: #{tpu_custom_call.1} parent=43 // pred_check
        %p4964 = pneg %p212
      $region62: #{tpu_custom_call.1} parent=43 // pred_check_branch
        %4966 = sbr.rel (%p4964) target = $region64
      $region63: #{tpu_custom_call.1} parent=43 // pred_region
        %s4967 = smul.u32 %s23, %s24
        %s4968 = smul.u32 2, %s22
      $region64: #{tpu_custom_call.1} parent=43 // pred_fallthru
        _
    $region44: #{tpu_custom_call.1} parent=5 // pred_fallthru
      _
    %p4969 = scmp.le.s32.totalorder 2, %s12
    // Predicated region
    $region65: #{tpu_custom_call.1} parent=5 // pred_check
      %p4970 = pneg %p4969
    $region66: #{tpu_custom_call.1} parent=5 // pred_check_branch
      %4972 = sbr.rel (%p4970) target = $region68
    $region67: #{tpu_custom_call.1} parent=5 // pred_region
      %s4973 = ssub.s32 %s12, 2
      // Predicated region
      $region69: #{tpu_custom_call.1} parent=67 // pred_check
        %p4974 = pneg %p218
      $region70: #{tpu_custom_call.1} parent=67 // pred_check_branch
        %4976 = sbr.rel (%p4974) target = $region72
      $region71: #{tpu_custom_call.1} parent=67 // pred_region
        %s4977 = smul.u32 %s26, %s27
        %s4978 = smul.u32 2, %s25
        %p4979 = scmp.lt.s32.totalorder %s4977, 1
        %s4980 = scalar_select %p4979, %s4977, 1
        %p4981 = scmp.lt.s32.totalorder %s4978, 1
        %s4982 = scalar_select %p4981, %s4978, 1
        %s4983 = smul.addr %s4980, 50
        %s4984 = sadd.s32 %s4982, %s4983
        %s4985 = smul.addr %s4984, 8
        %s4986 = scalar_lea.vmem %s6, %s4985
      $region72: #{tpu_custom_call.1} parent=67 // pred_fallthru
        _
    $region68: #{tpu_custom_call.1} parent=5 // pred_fallthru
      _
  $region6: #{tpu_custom_call.1} parent=0 // loop_footer
    %s16 = sadd.s32 1, %s12
  $region7: #{tpu_custom_call.1} parent=0 // loop_footer_branch
    %11 = sbr.rel target = $region3
  $region8: #{tpu_custom_call.1} parent=0 // loop_exit
    _

</llo_original>
